<compile_context>
chip_gen: v7x
topology: tpu7x:2x2x1
jax: 0.10.0
libtpu: 0.0.40
codegen_flags: <defaults>
</compile_context>

<pallas_src>
import functools

import jax
import jax.numpy as jnp
from jax import lax
from jax.experimental import pallas as pl
from jax.experimental.pallas import tpu as pltpu


def _round_up(v, m):
    return ((v + m - 1) // m) * m


def _fused_conv_kernel(x_ref, w1_ref, b1_ref, w2_ref, b2_ref, mask_ref,
                       o_ref, col_ref, hext_ref, *,
                       wpp, npix, marg, kh1, kw1, p1, kh2, kw2, p2):
    """One batch element per grid step; everything stays in VMEM.

    x_ref   : (1, c1p, lext)        bf16 zero-margined flattened padded frame
    w1_ref  : (kh1, cmid, kw1*c1p)  bf16 conv1 weights, per-dh im2col slabs
    b1_ref  : (cmid, 1)             f32 conv1 bias with -52.138 folded in
    w2_ref  : (kh2, cout, kw2*cmid) bf16 conv2 weights, per-dh im2col slabs
    b2_ref  : (cout, 1)             f32 conv2 bias with -53.746 folded in
    mask_ref: (1, npix)             f32, 1 inside the true HxW image, else 0
    o_ref   : (1, cout, npix)       f32 output in padded-frame layout
    col_ref : (max(kw1*c1p, kw2*cmid), npix) bf16 shared per-dh im2col strip
    hext_ref: (cmid, lext)          bf16 zero-margined conv1 activation
    """
    c1p = x_ref.shape[1]          # bf16-sublane-padded input channels (16)
    cmid = hext_ref.shape[0]      # 16

    # ---- conv1: kh1 strips of K = kw1*c1p, accumulated in f32 --------------
    acc1 = None
    for dh in range(kh1):
        for dw in range(kw1):
            s = (dh - p1) * wpp + (dw - p1)
            col_ref[dw * c1p:(dw + 1) * c1p, :] = (
                x_ref[0, :, marg + s:marg + s + npix])
        part = jnp.dot(w1_ref[dh], col_ref[0:kw1 * c1p, :],
                       preferred_element_type=jnp.float32)
        acc1 = part if acc1 is None else acc1 + part

    # Bias already carries the -52.138; the mask zeroes everything outside the
    # real HxW interior so conv2 sees proper zero padding.  Element-wise in f32.
    h = jnp.maximum(acc1 + b1_ref[...], 0.0) * mask_ref[...]

    # Clear only the two small lane-aligned margin strips (the interior is
    # fully overwritten every step) and stage the activation as bf16.
    hext_ref[:, 0:marg] = jnp.zeros((cmid, marg), hext_ref.dtype)
    hext_ref[:, marg + npix:marg + npix + marg] = jnp.zeros(
        (cmid, marg), hext_ref.dtype)
    hext_ref[:, marg:marg + npix] = h.astype(hext_ref.dtype)

    # ---- conv2: kh2 strips of K = kw2*cmid, accumulated in f32 -------------
    acc2 = None
    for dh in range(kh2):
        for dw in range(kw2):
            s = (dh - p2) * wpp + (dw - p2)
            col_ref[dw * cmid:(dw + 1) * cmid, :] = (
                hext_ref[:, marg + s:marg + s + npix])
        part = jnp.dot(w2_ref[dh], col_ref[0:kw2 * cmid, :],
                       preferred_element_type=jnp.float32)
        acc2 = part if acc2 is None else acc2 + part

    o_ref[0] = jnp.tanh(acc2 + b2_ref[...])


def fused_conv_forward(x_nchw, params):
    """out = tanh(conv2(relu(conv1(x) - 52.138)) - 53.746), one pallas_call."""
    w1, b1, w2, b2 = params                      # PyTorch OIHW weight layout
    N, cin, H, W = x_nchw.shape
    cmid, _, kh1, kw1 = w1.shape
    cout, _, kh2, kw2 = w2.shape
    p1, p2 = kh1 // 2, kh2 // 2                  # 'same' paddings (1 and 2)

    r = max(p1, p2)                              # halo ring kept around the image
    hpp = _round_up(H + 2 * r, 4)
    wpp = _round_up(W + 2 * r, 32)               # hpp*wpp % 128 == 0 -> lane dense
    npix = hpp * wpp
    marg = _round_up(r * wpp + r, 128)           # zero margin for shifted flat views
    lext = npix + 2 * marg
    c1p = _round_up(cin, 16)                     # bf16 sublane packing = 16

    # --- glue: channel-major zero-padded frame, flattened + margins, bf16 ---
    xf = jnp.pad(x_nchw, ((0, 0), (0, c1p - cin),
                          (r, hpp - r - H), (r, wpp - r - W)))
    xf = xf.reshape(N, c1p, npix)
    xf = jnp.pad(xf, ((0, 0), (0, 0), (marg, marg))).astype(jnp.bfloat16)

    # --- weights as per-dh (Cout, KW*Cin) slabs matching the im2col rows ----
    w1p = jnp.pad(w1, ((0, 0), (0, c1p - cin), (0, 0), (0, 0)))
    w1f = jnp.transpose(w1p, (2, 0, 3, 1)).reshape(kh1, cmid, kw1 * c1p)
    w1f = w1f.astype(jnp.bfloat16)
    w2f = jnp.transpose(w2, (2, 0, 3, 1)).reshape(kh2, cout, kw2 * cmid)
    w2f = w2f.astype(jnp.bfloat16)

    # fold the constant subtractions into the f32 biases
    b1f = (b1.astype(jnp.float32) - 52.138).reshape(cmid, 1)
    b2f = (b2.astype(jnp.float32) - 53.746).reshape(cout, 1)

    # interior mask: 1 inside the real HxW image, 0 in halo / round-up padding
    rows = (jnp.arange(hpp) >= r) & (jnp.arange(hpp) < r + H)
    cols = (jnp.arange(wpp) >= r) & (jnp.arange(wpp) < r + W)
    mask = (rows[:, None] & cols[None, :]).astype(jnp.float32).reshape(1, npix)

    kmax = max(kw1 * c1p, kw2 * cmid)
    kernel = functools.partial(_fused_conv_kernel, wpp=wpp, npix=npix,
                               marg=marg, kh1=kh1, kw1=kw1, p1=p1,
                               kh2=kh2, kw2=kw2, p2=p2)

    # Scoped-VMEM budget: scratch + double-buffered blocks + headroom for the
    # traced f32 partial sums; clamped under v7x's 64 MiB physical VMEM.
    est = (kmax * npix * 2 + cmid * lext * 2          # col + hext scratch (bf16)
           + 2 * c1p * lext * 2                       # double-buffered input
           + 2 * cout * npix * 4                      # double-buffered output
           + 4 * cout * npix * 4                      # f32 partial-sum headroom
           + 2 * (kh1 * cmid * kw1 * c1p + kh2 * cout * kw2 * cmid) * 2
           + 2 * npix * 4)                            # mask
    vmem_limit = int(min(max(est * 5 // 4, 32 * 2 ** 20), 56 * 2 ** 20))

    out_flat = pl.pallas_call(
        kernel,
        out_shape=jax.ShapeDtypeStruct((N, cout, npix), jnp.float32),
        grid_spec=pltpu.PrefetchScalarGridSpec(
            num_scalar_prefetch=0,
            grid=(N,),
            in_specs=[
                pl.BlockSpec((1, c1p, lext), lambda n: (n, 0, 0)),
                pl.BlockSpec((kh1, cmid, kw1 * c1p), lambda n: (0, 0, 0)),
                pl.BlockSpec((cmid, 1), lambda n: (0, 0)),
                pl.BlockSpec((kh2, cout, kw2 * cmid), lambda n: (0, 0, 0)),
                pl.BlockSpec((cout, 1), lambda n: (0, 0)),
                pl.BlockSpec((1, npix), lambda n: (0, 0)),
            ],
            out_specs=pl.BlockSpec((1, cout, npix), lambda n: (n, 0, 0)),
            scratch_shapes=[
                pltpu.VMEM((kmax, npix), jnp.bfloat16),   # shared im2col strip
                pltpu.VMEM((cmid, lext), jnp.bfloat16),   # margined conv1 act
            ],
        ),
        compiler_params=pltpu.CompilerParams(
            dimension_semantics=("parallel",),
            vmem_limit_bytes=vmem_limit),
    )(xf, w1f, b1f, w2f, b2f, mask)

    # glue: drop the frame padding; output is already NCHW-flattened.
    out = out_flat.reshape(N, cout, hpp, wpp)[:, :, r:r + H, r:r + W]
    return out


def init_params(key):
    """Deterministic synthetic weights (PyTorch-default-style uniform, OIHW)."""
    k1, k2, k3, k4 = jax.random.split(key, 4)
    fan1 = 3 * 3 * 3
    bnd1 = 1.0 / jnp.sqrt(fan1)
    w1 = jax.random.uniform(k1, (16, 3, 3, 3), jnp.float32, -bnd1, bnd1)
    b1 = jax.random.uniform(k2, (16,), jnp.float32, -bnd1, bnd1)
    fan2 = 16 * 5 * 5
    bnd2 = 1.0 / jnp.sqrt(fan2)
    w2 = jax.random.uniform(k3, (32, 16, 5, 5), jnp.float32, -bnd2, bnd2)
    b2 = jax.random.uniform(k4, (32,), jnp.float32, -bnd2, bnd2)
    return w1, b1, w2, b2


def reference_forward(x_nchw, params, compute_dtype=jnp.float32):
    """Pure-JAX reference (lax.conv).  compute_dtype=bf16 mirrors the kernel's
    operand quantization points (x, weights, and the relu output) with f32
    accumulation; compute_dtype=f32 is the exact spec reference."""
    w1, b1, w2, b2 = params
    dn = ("NCHW", "OIHW", "NCHW")
    cd = compute_dtype
    v1 = lax.conv_general_dilated(
        x_nchw.astype(cd), w1.astype(cd), (1, 1), ((1, 1), (1, 1)),
        dimension_numbers=dn, preferred_element_type=jnp.float32)
    v1 = v1 + b1[None, :, None, None]
    v3 = jnp.maximum(v1 - 52.138, 0.0)
    v4 = lax.conv_general_dilated(
        v3.astype(cd), w2.astype(cd), (1, 1), ((2, 2), (2, 2)),
        dimension_numbers=dn, preferred_element_type=jnp.float32)
    v4 = v4 + b2[None, :, None, None]
    return jnp.tanh(v4 - 53.746)


if __name__ == "__main__":
    key = jax.random.PRNGKey(0)
    kx, kp = jax.random.split(key)

    # Small shapes consistent with the module: batch=2, C=3, 16x16 spatial.
    x = jax.random.normal(kx, (2, 3, 16, 16), jnp.float32)
    params = init_params(kp)

    fwd = jax.jit(fused_conv_forward)

    # Check 1: spec-style N(0,1) input vs the exact f32 reference.
    # (conv1 output - 52.138 is all-negative here, so bf16 operand rounding is
    # invisible and the comparison is tight.)
    out = jax.block_until_ready(fwd(x, params))
    assert out.shape == (2, 32, 16, 16), out.shape
    assert out.dtype == jnp.float32
    ref32 = jax.block_until_ready(reference_forward(x, params, jnp.float32))
    err1 = float(jnp.max(jnp.abs(out - ref32)))
    if err1 > 1e-3:
        raise AssertionError(f"mismatch vs f32 reference (max err {err1:.3e})")

    # Check 2: scaled input so both relu and the non-saturated tanh region are
    # exercised; compare against a reference using the same bf16 operand
    # quantization.  The loose max-tolerance only absorbs rare bf16
    # rounding-boundary flips of the intermediate activation; real indexing /
    # weight-layout bugs produce O(1) max error and a large mean error.
    xs = 400.0 * x
    out_s = jax.block_until_ready(fwd(xs, params))
    ref16 = jax.block_until_ready(reference_forward(xs, params, jnp.bfloat16))
    diff = jnp.abs(out_s - ref16)
    err_max = float(jnp.max(diff))
    err_mean = float(jnp.mean(diff))
    if err_max > 0.25 or err_mean > 5e-3:
        raise AssertionError(
            f"mismatch vs bf16-matched reference "
            f"(max {err_max:.3e}, mean {err_mean:.3e})")

    print("KERNEL_OK")
</pallas_src>

<mosaic_0001>
module attributes {stable_mosaic.version = 11 : i64} {
  func.func @_fused_conv_kernel(%arg0: i32, %arg1: memref<1x16x896xbf16, #tpu.memory_space<vmem>>, %arg2: memref<3x16x48xbf16, #tpu.memory_space<vmem>>, %arg3: memref<16x1xf32, #tpu.memory_space<vmem>>, %arg4: memref<5x32x80xbf16, #tpu.memory_space<vmem>>, %arg5: memref<32x1xf32, #tpu.memory_space<vmem>>, %arg6: memref<1x640xf32, #tpu.memory_space<vmem>>, %arg7: memref<1x32x640xf32, #tpu.memory_space<vmem>>, %arg8: memref<80x640xbf16, #tpu.memory_space<vmem>>, %arg9: memref<16x896xbf16, #tpu.memory_space<vmem>>) attributes {dimension_semantics = [#tpu.dimension_semantics<parallel>], iteration_bounds = array<i64: 2>, scalar_prefetch = 0 : i64, scratch_operands = 2 : i64, tpu.core_type = #tpu.core_type<tc>, window_params = [{transform_indices = @transform_0, window_bounds = array<i64: 1, 16, 896>}, {pipeline_mode = #tpu.pipeline_mode<synchronous>, transform_indices = @transform_1, window_bounds = array<i64: 3, 16, 48>}, {pipeline_mode = #tpu.pipeline_mode<synchronous>, transform_indices = @transform_2, window_bounds = array<i64: 16, 1>}, {pipeline_mode = #tpu.pipeline_mode<synchronous>, transform_indices = @transform_3, window_bounds = array<i64: 5, 32, 80>}, {pipeline_mode = #tpu.pipeline_mode<synchronous>, transform_indices = @transform_4, window_bounds = array<i64: 32, 1>}, {pipeline_mode = #tpu.pipeline_mode<synchronous>, transform_indices = @transform_5, window_bounds = array<i64: 1, 640>}, {transform_indices = @transform_6, window_bounds = array<i64: 1, 32, 640>}]} {
    %c0 = arith.constant 0 : index
    %c0_0 = arith.constant 0 : index
    %c95 = arith.constant 95 : index
    %0 = vector.load %arg1[%c0, %c0_0, %c95] : memref<1x16x896xbf16, #tpu.memory_space<vmem>>, vector<1x16x640xbf16>
    %1 = vector.shape_cast %0 : vector<1x16x640xbf16> to vector<16x640xbf16>
    %c0_1 = arith.constant 0 : index
    %c0_2 = arith.constant 0 : index
    %2 = vector.load %arg8[%c0_1, %c0_2] : memref<80x640xbf16, #tpu.memory_space<vmem>>, vector<16x640xbf16>
    tpu.vector_store %arg8[%c0_1, %c0_2], %1 {strides = array<i32>} : memref<80x640xbf16, #tpu.memory_space<vmem>>, vector<16x640xbf16>,
    %c0_3 = arith.constant 0 : index
    %c0_4 = arith.constant 0 : index
    %c96 = arith.constant 96 : index
    %3 = vector.load %arg1[%c0_3, %c0_4, %c96] : memref<1x16x896xbf16, #tpu.memory_space<vmem>>, vector<1x16x640xbf16>
    %4 = vector.shape_cast %3 : vector<1x16x640xbf16> to vector<16x640xbf16>
    %c16 = arith.constant 16 : index
    %c0_5 = arith.constant 0 : index
    %5 = vector.load %arg8[%c16, %c0_5] : memref<80x640xbf16, #tpu.memory_space<vmem>>, vector<16x640xbf16>
    tpu.vector_store %arg8[%c16, %c0_5], %4 {strides = array<i32>} : memref<80x640xbf16, #tpu.memory_space<vmem>>, vector<16x640xbf16>,
    %c0_6 = arith.constant 0 : index
    %c0_7 = arith.constant 0 : index
    %c97 = arith.constant 97 : index
    %6 = vector.load %arg1[%c0_6, %c0_7, %c97] : memref<1x16x896xbf16, #tpu.memory_space<vmem>>, vector<1x16x640xbf16>
    %7 = vector.shape_cast %6 : vector<1x16x640xbf16> to vector<16x640xbf16>
    %c32 = arith.constant 32 : index
    %c0_8 = arith.constant 0 : index
    %8 = vector.load %arg8[%c32, %c0_8] : memref<80x640xbf16, #tpu.memory_space<vmem>>, vector<16x640xbf16>
    tpu.vector_store %arg8[%c32, %c0_8], %7 {strides = array<i32>} : memref<80x640xbf16, #tpu.memory_space<vmem>>, vector<16x640xbf16>,
    %c0_9 = arith.constant 0 : index
    %c0_10 = arith.constant 0 : index
    %c0_11 = arith.constant 0 : index
    %9 = vector.load %arg2[%c0_9, %c0_10, %c0_11] : memref<3x16x48xbf16, #tpu.memory_space<vmem>>, vector<1x16x48xbf16>
    %10 = vector.shape_cast %9 : vector<1x16x48xbf16> to vector<16x48xbf16>
    %c0_12 = arith.constant 0 : index
    %c0_13 = arith.constant 0 : index
    %11 = vector.load %arg8[%c0_12, %c0_13] : memref<80x640xbf16, #tpu.memory_space<vmem>>, vector<48x640xbf16>
    %cst = arith.constant dense<0.000000e+00> : vector<16x640xf32>
    %12 = tpu.matmul %10, %11, %cst {dimension_numbers = #tpu.dot_dimension_numbers<[1], [0], [0], [1], [0, 0, 1, 1], [], []>} : vector<16x48xbf16>, vector<48x640xbf16>, vector<16x640xf32> -> vector<16x640xf32>
    %c0_14 = arith.constant 0 : index
    %c0_15 = arith.constant 0 : index
    %c127 = arith.constant 127 : index
    %13 = vector.load %arg1[%c0_14, %c0_15, %c127] : memref<1x16x896xbf16, #tpu.memory_space<vmem>>, vector<1x16x640xbf16>
    %14 = vector.shape_cast %13 : vector<1x16x640xbf16> to vector<16x640xbf16>
    %c0_16 = arith.constant 0 : index
    %c0_17 = arith.constant 0 : index
    %15 = vector.load %arg8[%c0_16, %c0_17] : memref<80x640xbf16, #tpu.memory_space<vmem>>, vector<16x640xbf16>
    tpu.vector_store %arg8[%c0_16, %c0_17], %14 {strides = array<i32>} : memref<80x640xbf16, #tpu.memory_space<vmem>>, vector<16x640xbf16>,
    %c0_18 = arith.constant 0 : index
    %c0_19 = arith.constant 0 : index
    %c128 = arith.constant 128 : index
    %16 = vector.load %arg1[%c0_18, %c0_19, %c128] : memref<1x16x896xbf16, #tpu.memory_space<vmem>>, vector<1x16x640xbf16>
    %17 = vector.shape_cast %16 : vector<1x16x640xbf16> to vector<16x640xbf16>
    %c16_20 = arith.constant 16 : index
    %c0_21 = arith.constant 0 : index
    %18 = vector.load %arg8[%c16_20, %c0_21] : memref<80x640xbf16, #tpu.memory_space<vmem>>, vector<16x640xbf16>
    tpu.vector_store %arg8[%c16_20, %c0_21], %17 {strides = array<i32>} : memref<80x640xbf16, #tpu.memory_space<vmem>>, vector<16x640xbf16>,
    %c0_22 = arith.constant 0 : index
    %c0_23 = arith.constant 0 : index
    %c129 = arith.constant 129 : index
    %19 = vector.load %arg1[%c0_22, %c0_23, %c129] : memref<1x16x896xbf16, #tpu.memory_space<vmem>>, vector<1x16x640xbf16>
    %20 = vector.shape_cast %19 : vector<1x16x640xbf16> to vector<16x640xbf16>
    %c32_24 = arith.constant 32 : index
    %c0_25 = arith.constant 0 : index
    %21 = vector.load %arg8[%c32_24, %c0_25] : memref<80x640xbf16, #tpu.memory_space<vmem>>, vector<16x640xbf16>
    tpu.vector_store %arg8[%c32_24, %c0_25], %20 {strides = array<i32>} : memref<80x640xbf16, #tpu.memory_space<vmem>>, vector<16x640xbf16>,
    %c1 = arith.constant 1 : index
    %c0_26 = arith.constant 0 : index
    %c0_27 = arith.constant 0 : index
    %22 = vector.load %arg2[%c1, %c0_26, %c0_27] : memref<3x16x48xbf16, #tpu.memory_space<vmem>>, vector<1x16x48xbf16>
    %23 = vector.shape_cast %22 : vector<1x16x48xbf16> to vector<16x48xbf16>
    %c0_28 = arith.constant 0 : index
    %c0_29 = arith.constant 0 : index
    %24 = vector.load %arg8[%c0_28, %c0_29] : memref<80x640xbf16, #tpu.memory_space<vmem>>, vector<48x640xbf16>
    %cst_30 = arith.constant dense<0.000000e+00> : vector<16x640xf32>
    %25 = tpu.matmul %23, %24, %cst_30 {dimension_numbers = #tpu.dot_dimension_numbers<[1], [0], [0], [1], [0, 0, 1, 1], [], []>} : vector<16x48xbf16>, vector<48x640xbf16>, vector<16x640xf32> -> vector<16x640xf32>
    %26 = arith.addf %12, %25 : vector<16x640xf32>
    %c0_31 = arith.constant 0 : index
    %c0_32 = arith.constant 0 : index
    %c159 = arith.constant 159 : index
    %27 = vector.load %arg1[%c0_31, %c0_32, %c159] : memref<1x16x896xbf16, #tpu.memory_space<vmem>>, vector<1x16x640xbf16>
    %28 = vector.shape_cast %27 : vector<1x16x640xbf16> to vector<16x640xbf16>
    %c0_33 = arith.constant 0 : index
    %c0_34 = arith.constant 0 : index
    %29 = vector.load %arg8[%c0_33, %c0_34] : memref<80x640xbf16, #tpu.memory_space<vmem>>, vector<16x640xbf16>
    tpu.vector_store %arg8[%c0_33, %c0_34], %28 {strides = array<i32>} : memref<80x640xbf16, #tpu.memory_space<vmem>>, vector<16x640xbf16>,
    %c0_35 = arith.constant 0 : index
    %c0_36 = arith.constant 0 : index
    %c160 = arith.constant 160 : index
    %30 = vector.load %arg1[%c0_35, %c0_36, %c160] : memref<1x16x896xbf16, #tpu.memory_space<vmem>>, vector<1x16x640xbf16>
    %31 = vector.shape_cast %30 : vector<1x16x640xbf16> to vector<16x640xbf16>
    %c16_37 = arith.constant 16 : index
    %c0_38 = arith.constant 0 : index
    %32 = vector.load %arg8[%c16_37, %c0_38] : memref<80x640xbf16, #tpu.memory_space<vmem>>, vector<16x640xbf16>
    tpu.vector_store %arg8[%c16_37, %c0_38], %31 {strides = array<i32>} : memref<80x640xbf16, #tpu.memory_space<vmem>>, vector<16x640xbf16>,
    %c0_39 = arith.constant 0 : index
    %c0_40 = arith.constant 0 : index
    %c161 = arith.constant 161 : index
    %33 = vector.load %arg1[%c0_39, %c0_40, %c161] : memref<1x16x896xbf16, #tpu.memory_space<vmem>>, vector<1x16x640xbf16>
    %34 = vector.shape_cast %33 : vector<1x16x640xbf16> to vector<16x640xbf16>
    %c32_41 = arith.constant 32 : index
    %c0_42 = arith.constant 0 : index
    %35 = vector.load %arg8[%c32_41, %c0_42] : memref<80x640xbf16, #tpu.memory_space<vmem>>, vector<16x640xbf16>
    tpu.vector_store %arg8[%c32_41, %c0_42], %34 {strides = array<i32>} : memref<80x640xbf16, #tpu.memory_space<vmem>>, vector<16x640xbf16>,
    %c2 = arith.constant 2 : index
    %c0_43 = arith.constant 0 : index
    %c0_44 = arith.constant 0 : index
    %36 = vector.load %arg2[%c2, %c0_43, %c0_44] : memref<3x16x48xbf16, #tpu.memory_space<vmem>>, vector<1x16x48xbf16>
    %37 = vector.shape_cast %36 : vector<1x16x48xbf16> to vector<16x48xbf16>
    %c0_45 = arith.constant 0 : index
    %c0_46 = arith.constant 0 : index
    %38 = vector.load %arg8[%c0_45, %c0_46] : memref<80x640xbf16, #tpu.memory_space<vmem>>, vector<48x640xbf16>
    %cst_47 = arith.constant dense<0.000000e+00> : vector<16x640xf32>
    %39 = tpu.matmul %37, %38, %cst_47 {dimension_numbers = #tpu.dot_dimension_numbers<[1], [0], [0], [1], [0, 0, 1, 1], [], []>} : vector<16x48xbf16>, vector<48x640xbf16>, vector<16x640xf32> -> vector<16x640xf32>
    %40 = arith.addf %26, %39 : vector<16x640xf32>
    %c0_48 = arith.constant 0 : index
    %c0_49 = arith.constant 0 : index
    %41 = vector.load %arg3[%c0_48, %c0_49] : memref<16x1xf32, #tpu.memory_space<vmem>>, vector<16x1xf32>
    %42 = vector.broadcast %41 : vector<16x1xf32> to vector<16x640xf32>
    %43 = arith.addf %40, %42 : vector<16x640xf32>
    %cst_50 = arith.constant 0.000000e+00 : f32
    %44 = vector.broadcast %cst_50 : f32 to vector<16x640xf32>
    %45 = arith.maximumf %43, %44 : vector<16x640xf32>
    %c0_51 = arith.constant 0 : index
    %c0_52 = arith.constant 0 : index
    %46 = vector.load %arg6[%c0_51, %c0_52] : memref<1x640xf32, #tpu.memory_space<vmem>>, vector<1x640xf32>
    %47 = vector.broadcast %46 : vector<1x640xf32> to vector<16x640xf32>
    %48 = arith.mulf %45, %47 : vector<16x640xf32>
    %cst_53 = arith.constant 0.000000e+00 : bf16
    %49 = vector.broadcast %cst_53 : bf16 to vector<16x128xbf16>
    %c0_54 = arith.constant 0 : index
    %c0_55 = arith.constant 0 : index
    %50 = vector.load %arg9[%c0_54, %c0_55] : memref<16x896xbf16, #tpu.memory_space<vmem>>, vector<16x128xbf16>
    tpu.vector_store %arg9[%c0_54, %c0_55], %49 {strides = array<i32>} : memref<16x896xbf16, #tpu.memory_space<vmem>>, vector<16x128xbf16>,
    %cst_56 = arith.constant 0.000000e+00 : bf16
    %51 = vector.broadcast %cst_56 : bf16 to vector<16x128xbf16>
    %c0_57 = arith.constant 0 : index
    %c768 = arith.constant 768 : index
    %52 = vector.load %arg9[%c0_57, %c768] : memref<16x896xbf16, #tpu.memory_space<vmem>>, vector<16x128xbf16>
    tpu.vector_store %arg9[%c0_57, %c768], %51 {strides = array<i32>} : memref<16x896xbf16, #tpu.memory_space<vmem>>, vector<16x128xbf16>,
    %53 = arith.truncf %48 : vector<16x640xf32> to vector<16x640xbf16>
    %c0_58 = arith.constant 0 : index
    %c128_59 = arith.constant 128 : index
    %54 = vector.load %arg9[%c0_58, %c128_59] : memref<16x896xbf16, #tpu.memory_space<vmem>>, vector<16x640xbf16>
    tpu.vector_store %arg9[%c0_58, %c128_59], %53 {strides = array<i32>} : memref<16x896xbf16, #tpu.memory_space<vmem>>, vector<16x640xbf16>,
    %c0_60 = arith.constant 0 : index
    %c62 = arith.constant 62 : index
    %55 = vector.load %arg9[%c0_60, %c62] : memref<16x896xbf16, #tpu.memory_space<vmem>>, vector<16x640xbf16>
    %c0_61 = arith.constant 0 : index
    %c0_62 = arith.constant 0 : index
    %56 = vector.load %arg8[%c0_61, %c0_62] : memref<80x640xbf16, #tpu.memory_space<vmem>>, vector<16x640xbf16>
    tpu.vector_store %arg8[%c0_61, %c0_62], %55 {strides = array<i32>} : memref<80x640xbf16, #tpu.memory_space<vmem>>, vector<16x640xbf16>,
    %c0_63 = arith.constant 0 : index
    %c63 = arith.constant 63 : index
    %57 = vector.load %arg9[%c0_63, %c63] : memref<16x896xbf16, #tpu.memory_space<vmem>>, vector<16x640xbf16>
    %c16_64 = arith.constant 16 : index
    %c0_65 = arith.constant 0 : index
    %58 = vector.load %arg8[%c16_64, %c0_65] : memref<80x640xbf16, #tpu.memory_space<vmem>>, vector<16x640xbf16>
    tpu.vector_store %arg8[%c16_64, %c0_65], %57 {strides = array<i32>} : memref<80x640xbf16, #tpu.memory_space<vmem>>, vector<16x640xbf16>,
    %c0_66 = arith.constant 0 : index
    %c64 = arith.constant 64 : index
    %59 = vector.load %arg9[%c0_66, %c64] : memref<16x896xbf16, #tpu.memory_space<vmem>>, vector<16x640xbf16>
    %c32_67 = arith.constant 32 : index
    %c0_68 = arith.constant 0 : index
    %60 = vector.load %arg8[%c32_67, %c0_68] : memref<80x640xbf16, #tpu.memory_space<vmem>>, vector<16x640xbf16>
    tpu.vector_store %arg8[%c32_67, %c0_68], %59 {strides = array<i32>} : memref<80x640xbf16, #tpu.memory_space<vmem>>, vector<16x640xbf16>,
    %c0_69 = arith.constant 0 : index
    %c65 = arith.constant 65 : index
    %61 = vector.load %arg9[%c0_69, %c65] : memref<16x896xbf16, #tpu.memory_space<vmem>>, vector<16x640xbf16>
    %c48 = arith.constant 48 : index
    %c0_70 = arith.constant 0 : index
    %62 = vector.load %arg8[%c48, %c0_70] : memref<80x640xbf16, #tpu.memory_space<vmem>>, vector<16x640xbf16>
    tpu.vector_store %arg8[%c48, %c0_70], %61 {strides = array<i32>} : memref<80x640xbf16, #tpu.memory_space<vmem>>, vector<16x640xbf16>,
    %c0_71 = arith.constant 0 : index
    %c66 = arith.constant 66 : index
    %63 = vector.load %arg9[%c0_71, %c66] : memref<16x896xbf16, #tpu.memory_space<vmem>>, vector<16x640xbf16>
    %c64_72 = arith.constant 64 : index
    %c0_73 = arith.constant 0 : index
    %64 = vector.load %arg8[%c64_72, %c0_73] : memref<80x640xbf16, #tpu.memory_space<vmem>>, vector<16x640xbf16>
    tpu.vector_store %arg8[%c64_72, %c0_73], %63 {strides = array<i32>} : memref<80x640xbf16, #tpu.memory_space<vmem>>, vector<16x640xbf16>,
    %c0_74 = arith.constant 0 : index
    %c0_75 = arith.constant 0 : index
    %c0_76 = arith.constant 0 : index
    %65 = vector.load %arg4[%c0_74, %c0_75, %c0_76] : memref<5x32x80xbf16, #tpu.memory_space<vmem>>, vector<1x32x80xbf16>
    %66 = vector.shape_cast %65 : vector<1x32x80xbf16> to vector<32x80xbf16>
    %c0_77 = arith.constant 0 : index
    %c0_78 = arith.constant 0 : index
    %67 = vector.load %arg8[%c0_77, %c0_78] : memref<80x640xbf16, #tpu.memory_space<vmem>>, vector<80x640xbf16>
    %cst_79 = arith.constant dense<0.000000e+00> : vector<32x640xf32>
    %68 = tpu.matmul %66, %67, %cst_79 {dimension_numbers = #tpu.dot_dimension_numbers<[1], [0], [0], [1], [0, 0, 1, 1], [], []>} : vector<32x80xbf16>, vector<80x640xbf16>, vector<32x640xf32> -> vector<32x640xf32>
    %c0_80 = arith.constant 0 : index
    %c94 = arith.constant 94 : index
    %69 = vector.load %arg9[%c0_80, %c94] : memref<16x896xbf16, #tpu.memory_space<vmem>>, vector<16x640xbf16>
    %c0_81 = arith.constant 0 : index
    %c0_82 = arith.constant 0 : index
    %70 = vector.load %arg8[%c0_81, %c0_82] : memref<80x640xbf16, #tpu.memory_space<vmem>>, vector<16x640xbf16>
    tpu.vector_store %arg8[%c0_81, %c0_82], %69 {strides = array<i32>} : memref<80x640xbf16, #tpu.memory_space<vmem>>, vector<16x640xbf16>,
    %c0_83 = arith.constant 0 : index
    %c95_84 = arith.constant 95 : index
    %71 = vector.load %arg9[%c0_83, %c95_84] : memref<16x896xbf16, #tpu.memory_space<vmem>>, vector<16x640xbf16>
    %c16_85 = arith.constant 16 : index
    %c0_86 = arith.constant 0 : index
    %72 = vector.load %arg8[%c16_85, %c0_86] : memref<80x640xbf16, #tpu.memory_space<vmem>>, vector<16x640xbf16>
    tpu.vector_store %arg8[%c16_85, %c0_86], %71 {strides = array<i32>} : memref<80x640xbf16, #tpu.memory_space<vmem>>, vector<16x640xbf16>,
    %c0_87 = arith.constant 0 : index
    %c96_88 = arith.constant 96 : index
    %73 = vector.load %arg9[%c0_87, %c96_88] : memref<16x896xbf16, #tpu.memory_space<vmem>>, vector<16x640xbf16>
    %c32_89 = arith.constant 32 : index
    %c0_90 = arith.constant 0 : index
    %74 = vector.load %arg8[%c32_89, %c0_90] : memref<80x640xbf16, #tpu.memory_space<vmem>>, vector<16x640xbf16>
    tpu.vector_store %arg8[%c32_89, %c0_90], %73 {strides = array<i32>} : memref<80x640xbf16, #tpu.memory_space<vmem>>, vector<16x640xbf16>,
    %c0_91 = arith.constant 0 : index
    %c97_92 = arith.constant 97 : index
    %75 = vector.load %arg9[%c0_91, %c97_92] : memref<16x896xbf16, #tpu.memory_space<vmem>>, vector<16x640xbf16>
    %c48_93 = arith.constant 48 : index
    %c0_94 = arith.constant 0 : index
    %76 = vector.load %arg8[%c48_93, %c0_94] : memref<80x640xbf16, #tpu.memory_space<vmem>>, vector<16x640xbf16>
    tpu.vector_store %arg8[%c48_93, %c0_94], %75 {strides = array<i32>} : memref<80x640xbf16, #tpu.memory_space<vmem>>, vector<16x640xbf16>,
    %c0_95 = arith.constant 0 : index
    %c98 = arith.constant 98 : index
    %77 = vector.load %arg9[%c0_95, %c98] : memref<16x896xbf16, #tpu.memory_space<vmem>>, vector<16x640xbf16>
    %c64_96 = arith.constant 64 : index
    %c0_97 = arith.constant 0 : index
    %78 = vector.load %arg8[%c64_96, %c0_97] : memref<80x640xbf16, #tpu.memory_space<vmem>>, vector<16x640xbf16>
    tpu.vector_store %arg8[%c64_96, %c0_97], %77 {strides = array<i32>} : memref<80x640xbf16, #tpu.memory_space<vmem>>, vector<16x640xbf16>,
    %c1_98 = arith.constant 1 : index
    %c0_99 = arith.constant 0 : index
    %c0_100 = arith.constant 0 : index
    %79 = vector.load %arg4[%c1_98, %c0_99, %c0_100] : memref<5x32x80xbf16, #tpu.memory_space<vmem>>, vector<1x32x80xbf16>
    %80 = vector.shape_cast %79 : vector<1x32x80xbf16> to vector<32x80xbf16>
    %c0_101 = arith.constant 0 : index
    %c0_102 = arith.constant 0 : index
    %81 = vector.load %arg8[%c0_101, %c0_102] : memref<80x640xbf16, #tpu.memory_space<vmem>>, vector<80x640xbf16>
    %cst_103 = arith.constant dense<0.000000e+00> : vector<32x640xf32>
    %82 = tpu.matmul %80, %81, %cst_103 {dimension_numbers = #tpu.dot_dimension_numbers<[1], [0], [0], [1], [0, 0, 1, 1], [], []>} : vector<32x80xbf16>, vector<80x640xbf16>, vector<32x640xf32> -> vector<32x640xf32>
    %83 = arith.addf %68, %82 : vector<32x640xf32>
    %c0_104 = arith.constant 0 : index
    %c126 = arith.constant 126 : index
    %84 = vector.load %arg9[%c0_104, %c126] : memref<16x896xbf16, #tpu.memory_space<vmem>>, vector<16x640xbf16>
    %c0_105 = arith.constant 0 : index
    %c0_106 = arith.constant 0 : index
    %85 = vector.load %arg8[%c0_105, %c0_106] : memref<80x640xbf16, #tpu.memory_space<vmem>>, vector<16x640xbf16>
    tpu.vector_store %arg8[%c0_105, %c0_106], %84 {strides = array<i32>} : memref<80x640xbf16, #tpu.memory_space<vmem>>, vector<16x640xbf16>,
    %c0_107 = arith.constant 0 : index
    %c127_108 = arith.constant 127 : index
    %86 = vector.load %arg9[%c0_107, %c127_108] : memref<16x896xbf16, #tpu.memory_space<vmem>>, vector<16x640xbf16>
    %c16_109 = arith.constant 16 : index
    %c0_110 = arith.constant 0 : index
    %87 = vector.load %arg8[%c16_109, %c0_110] : memref<80x640xbf16, #tpu.memory_space<vmem>>, vector<16x640xbf16>
    tpu.vector_store %arg8[%c16_109, %c0_110], %86 {strides = array<i32>} : memref<80x640xbf16, #tpu.memory_space<vmem>>, vector<16x640xbf16>,
    %c0_111 = arith.constant 0 : index
    %c128_112 = arith.constant 128 : index
    %88 = vector.load %arg9[%c0_111, %c128_112] : memref<16x896xbf16, #tpu.memory_space<vmem>>, vector<16x640xbf16>
    %c32_113 = arith.constant 32 : index
    %c0_114 = arith.constant 0 : index
    %89 = vector.load %arg8[%c32_113, %c0_114] : memref<80x640xbf16, #tpu.memory_space<vmem>>, vector<16x640xbf16>
    tpu.vector_store %arg8[%c32_113, %c0_114], %88 {strides = array<i32>} : memref<80x640xbf16, #tpu.memory_space<vmem>>, vector<16x640xbf16>,
    %c0_115 = arith.constant 0 : index
    %c129_116 = arith.constant 129 : index
    %90 = vector.load %arg9[%c0_115, %c129_116] : memref<16x896xbf16, #tpu.memory_space<vmem>>, vector<16x640xbf16>
    %c48_117 = arith.constant 48 : index
    %c0_118 = arith.constant 0 : index
    %91 = vector.load %arg8[%c48_117, %c0_118] : memref<80x640xbf16, #tpu.memory_space<vmem>>, vector<16x640xbf16>
    tpu.vector_store %arg8[%c48_117, %c0_118], %90 {strides = array<i32>} : memref<80x640xbf16, #tpu.memory_space<vmem>>, vector<16x640xbf16>,
    %c0_119 = arith.constant 0 : index
    %c130 = arith.constant 130 : index
    %92 = vector.load %arg9[%c0_119, %c130] : memref<16x896xbf16, #tpu.memory_space<vmem>>, vector<16x640xbf16>
    %c64_120 = arith.constant 64 : index
    %c0_121 = arith.constant 0 : index
    %93 = vector.load %arg8[%c64_120, %c0_121] : memref<80x640xbf16, #tpu.memory_space<vmem>>, vector<16x640xbf16>
    tpu.vector_store %arg8[%c64_120, %c0_121], %92 {strides = array<i32>} : memref<80x640xbf16, #tpu.memory_space<vmem>>, vector<16x640xbf16>,
    %c2_122 = arith.constant 2 : index
    %c0_123 = arith.constant 0 : index
    %c0_124 = arith.constant 0 : index
    %94 = vector.load %arg4[%c2_122, %c0_123, %c0_124] : memref<5x32x80xbf16, #tpu.memory_space<vmem>>, vector<1x32x80xbf16>
    %95 = vector.shape_cast %94 : vector<1x32x80xbf16> to vector<32x80xbf16>
    %c0_125 = arith.constant 0 : index
    %c0_126 = arith.constant 0 : index
    %96 = vector.load %arg8[%c0_125, %c0_126] : memref<80x640xbf16, #tpu.memory_space<vmem>>, vector<80x640xbf16>
    %cst_127 = arith.constant dense<0.000000e+00> : vector<32x640xf32>
    %97 = tpu.matmul %95, %96, %cst_127 {dimension_numbers = #tpu.dot_dimension_numbers<[1], [0], [0], [1], [0, 0, 1, 1], [], []>} : vector<32x80xbf16>, vector<80x640xbf16>, vector<32x640xf32> -> vector<32x640xf32>
    %98 = arith.addf %83, %97 : vector<32x640xf32>
    %c0_128 = arith.constant 0 : index
    %c158 = arith.constant 158 : index
    %99 = vector.load %arg9[%c0_128, %c158] : memref<16x896xbf16, #tpu.memory_space<vmem>>, vector<16x640xbf16>
    %c0_129 = arith.constant 0 : index
    %c0_130 = arith.constant 0 : index
    %100 = vector.load %arg8[%c0_129, %c0_130] : memref<80x640xbf16, #tpu.memory_space<vmem>>, vector<16x640xbf16>
    tpu.vector_store %arg8[%c0_129, %c0_130], %99 {strides = array<i32>} : memref<80x640xbf16, #tpu.memory_space<vmem>>, vector<16x640xbf16>,
    %c0_131 = arith.constant 0 : index
    %c159_132 = arith.constant 159 : index
    %101 = vector.load %arg9[%c0_131, %c159_132] : memref<16x896xbf16, #tpu.memory_space<vmem>>, vector<16x640xbf16>
    %c16_133 = arith.constant 16 : index
    %c0_134 = arith.constant 0 : index
    %102 = vector.load %arg8[%c16_133, %c0_134] : memref<80x640xbf16, #tpu.memory_space<vmem>>, vector<16x640xbf16>
    tpu.vector_store %arg8[%c16_133, %c0_134], %101 {strides = array<i32>} : memref<80x640xbf16, #tpu.memory_space<vmem>>, vector<16x640xbf16>,
    %c0_135 = arith.constant 0 : index
    %c160_136 = arith.constant 160 : index
    %103 = vector.load %arg9[%c0_135, %c160_136] : memref<16x896xbf16, #tpu.memory_space<vmem>>, vector<16x640xbf16>
    %c32_137 = arith.constant 32 : index
    %c0_138 = arith.constant 0 : index
    %104 = vector.load %arg8[%c32_137, %c0_138] : memref<80x640xbf16, #tpu.memory_space<vmem>>, vector<16x640xbf16>
    tpu.vector_store %arg8[%c32_137, %c0_138], %103 {strides = array<i32>} : memref<80x640xbf16, #tpu.memory_space<vmem>>, vector<16x640xbf16>,
    %c0_139 = arith.constant 0 : index
    %c161_140 = arith.constant 161 : index
    %105 = vector.load %arg9[%c0_139, %c161_140] : memref<16x896xbf16, #tpu.memory_space<vmem>>, vector<16x640xbf16>
    %c48_141 = arith.constant 48 : index
    %c0_142 = arith.constant 0 : index
    %106 = vector.load %arg8[%c48_141, %c0_142] : memref<80x640xbf16, #tpu.memory_space<vmem>>, vector<16x640xbf16>
    tpu.vector_store %arg8[%c48_141, %c0_142], %105 {strides = array<i32>} : memref<80x640xbf16, #tpu.memory_space<vmem>>, vector<16x640xbf16>,
    %c0_143 = arith.constant 0 : index
    %c162 = arith.constant 162 : index
    %107 = vector.load %arg9[%c0_143, %c162] : memref<16x896xbf16, #tpu.memory_space<vmem>>, vector<16x640xbf16>
    %c64_144 = arith.constant 64 : index
    %c0_145 = arith.constant 0 : index
    %108 = vector.load %arg8[%c64_144, %c0_145] : memref<80x640xbf16, #tpu.memory_space<vmem>>, vector<16x640xbf16>
    tpu.vector_store %arg8[%c64_144, %c0_145], %107 {strides = array<i32>} : memref<80x640xbf16, #tpu.memory_space<vmem>>, vector<16x640xbf16>,
    %c3 = arith.constant 3 : index
    %c0_146 = arith.constant 0 : index
    %c0_147 = arith.constant 0 : index
    %109 = vector.load %arg4[%c3, %c0_146, %c0_147] : memref<5x32x80xbf16, #tpu.memory_space<vmem>>, vector<1x32x80xbf16>
    %110 = vector.shape_cast %109 : vector<1x32x80xbf16> to vector<32x80xbf16>
    %c0_148 = arith.constant 0 : index
    %c0_149 = arith.constant 0 : index
    %111 = vector.load %arg8[%c0_148, %c0_149] : memref<80x640xbf16, #tpu.memory_space<vmem>>, vector<80x640xbf16>
    %cst_150 = arith.constant dense<0.000000e+00> : vector<32x640xf32>
    %112 = tpu.matmul %110, %111, %cst_150 {dimension_numbers = #tpu.dot_dimension_numbers<[1], [0], [0], [1], [0, 0, 1, 1], [], []>} : vector<32x80xbf16>, vector<80x640xbf16>, vector<32x640xf32> -> vector<32x640xf32>
    %113 = arith.addf %98, %112 : vector<32x640xf32>
    %c0_151 = arith.constant 0 : index
    %c190 = arith.constant 190 : index
    %114 = vector.load %arg9[%c0_151, %c190] : memref<16x896xbf16, #tpu.memory_space<vmem>>, vector<16x640xbf16>
    %c0_152 = arith.constant 0 : index
    %c0_153 = arith.constant 0 : index
    %115 = vector.load %arg8[%c0_152, %c0_153] : memref<80x640xbf16, #tpu.memory_space<vmem>>, vector<16x640xbf16>
    tpu.vector_store %arg8[%c0_152, %c0_153], %114 {strides = array<i32>} : memref<80x640xbf16, #tpu.memory_space<vmem>>, vector<16x640xbf16>,
    %c0_154 = arith.constant 0 : index
    %c191 = arith.constant 191 : index
    %116 = vector.load %arg9[%c0_154, %c191] : memref<16x896xbf16, #tpu.memory_space<vmem>>, vector<16x640xbf16>
    %c16_155 = arith.constant 16 : index
    %c0_156 = arith.constant 0 : index
    %117 = vector.load %arg8[%c16_155, %c0_156] : memref<80x640xbf16, #tpu.memory_space<vmem>>, vector<16x640xbf16>
    tpu.vector_store %arg8[%c16_155, %c0_156], %116 {strides = array<i32>} : memref<80x640xbf16, #tpu.memory_space<vmem>>, vector<16x640xbf16>,
    %c0_157 = arith.constant 0 : index
    %c192 = arith.constant 192 : index
    %118 = vector.load %arg9[%c0_157, %c192] : memref<16x896xbf16, #tpu.memory_space<vmem>>, vector<16x640xbf16>
    %c32_158 = arith.constant 32 : index
    %c0_159 = arith.constant 0 : index
    %119 = vector.load %arg8[%c32_158, %c0_159] : memref<80x640xbf16, #tpu.memory_space<vmem>>, vector<16x640xbf16>
    tpu.vector_store %arg8[%c32_158, %c0_159], %118 {strides = array<i32>} : memref<80x640xbf16, #tpu.memory_space<vmem>>, vector<16x640xbf16>,
    %c0_160 = arith.constant 0 : index
    %c193 = arith.constant 193 : index
    %120 = vector.load %arg9[%c0_160, %c193] : memref<16x896xbf16, #tpu.memory_space<vmem>>, vector<16x640xbf16>
    %c48_161 = arith.constant 48 : index
    %c0_162 = arith.constant 0 : index
    %121 = vector.load %arg8[%c48_161, %c0_162] : memref<80x640xbf16, #tpu.memory_space<vmem>>, vector<16x640xbf16>
    tpu.vector_store %arg8[%c48_161, %c0_162], %120 {strides = array<i32>} : memref<80x640xbf16, #tpu.memory_space<vmem>>, vector<16x640xbf16>,
    %c0_163 = arith.constant 0 : index
    %c194 = arith.constant 194 : index
    %122 = vector.load %arg9[%c0_163, %c194] : memref<16x896xbf16, #tpu.memory_space<vmem>>, vector<16x640xbf16>
    %c64_164 = arith.constant 64 : index
    %c0_165 = arith.constant 0 : index
    %123 = vector.load %arg8[%c64_164, %c0_165] : memref<80x640xbf16, #tpu.memory_space<vmem>>, vector<16x640xbf16>
    tpu.vector_store %arg8[%c64_164, %c0_165], %122 {strides = array<i32>} : memref<80x640xbf16, #tpu.memory_space<vmem>>, vector<16x640xbf16>,
    %c4 = arith.constant 4 : index
    %c0_166 = arith.constant 0 : index
    %c0_167 = arith.constant 0 : index
    %124 = vector.load %arg4[%c4, %c0_166, %c0_167] : memref<5x32x80xbf16, #tpu.memory_space<vmem>>, vector<1x32x80xbf16>
    %125 = vector.shape_cast %124 : vector<1x32x80xbf16> to vector<32x80xbf16>
    %c0_168 = arith.constant 0 : index
    %c0_169 = arith.constant 0 : index
    %126 = vector.load %arg8[%c0_168, %c0_169] : memref<80x640xbf16, #tpu.memory_space<vmem>>, vector<80x640xbf16>
    %cst_170 = arith.constant dense<0.000000e+00> : vector<32x640xf32>
    %127 = tpu.matmul %125, %126, %cst_170 {dimension_numbers = #tpu.dot_dimension_numbers<[1], [0], [0], [1], [0, 0, 1, 1], [], []>} : vector<32x80xbf16>, vector<80x640xbf16>, vector<32x640xf32> -> vector<32x640xf32>
    %128 = arith.addf %113, %127 : vector<32x640xf32>
    %c0_171 = arith.constant 0 : index
    %c0_172 = arith.constant 0 : index
    %129 = vector.load %arg5[%c0_171, %c0_172] : memref<32x1xf32, #tpu.memory_space<vmem>>, vector<32x1xf32>
    %130 = vector.broadcast %129 : vector<32x1xf32> to vector<32x640xf32>
    %131 = arith.addf %128, %130 : vector<32x640xf32>
    %132 = math.tanh %131 : vector<32x640xf32>
    %c0_173 = arith.constant 0 : index
    %c0_174 = arith.constant 0 : index
    %c0_175 = arith.constant 0 : index
    %133 = vector.load %arg7[%c0_173, %c0_174, %c0_175] : memref<1x32x640xf32, #tpu.memory_space<vmem>>, vector<1x32x640xf32>
    %134 = vector.shape_cast %133 : vector<1x32x640xf32> to vector<32x640xf32>
    %135 = vector.shape_cast %132 : vector<32x640xf32> to vector<1x32x640xf32>
    tpu.vector_store %arg7[%c0_173, %c0_174, %c0_175], %135 {strides = array<i32>} : memref<1x32x640xf32, #tpu.memory_space<vmem>>, vector<1x32x640xf32>,
    return
  }
  func.func @transform_0(%arg0: i32) -> (i32, i32, i32) {
    %c0_i32 = arith.constant 0 : i32
    %c0_i32_0 = arith.constant 0 : i32
    %c0_i32_1 = arith.constant 0 : i32
    return %arg0, %c0_i32, %c0_i32_0 : i32, i32, i32
  }
  func.func @transform_1(%arg0: i32) -> (i32, i32, i32) {
    %c0_i32 = arith.constant 0 : i32
    %c0_i32_0 = arith.constant 0 : i32
    %c0_i32_1 = arith.constant 0 : i32
    %c0_i32_2 = arith.constant 0 : i32
    return %c0_i32, %c0_i32_0, %c0_i32_1 : i32, i32, i32
  }
  func.func @transform_2(%arg0: i32) -> (i32, i32) {
    %c0_i32 = arith.constant 0 : i32
    %c0_i32_0 = arith.constant 0 : i32
    %c0_i32_1 = arith.constant 0 : i32
    return %c0_i32, %c0_i32_0 : i32, i32
  }
  func.func @transform_3(%arg0: i32) -> (i32, i32, i32) {
    %c0_i32 = arith.constant 0 : i32
    %c0_i32_0 = arith.constant 0 : i32
    %c0_i32_1 = arith.constant 0 : i32
    %c0_i32_2 = arith.constant 0 : i32
    return %c0_i32, %c0_i32_0, %c0_i32_1 : i32, i32, i32
  }
  func.func @transform_4(%arg0: i32) -> (i32, i32) {
    %c0_i32 = arith.constant 0 : i32
    %c0_i32_0 = arith.constant 0 : i32
    %c0_i32_1 = arith.constant 0 : i32
    return %c0_i32, %c0_i32_0 : i32, i32
  }
  func.func @transform_5(%arg0: i32) -> (i32, i32) {
    %c0_i32 = arith.constant 0 : i32
    %c0_i32_0 = arith.constant 0 : i32
    %c0_i32_1 = arith.constant 0 : i32
    return %c0_i32, %c0_i32_0 : i32, i32
  }
  func.func @transform_6(%arg0: i32) -> (i32, i32, i32) {
    %c0_i32 = arith.constant 0 : i32
    %c0_i32_0 = arith.constant 0 : i32
    %c0_i32_1 = arith.constant 0 : i32
    return %arg0, %c0_i32, %c0_i32_0 : i32, i32, i32
  }
}

</mosaic_0001>

<llo_original>
// kernel: fused_conv_forward.1
$region0: #{fused_conv_forward.1}
  #allocation0 [shape = 'u32[]', space=smem, size = 0x4, offset = 0x4, fixed_abs, tag = 'smem constant byte address 0x4 - core index']
  #allocation1 [shape = 'u32[144,128]{1,0:T(1,128)}', space=vmem, size = 0x12000, scoped, tag = 'internal scratch']
  #allocation2 [shape = 'bf16[80,640]{1,0:T(16,128)(2,1)}', space=vmem, size = 0x19000, scoped, tag = 'scratch operand']
  #allocation3 [shape = 'bf16[16,896]{1,0:T(16,128)(2,1)}', space=vmem, size = 0x7000, scoped, tag = 'scratch operand']
  %s0 = inlined_call_operand.vmem [shape: bf16[2,16,896], index: 0, kind: input, shape index: {}]
  %s1 = inlined_call_operand.vmem [shape: bf16[3,16,48], index: 1, kind: input, shape index: {}]
  %s2 = inlined_call_operand.vmem [shape: f32[16,1], index: 2, kind: input, shape index: {}]
  %s3 = inlined_call_operand.vmem [shape: bf16[5,32,80], index: 3, kind: input, shape index: {}]
  %s4 = inlined_call_operand.vmem [shape: f32[32,1], index: 4, kind: input, shape index: {}]
  %s5 = inlined_call_operand.vmem [shape: f32[1,640], index: 5, kind: input, shape index: {}]
  %s6 = inlined_call_operand.vmem [shape: f32[2,32,640], index: 6, kind: output, shape index: {}]
  %s7 = sld [smem:[#allocation0]]
  $region57: #{fused_conv_forward.1} parent=0
    _
  %s9 = ssub.s32 1, %s7
  %s10 = scalar_select 0, %s9, %s7
  loop: start=0, step=1, limit=4
  $region2: #{fused_conv_forward.1} parent=0 // loop_pre_header
    _
  $region3: #{fused_conv_forward.1} parent=0 // loop_header
    %s12 = sphi 0, %s16
    %p13 = scmp.ge.s32.totalorder %s12, 4
    %s22 = sphi 0, %s24
    %s25 = sphi 0, %s22
    %s26 = sphi 0, %s25
    %s42 = sphi 0, %s26
    %s46 = sphi 0, %s46
    %s48 = sphi 0, %s46
    %s49 = sphi 0, %s48
    %s63 = sphi 0, %s49
    %s67 = sphi 0, %s67
    %s69 = sphi 0, %s67
    %s70 = sphi 0, %s69
    %s84 = sphi 0, %s70
    %s88 = sphi 0, %s88
    %s90 = sphi 0, %s88
    %s91 = sphi 0, %s90
    %s105 = sphi 0, %s91
    %s109 = sphi 0, %s109
    %s111 = sphi 0, %s109
    %s112 = sphi 0, %s111
    %s126 = sphi 0, %s112
    %s130 = sphi 0, %s130
    %s132 = sphi 0, %s130
    %s133 = sphi 0, %s132
    %s147 = sphi 0, %s133
    %s153 = sphi 0, %s155
    %s156 = sphi 0, %s153
    %s157 = sphi 0, %s156
    %s173 = sphi 0, %s157
  $region4: #{fused_conv_forward.1} parent=0 // loop_header_branch
    %15 = sbr.rel (%p13) target = $region8
  $region5: #{fused_conv_forward.1} parent=0 // loop_body
    %s17 = ssub.s32 %s12, 1
    %s18 = ssub.s32 %s12, 2
    %s19 = sadd.s32 %s12, 1
    %s20 = ssub.s32 %s12, %s19
    %p21 = scmp.eq.s32.totalorder %s20, 0
    %s23 = sadd.s32 %s22, 1
    %s24 = scalar_select %p21, %s22, %s23
    %p27 = pneg %p21
    %p28 = scmp.eq.s32.totalorder %s12, 1
    %p29 = por %p27, %p28
    %p30 = scmp.ne.s32.totalorder %s22, %s25
    %p31 = scmp.eq.s32.totalorder %s12, 0
    %p32 = por %p30, %p31
    %p33 = scmp.ne.s32.totalorder %s22, %s25
    %p34 = scmp.eq.s32.totalorder %s17, 1
    %p35 = por %p33, %p34
    %p36 = scmp.ne.s32.totalorder %s25, %s26
    %p37 = scmp.eq.s32.totalorder %s17, 0
    %p38 = por %p36, %p37
    %p39 = scmp.ne.s32.totalorder %s25, %s26
    %p40 = scmp.eq.s32.totalorder %s18, 1
    %p41 = por %p39, %p40
    %p43 = scmp.ne.s32.totalorder %s26, %s42
    %p44 = scmp.eq.s32.totalorder %s18, 0
    %p45 = por %p43, %p44
    %s47 = sadd.s32 %s46, 1
    %p50 = scmp.eq.s32.totalorder %s12, 1
    %p51 = scmp.ne.s32.totalorder %s46, %s48
    %p52 = scmp.eq.s32.totalorder %s12, 0
    %p53 = por %p51, %p52
    %p54 = scmp.ne.s32.totalorder %s46, %s48
    %p55 = scmp.eq.s32.totalorder %s17, 1
    %p56 = por %p54, %p55
    %p57 = scmp.ne.s32.totalorder %s48, %s49
    %p58 = scmp.eq.s32.totalorder %s17, 0
    %p59 = por %p57, %p58
    %p60 = scmp.ne.s32.totalorder %s48, %s49
    %p61 = scmp.eq.s32.totalorder %s18, 1
    %p62 = por %p60, %p61
    %p64 = scmp.ne.s32.totalorder %s49, %s63
    %p65 = scmp.eq.s32.totalorder %s18, 0
    %p66 = por %p64, %p65
    %s68 = sadd.s32 %s67, 1
    %p71 = scmp.eq.s32.totalorder %s12, 1
    %p72 = scmp.ne.s32.totalorder %s67, %s69
    %p73 = scmp.eq.s32.totalorder %s12, 0
    %p74 = por %p72, %p73
    %p75 = scmp.ne.s32.totalorder %s67, %s69
    %p76 = scmp.eq.s32.totalorder %s17, 1
    %p77 = por %p75, %p76
    %p78 = scmp.ne.s32.totalorder %s69, %s70
    %p79 = scmp.eq.s32.totalorder %s17, 0
    %p80 = por %p78, %p79
    %p81 = scmp.ne.s32.totalorder %s69, %s70
    %p82 = scmp.eq.s32.totalorder %s18, 1
    %p83 = por %p81, %p82
    %p85 = scmp.ne.s32.totalorder %s70, %s84
    %p86 = scmp.eq.s32.totalorder %s18, 0
    %p87 = por %p85, %p86
    %s89 = sadd.s32 %s88, 1
    %p92 = scmp.eq.s32.totalorder %s12, 1
    %p93 = scmp.ne.s32.totalorder %s88, %s90
    %p94 = scmp.eq.s32.totalorder %s12, 0
    %p95 = por %p93, %p94
    %p96 = scmp.ne.s32.totalorder %s88, %s90
    %p97 = scmp.eq.s32.totalorder %s17, 1
    %p98 = por %p96, %p97
    %p99 = scmp.ne.s32.totalorder %s90, %s91
    %p100 = scmp.eq.s32.totalorder %s17, 0
    %p101 = por %p99, %p100
    %p102 = scmp.ne.s32.totalorder %s90, %s91
    %p103 = scmp.eq.s32.totalorder %s18, 1
    %p104 = por %p102, %p103
    %p106 = scmp.ne.s32.totalorder %s91, %s105
    %p107 = scmp.eq.s32.totalorder %s18, 0
    %p108 = por %p106, %p107
    %s110 = sadd.s32 %s109, 1
    %p113 = scmp.eq.s32.totalorder %s12, 1
    %p114 = scmp.ne.s32.totalorder %s109, %s111
    %p115 = scmp.eq.s32.totalorder %s12, 0
    %p116 = por %p114, %p115
    %p117 = scmp.ne.s32.totalorder %s109, %s111
    %p118 = scmp.eq.s32.totalorder %s17, 1
    %p119 = por %p117, %p118
    %p120 = scmp.ne.s32.totalorder %s111, %s112
    %p121 = scmp.eq.s32.totalorder %s17, 0
    %p122 = por %p120, %p121
    %p123 = scmp.ne.s32.totalorder %s111, %s112
    %p124 = scmp.eq.s32.totalorder %s18, 1
    %p125 = por %p123, %p124
    %p127 = scmp.ne.s32.totalorder %s112, %s126
    %p128 = scmp.eq.s32.totalorder %s18, 0
    %p129 = por %p127, %p128
    %s131 = sadd.s32 %s130, 1
    %p134 = scmp.eq.s32.totalorder %s12, 1
    %p135 = scmp.ne.s32.totalorder %s130, %s132
    %p136 = scmp.eq.s32.totalorder %s12, 0
    %p137 = por %p135, %p136
    %p138 = scmp.ne.s32.totalorder %s130, %s132
    %p139 = scmp.eq.s32.totalorder %s17, 1
    %p140 = por %p138, %p139
    %p141 = scmp.ne.s32.totalorder %s132, %s133
    %p142 = scmp.eq.s32.totalorder %s17, 0
    %p143 = por %p141, %p142
    %p144 = scmp.ne.s32.totalorder %s132, %s133
    %p145 = scmp.eq.s32.totalorder %s18, 1
    %p146 = por %p144, %p145
    %p148 = scmp.ne.s32.totalorder %s133, %s147
    %p149 = scmp.eq.s32.totalorder %s18, 0
    %p150 = por %p148, %p149
    %s151 = ssub.s32 %s12, %s19
    %p152 = scmp.eq.s32.totalorder %s151, 0
    %s154 = sadd.s32 %s153, 1
    %s155 = scalar_select %p152, %s153, %s154
    %p158 = pneg %p152
    %p159 = scmp.eq.s32.totalorder %s12, 1
    %p160 = por %p158, %p159
    %p161 = scmp.ne.s32.totalorder %s153, %s156
    %p162 = scmp.eq.s32.totalorder %s12, 0
    %p163 = por %p161, %p162
    %p164 = scmp.ne.s32.totalorder %s153, %s156
    %p165 = scmp.eq.s32.totalorder %s17, 1
    %p166 = por %p164, %p165
    %p167 = scmp.ne.s32.totalorder %s156, %s157
    %p168 = scmp.eq.s32.totalorder %s17, 0
    %p169 = por %p167, %p168
    %p170 = scmp.ne.s32.totalorder %s156, %s157
    %p171 = scmp.eq.s32.totalorder %s18, 1
    %p172 = por %p170, %p171
    %p174 = scmp.ne.s32.totalorder %s157, %s173
    %p175 = scmp.eq.s32.totalorder %s18, 0
    %p176 = por %p174, %p175
    %p177 = scmp.le.s32.totalorder 1, %s12
    %p178 = scmp.lt.s32.totalorder %s12, 3
    %p179 = pnand %p177, %p178
    %p180 = pneg %p179
    // Predicated region
    $region9: #{fused_conv_forward.1} parent=5 // pred_check
      _
    $region10: #{fused_conv_forward.1} parent=5 // pred_check_branch
      %182 = sbr.rel (%p179) target = $region12
    $region11: #{fused_conv_forward.1} parent=5 // pred_region
      %s183 = ssub.s32 %s12, 1
      // Predicated region
      $region13: #{fused_conv_forward.1} parent=11 // pred_check
        %p184 = pneg %p59
      $region14: #{fused_conv_forward.1} parent=11 // pred_check_branch
        %186 = sbr.rel (%p184) target = $region16
      $region15: #{fused_conv_forward.1} parent=11 // pred_region
        _
      $region16: #{fused_conv_forward.1} parent=11 // pred_fallthru
        _
      // Predicated region
      $region17: #{fused_conv_forward.1} parent=11 // pred_check
        %p187 = pneg %p80
      $region18: #{fused_conv_forward.1} parent=11 // pred_check_branch
        %189 = sbr.rel (%p187) target = $region20
      $region19: #{fused_conv_forward.1} parent=11 // pred_region
        _
      $region20: #{fused_conv_forward.1} parent=11 // pred_fallthru
        _
      // Predicated region
      $region21: #{fused_conv_forward.1} parent=11 // pred_check
        %p190 = pneg %p101
      $region22: #{fused_conv_forward.1} parent=11 // pred_check_branch
        %192 = sbr.rel (%p190) target = $region24
      $region23: #{fused_conv_forward.1} parent=11 // pred_region
        _
      $region24: #{fused_conv_forward.1} parent=11 // pred_fallthru
        _
      // Predicated region
      $region25: #{fused_conv_forward.1} parent=11 // pred_check
        %p193 = pneg %p122
      $region26: #{fused_conv_forward.1} parent=11 // pred_check_branch
        %195 = sbr.rel (%p193) target = $region28
      $region27: #{fused_conv_forward.1} parent=11 // pred_region
        _
      $region28: #{fused_conv_forward.1} parent=11 // pred_fallthru
        _
      // Predicated region
      $region29: #{fused_conv_forward.1} parent=11 // pred_check
        %p196 = pneg %p143
      $region30: #{fused_conv_forward.1} parent=11 // pred_check_branch
        %198 = sbr.rel (%p196) target = $region32
      $region31: #{fused_conv_forward.1} parent=11 // pred_region
        _
      $region32: #{fused_conv_forward.1} parent=11 // pred_fallthru
        _
    $region12: #{fused_conv_forward.1} parent=5 // pred_fallthru
      _
    %p199 = scmp.lt.s32.totalorder %s12, 2
    // Predicated region
    $region33: #{fused_conv_forward.1} parent=5 // pred_check
      %p200 = pneg %p199
    $region34: #{fused_conv_forward.1} parent=5 // pred_check_branch
      %202 = sbr.rel (%p200) target = $region36
    $region35: #{fused_conv_forward.1} parent=5 // pred_region
      // Predicated region
      $region37: #{fused_conv_forward.1} parent=35 // pred_check
        %p203 = pneg %p32
      $region38: #{fused_conv_forward.1} parent=35 // pred_check_branch
        %205 = sbr.rel (%p203) target = $region40
      $region39: #{fused_conv_forward.1} parent=35 // pred_region
        %p206 = scmp.lt.s32.totalorder %s12, 1
        %s207 = scalar_select %p206, %s12, 1
        %s208 = smul.addr %s207, 14
        %s209 = smul.addr %s208, 4
        %s210 = scalar_lea.vmem %s0, %s209
      $region40: #{fused_conv_forward.1} parent=35 // pred_fallthru
        _
    $region36: #{fused_conv_forward.1} parent=5 // pred_fallthru
      _
    %p211 = scmp.le.s32.totalorder 1, %s12
    %p212 = scmp.lt.s32.totalorder %s12, 3
    %p213 = pnand %p211, %p212
    %p214 = pneg %p213
    // Predicated region
    $region41: #{fused_conv_forward.1} parent=5 // pred_check
      _
    $region42: #{fused_conv_forward.1} parent=5 // pred_check_branch
      %216 = sbr.rel (%p213) target = $region44
    $region43: #{fused_conv_forward.1} parent=5 // pred_region
      %s217 = ssub.s32 %s12, 1
      %p218 = scmp.lt.s32.totalorder %s17, 1
      %s219 = scalar_select %p218, %s17, 1
      %s220 = smul.addr %s219, 14
      %s221 = smul.addr %s220, 4
      %s222 = scalar_lea.vmem %s0, %s221
      %p223 = pneg %p38
      %p224 = pneg %p35
      %p225 = pneg %p59
      %p226 = pneg %p56
      %p227 = pneg %p80
      %p228 = pneg %p77
      %p229 = pneg %p101
      %p230 = pneg %p98
      %p231 = pneg %p122
      %p232 = pneg %p119
      %p233 = pneg %p143
      %p234 = pneg %p140
      %p235 = pneg %p169
      %p236 = pneg %p166
      %p237 = scmp.lt.s32.totalorder %s17, 1
      %s238 = scalar_select %p237, %s17, 1
      %s239 = smul.addr %s238, 20
      %s240 = smul.addr %s239, 8
      %s241 = scalar_lea.vmem %s6, %s240
      %p242 = scmp.lt.s32.totalorder %s17, 1
      %s243 = scalar_select %p242, %s17, 1
      %s244 = smul.addr %s243, 14
      %s245 = smul.addr %s244, 4
      %s246 = scalar_lea.vmem %s0, %s245
      %p247 = scmp.lt.s32.totalorder %s17, 1
      %s248 = scalar_select %p247, %s17, 1
      %s249 = smul.addr %s248, 20
      %s250 = smul.addr %s249, 8
      %s251 = scalar_lea.vmem %s6, %s250
      %v253 = vld [vmem:[%s246] sm:$0xff]
      %v254 = vld [vmem:[%s246 + $0x8] sm:$0xff]
      %v255 = vld [vmem:[%s246 + $0x10] sm:$0xff]
      %v256 = vld [vmem:[%s246 + $0x1c] sm:$0xff]
      %v257 = vld [vmem:[%s246 + $0x24] sm:$0xff]
      %v258 = vld [vmem:[%s246 + $0x2c] sm:$0xff]
      %v265 = vunpack.c.l.b16 %v253
      %v266 = vunpack.c.h.b16 %v253
      %v267 = vunpack.c.l.b16 %v254
      %v268 = vunpack.c.h.b16 %v254
      %v269 = vunpack.c.l.b16 %v255
      %v270 = vunpack.c.h.b16 %v255
      %v271 = vunpack.c.l.b16 %v256
      %v272 = vunpack.c.h.b16 %v256
      %v273 = vunpack.c.l.b16 %v257
      %v274 = vunpack.c.h.b16 %v257
      %v275 = vunpack.c.l.b16 %v258
      %v276 = vunpack.c.h.b16 %v258
      %v277 = vpack.c.b16 %v271, %v265
      %v278 = vpack.c.b16 %v272, %v266
      %v279 = vpack.c.b16 %v273, %v267
      %v280 = vpack.c.b16 %v274, %v268
      %v281 = vpack.c.b16 %v275, %v269
      %v282 = vpack.c.b16 %v276, %v270
      %283 = vrot.lane.b32.xlu0 %v277, 33
      %v284 = vpop.permute.xlu0 %283
      %285 = vrot.lane.b32.xlu0 %v278, 33
      %v286 = vpop.permute.xlu0 %285
      %287 = vrot.lane.b32.xlu0 %v279, 33
      %v288 = vpop.permute.xlu0 %287
      %289 = vrot.lane.b32.xlu0 %v280, 33
      %v290 = vpop.permute.xlu0 %289
      %291 = vrot.lane.b32.xlu0 %v281, 33
      %v292 = vpop.permute.xlu0 %291
      %293 = vrot.lane.b32.xlu0 %v282, 33
      %v294 = vpop.permute.xlu0 %293
      %vm295 = vcmask 269312
      %v296 = vsel %vm295, %v284, %v286
      %v297 = vsel %vm295, %v286, %v288
      %v298 = vsel %vm295, %v288, %v290
      %v299 = vsel %vm295, %v290, %v292
      %v300 = vsel %vm295, %v292, %v294
      %306 = vst [vmem:[#allocation2] sm:$0xff] %v296
      %307 = vst [vmem:[#allocation2 + $0x8] sm:$0xff] %v297
      %308 = vst [vmem:[#allocation2 + $0x10] sm:$0xff] %v298
      %309 = vst [vmem:[#allocation2 + $0x18] sm:$0xff] %v299
      %310 = vst [vmem:[#allocation2 + $0x20] sm:$0xff] %v300
      %v311 = vld [vmem:[%s246] sm:$0xff]
      %v312 = vld [vmem:[%s246 + $0x8] sm:$0xff]
      %v313 = vld [vmem:[%s246 + $0x10] sm:$0xff]
      %v314 = vld [vmem:[%s246 + $0x1c] sm:$0xff]
      %v315 = vld [vmem:[%s246 + $0x24] sm:$0xff]
      %v316 = vld [vmem:[%s246 + $0x2c] sm:$0xff]
      %v323 = vunpack.c.l.b16 %v311
      %v324 = vunpack.c.h.b16 %v311
      %v325 = vunpack.c.l.b16 %v312
      %v326 = vunpack.c.h.b16 %v312
      %v327 = vunpack.c.l.b16 %v313
      %v328 = vunpack.c.h.b16 %v313
      %v329 = vunpack.c.l.b16 %v314
      %v330 = vunpack.c.h.b16 %v314
      %v331 = vunpack.c.l.b16 %v315
      %v332 = vunpack.c.h.b16 %v315
      %v333 = vunpack.c.l.b16 %v316
      %v334 = vunpack.c.h.b16 %v316
      %v335 = vpack.c.b16 %v329, %v323
      %v336 = vpack.c.b16 %v330, %v324
      %v337 = vpack.c.b16 %v331, %v325
      %v338 = vpack.c.b16 %v332, %v326
      %v339 = vpack.c.b16 %v333, %v327
      %v340 = vpack.c.b16 %v334, %v328
      %341 = vrot.lane.b32.xlu0 %v335, 32
      %v342 = vpop.permute.xlu0 %341
      %343 = vrot.lane.b32.xlu0 %v336, 32
      %v344 = vpop.permute.xlu0 %343
      %345 = vrot.lane.b32.xlu0 %v337, 32
      %v346 = vpop.permute.xlu0 %345
      %347 = vrot.lane.b32.xlu0 %v338, 32
      %v348 = vpop.permute.xlu0 %347
      %349 = vrot.lane.b32.xlu0 %v339, 32
      %v350 = vpop.permute.xlu0 %349
      %351 = vrot.lane.b32.xlu0 %v340, 32
      %v352 = vpop.permute.xlu0 %351
      %vm353 = vcmask 261120
      %v354 = vsel %vm353, %v342, %v344
      %v355 = vsel %vm353, %v344, %v346
      %v356 = vsel %vm353, %v346, %v348
      %v357 = vsel %vm353, %v348, %v350
      %v358 = vsel %vm353, %v350, %v352
      %364 = vst [vmem:[#allocation2 + $0x28] sm:$0xff] %v354
      %365 = vst [vmem:[#allocation2 + $0x30] sm:$0xff] %v355
      %366 = vst [vmem:[#allocation2 + $0x38] sm:$0xff] %v356
      %367 = vst [vmem:[#allocation2 + $0x40] sm:$0xff] %v357
      %368 = vst [vmem:[#allocation2 + $0x48] sm:$0xff] %v358
      %v369 = vld [vmem:[%s246] sm:$0xff]
      %v370 = vld [vmem:[%s246 + $0x8] sm:$0xff]
      %v371 = vld [vmem:[%s246 + $0x10] sm:$0xff]
      %v372 = vld [vmem:[%s246 + $0x1c] sm:$0xff]
      %v373 = vld [vmem:[%s246 + $0x24] sm:$0xff]
      %v374 = vld [vmem:[%s246 + $0x2c] sm:$0xff]
      %v381 = vunpack.c.l.b16 %v369
      %v382 = vunpack.c.h.b16 %v369
      %v383 = vunpack.c.l.b16 %v370
      %v384 = vunpack.c.h.b16 %v370
      %v385 = vunpack.c.l.b16 %v371
      %v386 = vunpack.c.h.b16 %v371
      %v387 = vunpack.c.l.b16 %v372
      %v388 = vunpack.c.h.b16 %v372
      %v389 = vunpack.c.l.b16 %v373
      %v390 = vunpack.c.h.b16 %v373
      %v391 = vunpack.c.l.b16 %v374
      %v392 = vunpack.c.h.b16 %v374
      %v393 = vpack.c.b16 %v387, %v381
      %v394 = vpack.c.b16 %v388, %v382
      %v395 = vpack.c.b16 %v389, %v383
      %v396 = vpack.c.b16 %v390, %v384
      %v397 = vpack.c.b16 %v391, %v385
      %v398 = vpack.c.b16 %v392, %v386
      %399 = vrot.lane.b32.xlu0 %v393, 31
      %v400 = vpop.permute.xlu0 %399
      %401 = vrot.lane.b32.xlu0 %v394, 31
      %v402 = vpop.permute.xlu0 %401
      %403 = vrot.lane.b32.xlu0 %v395, 31
      %v404 = vpop.permute.xlu0 %403
      %405 = vrot.lane.b32.xlu0 %v396, 31
      %v406 = vpop.permute.xlu0 %405
      %407 = vrot.lane.b32.xlu0 %v397, 31
      %v408 = vpop.permute.xlu0 %407
      %409 = vrot.lane.b32.xlu0 %v398, 31
      %v410 = vpop.permute.xlu0 %409
      %vm411 = vcmask 252928
      %v412 = vsel %vm411, %v400, %v402
      %v413 = vsel %vm411, %v402, %v404
      %v414 = vsel %vm411, %v404, %v406
      %v415 = vsel %vm411, %v406, %v408
      %v416 = vsel %vm411, %v408, %v410
      %422 = vst [vmem:[#allocation2 + $0x50] sm:$0xff] %v412
      %423 = vst [vmem:[#allocation2 + $0x58] sm:$0xff] %v413
      %424 = vst [vmem:[#allocation2 + $0x60] sm:$0xff] %v414
      %425 = vst [vmem:[#allocation2 + $0x68] sm:$0xff] %v415
      %426 = vst [vmem:[#allocation2 + $0x70] sm:$0xff] %v416
      %v427 = vld [vmem:[%s1] sm:$0xf]
      %v428 = vld [vmem:[%s1 + $0x4] sm:$0xf]
      %v429 = vld [vmem:[#allocation2] sm:$0xff]
      %v430 = vld [vmem:[#allocation2 + $0x8] sm:$0xff]
      %v431 = vld [vmem:[#allocation2 + $0x10] sm:$0xff]
      %v432 = vld [vmem:[#allocation2 + $0x18] sm:$0xff]
      %v433 = vld [vmem:[#allocation2 + $0x20] sm:$0xff]
      %v434 = vld [vmem:[#allocation2 + $0x28] sm:$0xff]
      %v435 = vld [vmem:[#allocation2 + $0x30] sm:$0xff]
      %v436 = vld [vmem:[#allocation2 + $0x38] sm:$0xff]
      %v437 = vld [vmem:[#allocation2 + $0x40] sm:$0xff]
      %v438 = vld [vmem:[#allocation2 + $0x48] sm:$0xff]
      %v439 = vld [vmem:[#allocation2 + $0x50] sm:$0xff]
      %v440 = vld [vmem:[#allocation2 + $0x58] sm:$0xff]
      %v441 = vld [vmem:[#allocation2 + $0x60] sm:$0xff]
      %v442 = vld [vmem:[#allocation2 + $0x68] sm:$0xff]
      %v443 = vld [vmem:[#allocation2 + $0x70] sm:$0xff]
      %v444 = vld [vmem:[%s246] sm:$0xff]
      %v445 = vld [vmem:[%s246 + $0x8] sm:$0xff]
      %v446 = vld [vmem:[%s246 + $0x10] sm:$0xff]
      %v447 = vld [vmem:[%s246 + $0x1c] sm:$0xff]
      %v448 = vld [vmem:[%s246 + $0x24] sm:$0xff]
      %v449 = vld [vmem:[%s246 + $0x2c] sm:$0xff]
      %v456 = vunpack.c.l.b16 %v444
      %v457 = vunpack.c.h.b16 %v444
      %v458 = vunpack.c.l.b16 %v445
      %v459 = vunpack.c.h.b16 %v445
      %v460 = vunpack.c.l.b16 %v446
      %v461 = vunpack.c.h.b16 %v446
      %v462 = vunpack.c.l.b16 %v447
      %v463 = vunpack.c.h.b16 %v447
      %v464 = vunpack.c.l.b16 %v448
      %v465 = vunpack.c.h.b16 %v448
      %v466 = vunpack.c.l.b16 %v449
      %v467 = vunpack.c.h.b16 %v449
      %v468 = vpack.c.b16 %v462, %v456
      %v469 = vpack.c.b16 %v463, %v457
      %v470 = vpack.c.b16 %v464, %v458
      %v471 = vpack.c.b16 %v465, %v459
      %v472 = vpack.c.b16 %v466, %v460
      %v473 = vpack.c.b16 %v467, %v461
      %474 = vrot.lane.b32.xlu0 %v468, 1
      %v475 = vpop.permute.xlu0 %474
      %476 = vrot.lane.b32.xlu0 %v469, 1
      %v477 = vpop.permute.xlu0 %476
      %478 = vrot.lane.b32.xlu0 %v470, 1
      %v479 = vpop.permute.xlu0 %478
      %480 = vrot.lane.b32.xlu0 %v471, 1
      %v481 = vpop.permute.xlu0 %480
      %482 = vrot.lane.b32.xlu0 %v472, 1
      %v483 = vpop.permute.xlu0 %482
      %484 = vrot.lane.b32.xlu0 %v473, 1
      %v485 = vpop.permute.xlu0 %484
      %vm486 = vcmask 7168
      %v487 = vsel %vm486, %v475, %v477
      %v488 = vsel %vm486, %v477, %v479
      %v489 = vsel %vm486, %v479, %v481
      %v490 = vsel %vm486, %v481, %v483
      %v491 = vsel %vm486, %v483, %v485
      %497 = vst [vmem:[#allocation2] sm:$0xff] %v487
      %498 = vst [vmem:[#allocation2 + $0x8] sm:$0xff] %v488
      %499 = vst [vmem:[#allocation2 + $0x10] sm:$0xff] %v489
      %500 = vst [vmem:[#allocation2 + $0x18] sm:$0xff] %v490
      %501 = vst [vmem:[#allocation2 + $0x20] sm:$0xff] %v491
      %v502 = vld [vmem:[%s246 + $0x4] sm:$0xff]
      %v503 = vld [vmem:[%s246 + $0xc] sm:$0xff]
      %v504 = vld [vmem:[%s246 + $0x14] sm:$0xf]
      %v505 = vld [vmem:[%s246 + $0x20] sm:$0xff]
      %v506 = vld [vmem:[%s246 + $0x28] sm:$0xff]
      %v507 = vld [vmem:[%s246 + $0x30] sm:$0xf]
      %v514 = vunpack.c.l.b16 %v502
      %v515 = vunpack.c.h.b16 %v502
      %v516 = vunpack.c.l.b16 %v503
      %v517 = vunpack.c.h.b16 %v503
      %v518 = vunpack.c.l.b16 %v504
      %v519 = vunpack.c.l.b16 %v505
      %v520 = vunpack.c.h.b16 %v505
      %v521 = vunpack.c.l.b16 %v506
      %v522 = vunpack.c.h.b16 %v506
      %v523 = vunpack.c.l.b16 %v507
      %v524 = vpack.c.b16 %v519, %v514
      %v525 = vpack.c.b16 %v520, %v515
      %v526 = vpack.c.b16 %v521, %v516
      %v527 = vpack.c.b16 %v522, %v517
      %v528 = vpack.c.b16 %v523, %v518
      %534 = vst [vmem:[#allocation2 + $0x28] sm:$0xff] %v524
      %535 = vst [vmem:[#allocation2 + $0x30] sm:$0xff] %v525
      %536 = vst [vmem:[#allocation2 + $0x38] sm:$0xff] %v526
      %537 = vst [vmem:[#allocation2 + $0x40] sm:$0xff] %v527
      %538 = vst [vmem:[#allocation2 + $0x48] sm:$0xff] %v528
      %v539 = vld [vmem:[%s246 + $0x4] sm:$0xff]
      %v540 = vld [vmem:[%s246 + $0xc] sm:$0xff]
      %v541 = vld [vmem:[%s246 + $0x14] sm:$0xff]
      %v542 = vld [vmem:[%s246 + $0x20] sm:$0xff]
      %v543 = vld [vmem:[%s246 + $0x28] sm:$0xff]
      %v544 = vld [vmem:[%s246 + $0x30] sm:$0xff]
      %v551 = vunpack.c.l.b16 %v539
      %v552 = vunpack.c.h.b16 %v539
      %v553 = vunpack.c.l.b16 %v540
      %v554 = vunpack.c.h.b16 %v540
      %v555 = vunpack.c.l.b16 %v541
      %v556 = vunpack.c.h.b16 %v541
      %v557 = vunpack.c.l.b16 %v542
      %v558 = vunpack.c.h.b16 %v542
      %v559 = vunpack.c.l.b16 %v543
      %v560 = vunpack.c.h.b16 %v543
      %v561 = vunpack.c.l.b16 %v544
      %v562 = vunpack.c.h.b16 %v544
      %v563 = vpack.c.b16 %v557, %v551
      %v564 = vpack.c.b16 %v558, %v552
      %v565 = vpack.c.b16 %v559, %v553
      %v566 = vpack.c.b16 %v560, %v554
      %v567 = vpack.c.b16 %v561, %v555
      %v568 = vpack.c.b16 %v562, %v556
      %569 = vrot.lane.b32.xlu0 %v563, 127
      %v570 = vpop.permute.xlu0 %569
      %571 = vrot.lane.b32.xlu0 %v564, 127
      %v572 = vpop.permute.xlu0 %571
      %573 = vrot.lane.b32.xlu0 %v565, 127
      %v574 = vpop.permute.xlu0 %573
      %575 = vrot.lane.b32.xlu0 %v566, 127
      %v576 = vpop.permute.xlu0 %575
      %577 = vrot.lane.b32.xlu0 %v567, 127
      %v578 = vpop.permute.xlu0 %577
      %579 = vrot.lane.b32.xlu0 %v568, 127
      %v580 = vpop.permute.xlu0 %579
      %vm581 = vcmask 1039360
      %v582 = vsel %vm581, %v570, %v572
      %v583 = vsel %vm581, %v572, %v574
      %v584 = vsel %vm581, %v574, %v576
      %v585 = vsel %vm581, %v576, %v578
      %v586 = vsel %vm581, %v578, %v580
      %592 = vst [vmem:[#allocation2 + $0x50] sm:$0xff] %v582
      %593 = vst [vmem:[#allocation2 + $0x58] sm:$0xff] %v583
      %594 = vst [vmem:[#allocation2 + $0x60] sm:$0xff] %v584
      %595 = vst [vmem:[#allocation2 + $0x68] sm:$0xff] %v585
      %596 = vst [vmem:[#allocation2 + $0x70] sm:$0xff] %v586
      %s597 = scalar_lea.vmem %s1, 8
      %v598 = vld [vmem:[%s597] sm:$0xf]
      %v599 = vld [vmem:[%s597 + $0x4] sm:$0xf]
      %v600 = vld [vmem:[#allocation2] sm:$0xff]
      %v601 = vld [vmem:[#allocation2 + $0x8] sm:$0xff]
      %v602 = vld [vmem:[#allocation2 + $0x10] sm:$0xff]
      %v603 = vld [vmem:[#allocation2 + $0x18] sm:$0xff]
      %v604 = vld [vmem:[#allocation2 + $0x20] sm:$0xff]
      %v605 = vld [vmem:[#allocation2 + $0x28] sm:$0xff]
      %v606 = vld [vmem:[#allocation2 + $0x30] sm:$0xff]
      %v607 = vld [vmem:[#allocation2 + $0x38] sm:$0xff]
      %v608 = vld [vmem:[#allocation2 + $0x40] sm:$0xff]
      %v609 = vld [vmem:[#allocation2 + $0x48] sm:$0xff]
      %v610 = vld [vmem:[#allocation2 + $0x50] sm:$0xff]
      %v611 = vld [vmem:[#allocation2 + $0x58] sm:$0xff]
      %v612 = vld [vmem:[#allocation2 + $0x60] sm:$0xff]
      %v613 = vld [vmem:[#allocation2 + $0x68] sm:$0xff]
      %v614 = vld [vmem:[#allocation2 + $0x70] sm:$0xff]
      %v617 = vunpack.c.l.b16 %v598
      %v618 = vunpack.c.l.b16 %v599
      %v619 = vpack.c.b16 %v618, %v617
      %vm620 = vcmask 392192
      %v622 = vsel %vm620, %v619, 0
      %624 = vmatprep.subr.bf16.mxu0 %v601
      %625 = vmatpush1.bf16.msra.mxu0 %v600
      %626 = vmatprep.subr.bf16.mxu0 %v606
      %627 = vmatpush1.bf16.msra.mxu0 %v605
      %628 = vmatprep.subr.bf16.mxu0 %v611
      %629 = vmatpush1.bf16.msra.mxu0 %v610
      %630 = vmatprep.subr.bf16.mxu0 0
      %631 = vmatpush1.bf16.msra.mxu0 0
      %632 = vmatprep.subr.bf16.mxu0 0
      %633 = vmatpush1.bf16.msra.mxu0 0
      %634 = vmatprep.subr.bf16.mxu0 0
      %635 = vmatpush1.bf16.msra.mxu0 0
      %636 = vmatprep.subr.bf16.mxu0 0
      %637 = vmatpush1.bf16.msra.mxu0 0
      %638 = vmatprep.subr.bf16.mxu0 0
      %639 = vmatpush1.bf16.msra.mxu0 0
      %640 = vmatprep.subr.bf16.mxu0 0
      %641 = vmatpush1.bf16.msra.mxu0 0
      %642 = vmatprep.subr.bf16.mxu0 0
      %643 = vmatpush1.bf16.msra.mxu0 0
      %644 = vmatprep.subr.bf16.mxu0 0
      %645 = vmatpush1.bf16.msra.mxu0 0
      %646 = vmatprep.subr.bf16.mxu0 0
      %647 = vmatpush1.bf16.msra.mxu0 0
      %648 = vmatprep.subr.bf16.mxu0 0
      %649 = vmatpush1.bf16.msra.mxu0 0
      %650 = vmatprep.subr.bf16.mxu0 0
      %651 = vmatpush1.bf16.msra.mxu0 0
      %652 = vmatprep.subr.bf16.mxu0 0
      %653 = vmatpush1.bf16.msra.mxu0 0
      %654 = vmatprep.subr.bf16.mxu0 0
      %655 = vmatpush1.bf16.msra.mxu0 0
      %656 = vmatprep.mubr.bf16.mxu0 0
      %657 = vmatmul.mubr.bf16.gmra.mrb[0].mxu0 %v622
      %v658 = vpop.f32.mrb[0].mxu0
      %v659 = vadd.f32 0.0, %v658
      %v660 = vpop.f32.mrb[0].mxu0
      %v661 = vadd.f32 0.0, %v660
      %v662 = vpop.f32.mrb[0].mxu0
      %v663 = vadd.f32 0.0, %v662
      %v664 = vpop.f32.mrb[0].mxu0
      %v665 = vadd.f32 0.0, %v664
      %666 = vdwg.mxu0
      %667 = vmatprep.subr.bf16.mxu0 %v603
      %668 = vmatpush1.bf16.msra.mxu0 %v602
      %669 = vmatprep.subr.bf16.mxu0 %v608
      %670 = vmatpush1.bf16.msra.mxu0 %v607
      %671 = vmatprep.subr.bf16.mxu0 %v613
      %672 = vmatpush1.bf16.msra.mxu0 %v612
      %673 = vmatprep.subr.bf16.mxu0 0
      %674 = vmatpush1.bf16.msra.mxu0 0
      %675 = vmatprep.subr.bf16.mxu0 0
      %676 = vmatpush1.bf16.msra.mxu0 0
      %677 = vmatprep.subr.bf16.mxu0 0
      %678 = vmatpush1.bf16.msra.mxu0 0
      %679 = vmatprep.subr.bf16.mxu0 0
      %680 = vmatpush1.bf16.msra.mxu0 0
      %681 = vmatprep.subr.bf16.mxu0 0
      %682 = vmatpush1.bf16.msra.mxu0 0
      %683 = vmatprep.subr.bf16.mxu0 0
      %684 = vmatpush1.bf16.msra.mxu0 0
      %685 = vmatprep.subr.bf16.mxu0 0
      %686 = vmatpush1.bf16.msra.mxu0 0
      %687 = vmatprep.subr.bf16.mxu0 0
      %688 = vmatpush1.bf16.msra.mxu0 0
      %689 = vmatprep.subr.bf16.mxu0 0
      %690 = vmatpush1.bf16.msra.mxu0 0
      %691 = vmatprep.subr.bf16.mxu0 0
      %692 = vmatpush1.bf16.msra.mxu0 0
      %693 = vmatprep.subr.bf16.mxu0 0
      %694 = vmatpush1.bf16.msra.mxu0 0
      %695 = vmatprep.subr.bf16.mxu0 0
      %696 = vmatpush1.bf16.msra.mxu0 0
      %697 = vmatprep.subr.bf16.mxu0 0
      %698 = vmatpush1.bf16.msra.mxu0 0
      %699 = vmatprep.mubr.bf16.mxu0 0
      %700 = vmatmul.mubr.bf16.gmra.mrb[0].mxu0 %v622
      %v701 = vpop.f32.mrb[0].mxu0
      %v702 = vadd.f32 0.0, %v701
      %v703 = vpop.f32.mrb[0].mxu0
      %v704 = vadd.f32 0.0, %v703
      %v705 = vpop.f32.mrb[0].mxu0
      %v706 = vadd.f32 0.0, %v705
      %v707 = vpop.f32.mrb[0].mxu0
      %v708 = vadd.f32 0.0, %v707
      %709 = vdwg.mxu0
      %710 = vmatprep.subr.bf16.mxu0 0
      %711 = vmatpush1.bf16.msra.mxu0 %v604
      %712 = vmatprep.subr.bf16.mxu0 0
      %713 = vmatpush1.bf16.msra.mxu0 %v609
      %714 = vmatprep.subr.bf16.mxu0 0
      %715 = vmatpush1.bf16.msra.mxu0 %v614
      %716 = vmatprep.subr.bf16.mxu0 0
      %717 = vmatpush1.bf16.msra.mxu0 0
      %718 = vmatprep.subr.bf16.mxu0 0
      %719 = vmatpush1.bf16.msra.mxu0 0
      %720 = vmatprep.subr.bf16.mxu0 0
      %721 = vmatpush1.bf16.msra.mxu0 0
      %722 = vmatprep.subr.bf16.mxu0 0
      %723 = vmatpush1.bf16.msra.mxu0 0
      %724 = vmatprep.subr.bf16.mxu0 0
      %725 = vmatpush1.bf16.msra.mxu0 0
      %726 = vmatprep.subr.bf16.mxu0 0
      %727 = vmatpush1.bf16.msra.mxu0 0
      %728 = vmatprep.subr.bf16.mxu0 0
      %729 = vmatpush1.bf16.msra.mxu0 0
      %730 = vmatprep.subr.bf16.mxu0 0
      %731 = vmatpush1.bf16.msra.mxu0 0
      %732 = vmatprep.subr.bf16.mxu0 0
      %733 = vmatpush1.bf16.msra.mxu0 0
      %734 = vmatprep.subr.bf16.mxu0 0
      %735 = vmatpush1.bf16.msra.mxu0 0
      %736 = vmatprep.subr.bf16.mxu0 0
      %737 = vmatpush1.bf16.msra.mxu0 0
      %738 = vmatprep.subr.bf16.mxu0 0
      %739 = vmatpush1.bf16.msra.mxu0 0
      %740 = vmatprep.subr.bf16.mxu0 0
      %741 = vmatpush1.bf16.msra.mxu0 0
      %742 = vmatprep.mubr.bf16.mxu0 0
      %743 = vmatmul.mubr.bf16.gmra.mrb[0].mxu0 %v622
      %v744 = vpop.f32.mrb[0].mxu0
      %v745 = vadd.f32 0.0, %v744
      %v746 = vpop.f32.mrb[0].mxu0
      %v747 = vpop.f32.mrb[0].mxu0
      %v748 = vadd.f32 0.0, %v747
      %v749 = vpop.f32.mrb[0].mxu0
      %750 = vdwg.mxu0
      %v753 = vunpack.c.l.b16 %v427
      %v754 = vunpack.c.l.b16 %v428
      %v755 = vpack.c.b16 %v754, %v753
      %v757 = vsel %vm620, %v755, 0
      %759 = vmatprep.subr.bf16.mxu0 %v430
      %760 = vmatpush1.bf16.msra.mxu0 %v429
      %761 = vmatprep.subr.bf16.mxu0 %v435
      %762 = vmatpush1.bf16.msra.mxu0 %v434
      %763 = vmatprep.subr.bf16.mxu0 %v440
      %764 = vmatpush1.bf16.msra.mxu0 %v439
      %765 = vmatprep.subr.bf16.mxu0 0
      %766 = vmatpush1.bf16.msra.mxu0 0
      %767 = vmatprep.subr.bf16.mxu0 0
      %768 = vmatpush1.bf16.msra.mxu0 0
      %769 = vmatprep.subr.bf16.mxu0 0
      %770 = vmatpush1.bf16.msra.mxu0 0
      %771 = vmatprep.subr.bf16.mxu0 0
      %772 = vmatpush1.bf16.msra.mxu0 0
      %773 = vmatprep.subr.bf16.mxu0 0
      %774 = vmatpush1.bf16.msra.mxu0 0
      %775 = vmatprep.subr.bf16.mxu0 0
      %776 = vmatpush1.bf16.msra.mxu0 0
      %777 = vmatprep.subr.bf16.mxu0 0
      %778 = vmatpush1.bf16.msra.mxu0 0
      %779 = vmatprep.subr.bf16.mxu0 0
      %780 = vmatpush1.bf16.msra.mxu0 0
      %781 = vmatprep.subr.bf16.mxu0 0
      %782 = vmatpush1.bf16.msra.mxu0 0
      %783 = vmatprep.subr.bf16.mxu0 0
      %784 = vmatpush1.bf16.msra.mxu0 0
      %785 = vmatprep.subr.bf16.mxu0 0
      %786 = vmatpush1.bf16.msra.mxu0 0
      %787 = vmatprep.subr.bf16.mxu0 0
      %788 = vmatpush1.bf16.msra.mxu0 0
      %789 = vmatprep.subr.bf16.mxu0 0
      %790 = vmatpush1.bf16.msra.mxu0 0
      %791 = vmatprep.mubr.bf16.mxu0 0
      %792 = vmatmul.mubr.bf16.gmra.mrb[0].mxu0 %v757
      %v793 = vpop.f32.mrb[0].mxu0
      %v794 = vadd.f32 %v659, %v793
      %v795 = vpop.f32.mrb[0].mxu0
      %v796 = vadd.f32 %v661, %v795
      %v797 = vpop.f32.mrb[0].mxu0
      %v798 = vadd.f32 %v663, %v797
      %v799 = vpop.f32.mrb[0].mxu0
      %v800 = vadd.f32 %v665, %v799
      %801 = vdwg.mxu0
      %802 = vmatprep.subr.bf16.mxu0 %v432
      %803 = vmatpush1.bf16.msra.mxu0 %v431
      %804 = vmatprep.subr.bf16.mxu0 %v437
      %805 = vmatpush1.bf16.msra.mxu0 %v436
      %806 = vmatprep.subr.bf16.mxu0 %v442
      %807 = vmatpush1.bf16.msra.mxu0 %v441
      %808 = vmatprep.subr.bf16.mxu0 0
      %809 = vmatpush1.bf16.msra.mxu0 0
      %810 = vmatprep.subr.bf16.mxu0 0
      %811 = vmatpush1.bf16.msra.mxu0 0
      %812 = vmatprep.subr.bf16.mxu0 0
      %813 = vmatpush1.bf16.msra.mxu0 0
      %814 = vmatprep.subr.bf16.mxu0 0
      %815 = vmatpush1.bf16.msra.mxu0 0
      %816 = vmatprep.subr.bf16.mxu0 0
      %817 = vmatpush1.bf16.msra.mxu0 0
      %818 = vmatprep.subr.bf16.mxu0 0
      %819 = vmatpush1.bf16.msra.mxu0 0
      %820 = vmatprep.subr.bf16.mxu0 0
      %821 = vmatpush1.bf16.msra.mxu0 0
      %822 = vmatprep.subr.bf16.mxu0 0
      %823 = vmatpush1.bf16.msra.mxu0 0
      %824 = vmatprep.subr.bf16.mxu0 0
      %825 = vmatpush1.bf16.msra.mxu0 0
      %826 = vmatprep.subr.bf16.mxu0 0
      %827 = vmatpush1.bf16.msra.mxu0 0
      %828 = vmatprep.subr.bf16.mxu0 0
      %829 = vmatpush1.bf16.msra.mxu0 0
      %830 = vmatprep.subr.bf16.mxu0 0
      %831 = vmatpush1.bf16.msra.mxu0 0
      %832 = vmatprep.subr.bf16.mxu0 0
      %833 = vmatpush1.bf16.msra.mxu0 0
      %834 = vmatprep.mubr.bf16.mxu0 0
      %835 = vmatmul.mubr.bf16.gmra.mrb[0].mxu0 %v757
      %v836 = vpop.f32.mrb[0].mxu0
      %v837 = vadd.f32 %v702, %v836
      %v838 = vpop.f32.mrb[0].mxu0
      %v839 = vadd.f32 %v704, %v838
      %v840 = vpop.f32.mrb[0].mxu0
      %v841 = vadd.f32 %v706, %v840
      %v842 = vpop.f32.mrb[0].mxu0
      %v843 = vadd.f32 %v708, %v842
      %844 = vdwg.mxu0
      %845 = vmatprep.subr.bf16.mxu0 0
      %846 = vmatpush1.bf16.msra.mxu0 %v433
      %847 = vmatprep.subr.bf16.mxu0 0
      %848 = vmatpush1.bf16.msra.mxu0 %v438
      %849 = vmatprep.subr.bf16.mxu0 0
      %850 = vmatpush1.bf16.msra.mxu0 %v443
      %851 = vmatprep.subr.bf16.mxu0 0
      %852 = vmatpush1.bf16.msra.mxu0 0
      %853 = vmatprep.subr.bf16.mxu0 0
      %854 = vmatpush1.bf16.msra.mxu0 0
      %855 = vmatprep.subr.bf16.mxu0 0
      %856 = vmatpush1.bf16.msra.mxu0 0
      %857 = vmatprep.subr.bf16.mxu0 0
      %858 = vmatpush1.bf16.msra.mxu0 0
      %859 = vmatprep.subr.bf16.mxu0 0
      %860 = vmatpush1.bf16.msra.mxu0 0
      %861 = vmatprep.subr.bf16.mxu0 0
      %862 = vmatpush1.bf16.msra.mxu0 0
      %863 = vmatprep.subr.bf16.mxu0 0
      %864 = vmatpush1.bf16.msra.mxu0 0
      %865 = vmatprep.subr.bf16.mxu0 0
      %866 = vmatpush1.bf16.msra.mxu0 0
      %867 = vmatprep.subr.bf16.mxu0 0
      %868 = vmatpush1.bf16.msra.mxu0 0
      %869 = vmatprep.subr.bf16.mxu0 0
      %870 = vmatpush1.bf16.msra.mxu0 0
      %871 = vmatprep.subr.bf16.mxu0 0
      %872 = vmatpush1.bf16.msra.mxu0 0
      %873 = vmatprep.subr.bf16.mxu0 0
      %874 = vmatpush1.bf16.msra.mxu0 0
      %875 = vmatprep.subr.bf16.mxu0 0
      %876 = vmatpush1.bf16.msra.mxu0 0
      %877 = vmatprep.mubr.bf16.mxu0 0
      %878 = vmatmul.mubr.bf16.gmra.mrb[0].mxu0 %v757
      %v879 = vpop.f32.mrb[0].mxu0
      %v880 = vadd.f32 %v745, %v879
      %v881 = vpop.f32.mrb[0].mxu0
      %v882 = vpop.f32.mrb[0].mxu0
      %v883 = vadd.f32 %v748, %v882
      %v884 = vpop.f32.mrb[0].mxu0
      %885 = vdwg.mxu0
      %v886 = vld [vmem:[%s246 + $0x4] sm:$0xff]
      %v887 = vld [vmem:[%s246 + $0xc] sm:$0xff]
      %v888 = vld [vmem:[%s246 + $0x14] sm:$0xff]
      %v889 = vld [vmem:[%s246 + $0x20] sm:$0xff]
      %v890 = vld [vmem:[%s246 + $0x28] sm:$0xff]
      %v891 = vld [vmem:[%s246 + $0x30] sm:$0xff]
      %v898 = vunpack.c.l.b16 %v886
      %v899 = vunpack.c.h.b16 %v886
      %v900 = vunpack.c.l.b16 %v887
      %v901 = vunpack.c.h.b16 %v887
      %v902 = vunpack.c.l.b16 %v888
      %v903 = vunpack.c.h.b16 %v888
      %v904 = vunpack.c.l.b16 %v889
      %v905 = vunpack.c.h.b16 %v889
      %v906 = vunpack.c.l.b16 %v890
      %v907 = vunpack.c.h.b16 %v890
      %v908 = vunpack.c.l.b16 %v891
      %v909 = vunpack.c.h.b16 %v891
      %v910 = vpack.c.b16 %v904, %v898
      %v911 = vpack.c.b16 %v905, %v899
      %v912 = vpack.c.b16 %v906, %v900
      %v913 = vpack.c.b16 %v907, %v901
      %v914 = vpack.c.b16 %v908, %v902
      %v915 = vpack.c.b16 %v909, %v903
      %916 = vrot.lane.b32.xlu0 %v910, 97
      %v917 = vpop.permute.xlu0 %916
      %918 = vrot.lane.b32.xlu0 %v911, 97
      %v919 = vpop.permute.xlu0 %918
      %920 = vrot.lane.b32.xlu0 %v912, 97
      %v921 = vpop.permute.xlu0 %920
      %922 = vrot.lane.b32.xlu0 %v913, 97
      %v923 = vpop.permute.xlu0 %922
      %924 = vrot.lane.b32.xlu0 %v914, 97
      %v925 = vpop.permute.xlu0 %924
      %926 = vrot.lane.b32.xlu0 %v915, 97
      %v927 = vpop.permute.xlu0 %926
      %vm928 = vcmask 793600
      %v929 = vsel %vm928, %v917, %v919
      %v930 = vsel %vm928, %v919, %v921
      %v931 = vsel %vm928, %v921, %v923
      %v932 = vsel %vm928, %v923, %v925
      %v933 = vsel %vm928, %v925, %v927
      %939 = vst [vmem:[#allocation2] sm:$0xff] %v929
      %940 = vst [vmem:[#allocation2 + $0x8] sm:$0xff] %v930
      %941 = vst [vmem:[#allocation2 + $0x10] sm:$0xff] %v931
      %942 = vst [vmem:[#allocation2 + $0x18] sm:$0xff] %v932
      %943 = vst [vmem:[#allocation2 + $0x20] sm:$0xff] %v933
      %v944 = vld [vmem:[%s246 + $0x4] sm:$0xff]
      %v945 = vld [vmem:[%s246 + $0xc] sm:$0xff]
      %v946 = vld [vmem:[%s246 + $0x14] sm:$0xff]
      %v947 = vld [vmem:[%s246 + $0x20] sm:$0xff]
      %v948 = vld [vmem:[%s246 + $0x28] sm:$0xff]
      %v949 = vld [vmem:[%s246 + $0x30] sm:$0xff]
      %v956 = vunpack.c.l.b16 %v944
      %v957 = vunpack.c.h.b16 %v944
      %v958 = vunpack.c.l.b16 %v945
      %v959 = vunpack.c.h.b16 %v945
      %v960 = vunpack.c.l.b16 %v946
      %v961 = vunpack.c.h.b16 %v946
      %v962 = vunpack.c.l.b16 %v947
      %v963 = vunpack.c.h.b16 %v947
      %v964 = vunpack.c.l.b16 %v948
      %v965 = vunpack.c.h.b16 %v948
      %v966 = vunpack.c.l.b16 %v949
      %v967 = vunpack.c.h.b16 %v949
      %v968 = vpack.c.b16 %v962, %v956
      %v969 = vpack.c.b16 %v963, %v957
      %v970 = vpack.c.b16 %v964, %v958
      %v971 = vpack.c.b16 %v965, %v959
      %v972 = vpack.c.b16 %v966, %v960
      %v973 = vpack.c.b16 %v967, %v961
      %974 = vrot.lane.b32.xlu0 %v968, 96
      %v975 = vpop.permute.xlu0 %974
      %976 = vrot.lane.b32.xlu0 %v969, 96
      %v977 = vpop.permute.xlu0 %976
      %978 = vrot.lane.b32.xlu0 %v970, 96
      %v979 = vpop.permute.xlu0 %978
      %980 = vrot.lane.b32.xlu0 %v971, 96
      %v981 = vpop.permute.xlu0 %980
      %982 = vrot.lane.b32.xlu0 %v972, 96
      %v983 = vpop.permute.xlu0 %982
      %984 = vrot.lane.b32.xlu0 %v973, 96
      %v985 = vpop.permute.xlu0 %984
      %vm986 = vcmask 785408
      %v987 = vsel %vm986, %v975, %v977
      %v988 = vsel %vm986, %v977, %v979
      %v989 = vsel %vm986, %v979, %v981
      %v990 = vsel %vm986, %v981, %v983
      %v991 = vsel %vm986, %v983, %v985
      %997 = vst [vmem:[#allocation2 + $0x28] sm:$0xff] %v987
      %998 = vst [vmem:[#allocation2 + $0x30] sm:$0xff] %v988
      %999 = vst [vmem:[#allocation2 + $0x38] sm:$0xff] %v989
      %1000 = vst [vmem:[#allocation2 + $0x40] sm:$0xff] %v990
      %1001 = vst [vmem:[#allocation2 + $0x48] sm:$0xff] %v991
      %v1002 = vld [vmem:[%s246 + $0x4] sm:$0xff]
      %v1003 = vld [vmem:[%s246 + $0xc] sm:$0xff]
      %v1004 = vld [vmem:[%s246 + $0x14] sm:$0xff]
      %v1005 = vld [vmem:[%s246 + $0x20] sm:$0xff]
      %v1006 = vld [vmem:[%s246 + $0x28] sm:$0xff]
      %v1007 = vld [vmem:[%s246 + $0x30] sm:$0xff]
      %v1014 = vunpack.c.l.b16 %v1002
      %v1015 = vunpack.c.h.b16 %v1002
      %v1016 = vunpack.c.l.b16 %v1003
      %v1017 = vunpack.c.h.b16 %v1003
      %v1018 = vunpack.c.l.b16 %v1004
      %v1019 = vunpack.c.h.b16 %v1004
      %v1020 = vunpack.c.l.b16 %v1005
      %v1021 = vunpack.c.h.b16 %v1005
      %v1022 = vunpack.c.l.b16 %v1006
      %v1023 = vunpack.c.h.b16 %v1006
      %v1024 = vunpack.c.l.b16 %v1007
      %v1025 = vunpack.c.h.b16 %v1007
      %v1026 = vpack.c.b16 %v1020, %v1014
      %v1027 = vpack.c.b16 %v1021, %v1015
      %v1028 = vpack.c.b16 %v1022, %v1016
      %v1029 = vpack.c.b16 %v1023, %v1017
      %v1030 = vpack.c.b16 %v1024, %v1018
      %v1031 = vpack.c.b16 %v1025, %v1019
      %1032 = vrot.lane.b32.xlu0 %v1026, 95
      %v1033 = vpop.permute.xlu0 %1032
      %1034 = vrot.lane.b32.xlu0 %v1027, 95
      %v1035 = vpop.permute.xlu0 %1034
      %1036 = vrot.lane.b32.xlu0 %v1028, 95
      %v1037 = vpop.permute.xlu0 %1036
      %1038 = vrot.lane.b32.xlu0 %v1029, 95
      %v1039 = vpop.permute.xlu0 %1038
      %1040 = vrot.lane.b32.xlu0 %v1030, 95
      %v1041 = vpop.permute.xlu0 %1040
      %1042 = vrot.lane.b32.xlu0 %v1031, 95
      %v1043 = vpop.permute.xlu0 %1042
      %vm1044 = vcmask 777216
      %v1045 = vsel %vm1044, %v1033, %v1035
      %v1046 = vsel %vm1044, %v1035, %v1037
      %v1047 = vsel %vm1044, %v1037, %v1039
      %v1048 = vsel %vm1044, %v1039, %v1041
      %v1049 = vsel %vm1044, %v1041, %v1043
      %1055 = vst [vmem:[#allocation2 + $0x50] sm:$0xff] %v1045
      %1056 = vst [vmem:[#allocation2 + $0x58] sm:$0xff] %v1046
      %1057 = vst [vmem:[#allocation2 + $0x60] sm:$0xff] %v1047
      %1058 = vst [vmem:[#allocation2 + $0x68] sm:$0xff] %v1048
      %1059 = vst [vmem:[#allocation2 + $0x70] sm:$0xff] %v1049
      %s1060 = scalar_lea.vmem %s1, 16
      %v1061 = vld [vmem:[%s1060] sm:$0xf]
      %v1062 = vld [vmem:[%s1060 + $0x4] sm:$0xf]
      %v1063 = vld [vmem:[#allocation2] sm:$0xff]
      %v1064 = vld [vmem:[#allocation2 + $0x8] sm:$0xff]
      %v1065 = vld [vmem:[#allocation2 + $0x10] sm:$0xff]
      %v1066 = vld [vmem:[#allocation2 + $0x18] sm:$0xff]
      %v1067 = vld [vmem:[#allocation2 + $0x20] sm:$0xff]
      %v1068 = vld [vmem:[#allocation2 + $0x28] sm:$0xff]
      %v1069 = vld [vmem:[#allocation2 + $0x30] sm:$0xff]
      %v1070 = vld [vmem:[#allocation2 + $0x38] sm:$0xff]
      %v1071 = vld [vmem:[#allocation2 + $0x40] sm:$0xff]
      %v1072 = vld [vmem:[#allocation2 + $0x48] sm:$0xff]
      %v1073 = vld [vmem:[#allocation2 + $0x50] sm:$0xff]
      %v1074 = vld [vmem:[#allocation2 + $0x58] sm:$0xff]
      %v1075 = vld [vmem:[#allocation2 + $0x60] sm:$0xff]
      %v1076 = vld [vmem:[#allocation2 + $0x68] sm:$0xff]
      %v1077 = vld [vmem:[#allocation2 + $0x70] sm:$0xff]
      %v1080 = vunpack.c.l.b16 %v1061
      %v1081 = vunpack.c.l.b16 %v1062
      %v1082 = vpack.c.b16 %v1081, %v1080
      %v1084 = vsel %vm620, %v1082, 0
      %1086 = vmatprep.subr.bf16.mxu0 %v1064
      %1087 = vmatpush1.bf16.msra.mxu0 %v1063
      %1088 = vmatprep.subr.bf16.mxu0 %v1069
      %1089 = vmatpush1.bf16.msra.mxu0 %v1068
      %1090 = vmatprep.subr.bf16.mxu0 %v1074
      %1091 = vmatpush1.bf16.msra.mxu0 %v1073
      %1092 = vmatprep.subr.bf16.mxu0 0
      %1093 = vmatpush1.bf16.msra.mxu0 0
      %1094 = vmatprep.subr.bf16.mxu0 0
      %1095 = vmatpush1.bf16.msra.mxu0 0
      %1096 = vmatprep.subr.bf16.mxu0 0
      %1097 = vmatpush1.bf16.msra.mxu0 0
      %1098 = vmatprep.subr.bf16.mxu0 0
      %1099 = vmatpush1.bf16.msra.mxu0 0
      %1100 = vmatprep.subr.bf16.mxu0 0
      %1101 = vmatpush1.bf16.msra.mxu0 0
      %1102 = vmatprep.subr.bf16.mxu0 0
      %1103 = vmatpush1.bf16.msra.mxu0 0
      %1104 = vmatprep.subr.bf16.mxu0 0
      %1105 = vmatpush1.bf16.msra.mxu0 0
      %1106 = vmatprep.subr.bf16.mxu0 0
      %1107 = vmatpush1.bf16.msra.mxu0 0
      %1108 = vmatprep.subr.bf16.mxu0 0
      %1109 = vmatpush1.bf16.msra.mxu0 0
      %1110 = vmatprep.subr.bf16.mxu0 0
      %1111 = vmatpush1.bf16.msra.mxu0 0
      %1112 = vmatprep.subr.bf16.mxu0 0
      %1113 = vmatpush1.bf16.msra.mxu0 0
      %1114 = vmatprep.subr.bf16.mxu0 0
      %1115 = vmatpush1.bf16.msra.mxu0 0
      %1116 = vmatprep.subr.bf16.mxu0 0
      %1117 = vmatpush1.bf16.msra.mxu0 0
      %1118 = vmatprep.mubr.bf16.mxu0 0
      %1119 = vmatmul.mubr.bf16.gmra.mrb[0].mxu0 %v1084
      %v1120 = vpop.f32.mrb[0].mxu0
      %v1121 = vadd.f32 0.0, %v1120
      %v1122 = vpop.f32.mrb[0].mxu0
      %v1123 = vadd.f32 0.0, %v1122
      %v1124 = vpop.f32.mrb[0].mxu0
      %v1125 = vadd.f32 0.0, %v1124
      %v1126 = vpop.f32.mrb[0].mxu0
      %v1127 = vadd.f32 0.0, %v1126
      %1128 = vdwg.mxu0
      %1129 = vmatprep.subr.bf16.mxu0 %v1066
      %1130 = vmatpush1.bf16.msra.mxu0 %v1065
      %1131 = vmatprep.subr.bf16.mxu0 %v1071
      %1132 = vmatpush1.bf16.msra.mxu0 %v1070
      %1133 = vmatprep.subr.bf16.mxu0 %v1076
      %1134 = vmatpush1.bf16.msra.mxu0 %v1075
      %1135 = vmatprep.subr.bf16.mxu0 0
      %1136 = vmatpush1.bf16.msra.mxu0 0
      %1137 = vmatprep.subr.bf16.mxu0 0
      %1138 = vmatpush1.bf16.msra.mxu0 0
      %1139 = vmatprep.subr.bf16.mxu0 0
      %1140 = vmatpush1.bf16.msra.mxu0 0
      %1141 = vmatprep.subr.bf16.mxu0 0
      %1142 = vmatpush1.bf16.msra.mxu0 0
      %1143 = vmatprep.subr.bf16.mxu0 0
      %1144 = vmatpush1.bf16.msra.mxu0 0
      %1145 = vmatprep.subr.bf16.mxu0 0
      %1146 = vmatpush1.bf16.msra.mxu0 0
      %1147 = vmatprep.subr.bf16.mxu0 0
      %1148 = vmatpush1.bf16.msra.mxu0 0
      %1149 = vmatprep.subr.bf16.mxu0 0
      %1150 = vmatpush1.bf16.msra.mxu0 0
      %1151 = vmatprep.subr.bf16.mxu0 0
      %1152 = vmatpush1.bf16.msra.mxu0 0
      %1153 = vmatprep.subr.bf16.mxu0 0
      %1154 = vmatpush1.bf16.msra.mxu0 0
      %1155 = vmatprep.subr.bf16.mxu0 0
      %1156 = vmatpush1.bf16.msra.mxu0 0
      %1157 = vmatprep.subr.bf16.mxu0 0
      %1158 = vmatpush1.bf16.msra.mxu0 0
      %1159 = vmatprep.subr.bf16.mxu0 0
      %1160 = vmatpush1.bf16.msra.mxu0 0
      %1161 = vmatprep.mubr.bf16.mxu0 0
      %1162 = vmatmul.mubr.bf16.gmra.mrb[0].mxu0 %v1084
      %v1163 = vpop.f32.mrb[0].mxu0
      %v1164 = vadd.f32 0.0, %v1163
      %v1165 = vpop.f32.mrb[0].mxu0
      %v1166 = vadd.f32 0.0, %v1165
      %v1167 = vpop.f32.mrb[0].mxu0
      %v1168 = vadd.f32 0.0, %v1167
      %v1169 = vpop.f32.mrb[0].mxu0
      %v1170 = vadd.f32 0.0, %v1169
      %1171 = vdwg.mxu0
      %1172 = vmatprep.subr.bf16.mxu0 0
      %1173 = vmatpush1.bf16.msra.mxu0 %v1067
      %1174 = vmatprep.subr.bf16.mxu0 0
      %1175 = vmatpush1.bf16.msra.mxu0 %v1072
      %1176 = vmatprep.subr.bf16.mxu0 0
      %1177 = vmatpush1.bf16.msra.mxu0 %v1077
      %1178 = vmatprep.subr.bf16.mxu0 0
      %1179 = vmatpush1.bf16.msra.mxu0 0
      %1180 = vmatprep.subr.bf16.mxu0 0
      %1181 = vmatpush1.bf16.msra.mxu0 0
      %1182 = vmatprep.subr.bf16.mxu0 0
      %1183 = vmatpush1.bf16.msra.mxu0 0
      %1184 = vmatprep.subr.bf16.mxu0 0
      %1185 = vmatpush1.bf16.msra.mxu0 0
      %1186 = vmatprep.subr.bf16.mxu0 0
      %1187 = vmatpush1.bf16.msra.mxu0 0
      %1188 = vmatprep.subr.bf16.mxu0 0
      %1189 = vmatpush1.bf16.msra.mxu0 0
      %1190 = vmatprep.subr.bf16.mxu0 0
      %1191 = vmatpush1.bf16.msra.mxu0 0
      %1192 = vmatprep.subr.bf16.mxu0 0
      %1193 = vmatpush1.bf16.msra.mxu0 0
      %1194 = vmatprep.subr.bf16.mxu0 0
      %1195 = vmatpush1.bf16.msra.mxu0 0
      %1196 = vmatprep.subr.bf16.mxu0 0
      %1197 = vmatpush1.bf16.msra.mxu0 0
      %1198 = vmatprep.subr.bf16.mxu0 0
      %1199 = vmatpush1.bf16.msra.mxu0 0
      %1200 = vmatprep.subr.bf16.mxu0 0
      %1201 = vmatpush1.bf16.msra.mxu0 0
      %1202 = vmatprep.subr.bf16.mxu0 0
      %1203 = vmatpush1.bf16.msra.mxu0 0
      %1204 = vmatprep.mubr.bf16.mxu0 0
      %1205 = vmatmul.mubr.bf16.gmra.mrb[0].mxu0 %v1084
      %v1206 = vpop.f32.mrb[0].mxu0
      %v1207 = vadd.f32 0.0, %v1206
      %v1208 = vpop.f32.mrb[0].mxu0
      %v1209 = vpop.f32.mrb[0].mxu0
      %v1210 = vadd.f32 0.0, %v1209
      %v1211 = vpop.f32.mrb[0].mxu0
      %1212 = vdwg.mxu0
      %v1213 = vadd.f32 %v794, %v1121
      %v1214 = vadd.f32 %v796, %v1123
      %v1215 = vadd.f32 %v837, %v1164
      %v1216 = vadd.f32 %v839, %v1166
      %v1217 = vadd.f32 %v880, %v1207
      %v1218 = vadd.f32 %v798, %v1125
      %v1219 = vadd.f32 %v800, %v1127
      %v1220 = vadd.f32 %v841, %v1168
      %v1221 = vadd.f32 %v843, %v1170
      %v1222 = vadd.f32 %v883, %v1210
      %v1223 = vld [vmem:[%s2] sm:$0xff]
      %v1224 = vld [vmem:[%s2 + $0x8] sm:$0xff]
      %1226 = vset.pattern.permute.xlu0 0
      %1227 = vperm.xlu0 %1226, %v1223
      %v1228 = vpop.permute.xlu0 %1227
      %1231 = vset.pattern.permute.xlu0 0
      %1232 = vperm.xlu0 %1231, %v1224
      %v1233 = vpop.permute.xlu0 %1232
      %v1235 = vadd.f32 %v1213, %v1228
      %v1236 = vadd.f32 %v1214, %v1228
      %v1237 = vadd.f32 %v1215, %v1228
      %v1238 = vadd.f32 %v1216, %v1228
      %v1239 = vadd.f32 %v1217, %v1228
      %v1240 = vadd.f32 %v1218, %v1233
      %v1241 = vadd.f32 %v1219, %v1233
      %v1242 = vadd.f32 %v1220, %v1233
      %v1243 = vadd.f32 %v1221, %v1233
      %v1244 = vadd.f32 %v1222, %v1233
      %v1245 = vmax.f32 %v1235, 0.0
      %v1246 = vmax.f32 %v1236, 0.0
      %v1247 = vmax.f32 %v1237, 0.0
      %v1248 = vmax.f32 %v1238, 0.0
      %v1249 = vmax.f32 %v1239, 0.0
      %v1250 = vmax.f32 %v1240, 0.0
      %v1251 = vmax.f32 %v1241, 0.0
      %v1252 = vmax.f32 %v1242, 0.0
      %v1253 = vmax.f32 %v1243, 0.0
      %v1254 = vmax.f32 %v1244, 0.0
      %v1255 = vld [vmem:[%s5] sm:$0x1f]
      %v1257 = vlaneseq
      %v1258 = vshrl.u32 %v1257, 7
      %v1259 = vsub.s32 0, %v1258
      %v1260 = vrot.slane %v1255, %v1259
      %v1261 = vlaneseq
      %v1262 = vshrl.u32 %v1261, 7
      %v1263 = vsub.s32 1, %v1262
      %v1264 = vrot.slane %v1255, %v1263
      %v1265 = vlaneseq
      %v1266 = vshrl.u32 %v1265, 7
      %v1267 = vsub.s32 2, %v1266
      %v1268 = vrot.slane %v1255, %v1267
      %v1269 = vlaneseq
      %v1270 = vshrl.u32 %v1269, 7
      %v1271 = vsub.s32 3, %v1270
      %v1272 = vrot.slane %v1255, %v1271
      %v1273 = vlaneseq
      %v1274 = vshrl.u32 %v1273, 7
      %v1275 = vsub.s32 4, %v1274
      %v1276 = vrot.slane %v1255, %v1275
      %v1282 = vmul.f32 %v1245, %v1260
      %v1283 = vmul.f32 %v1246, %v1264
      %v1284 = vmul.f32 %v1247, %v1268
      %v1285 = vmul.f32 %v1248, %v1272
      %v1286 = vmul.f32 %v1249, %v1276
      %v1287 = vmul.f32 %v1250, %v1260
      %v1288 = vmul.f32 %v1251, %v1264
      %v1289 = vmul.f32 %v1252, %v1268
      %v1290 = vmul.f32 %v1253, %v1272
      %v1291 = vmul.f32 %v1254, %v1276
      %1292 = vst [vmem:[#allocation3] sm:$0xff] 0
      %1293 = vst [vmem:[#allocation3 + $0x30] sm:$0xff] 0
      %v1294 = vpack.c.bf16 %v1287, %v1282
      %v1295 = vpack.c.bf16 %v1288, %v1283
      %v1296 = vpack.c.bf16 %v1289, %v1284
      %v1297 = vpack.c.bf16 %v1290, %v1285
      %v1298 = vpack.c.bf16 %v1291, %v1286
      %1299 = vst [vmem:[#allocation3 + $0x8] sm:$0xff] %v1294
      %1300 = vst [vmem:[#allocation3 + $0x10] sm:$0xff] %v1295
      %1301 = vst [vmem:[#allocation3 + $0x18] sm:$0xff] %v1296
      %1302 = vst [vmem:[#allocation3 + $0x20] sm:$0xff] %v1297
      %1303 = vst [vmem:[#allocation3 + $0x28] sm:$0xff] %v1298
      %v1304 = vld [vmem:[#allocation3] sm:$0xff]
      %v1305 = vld [vmem:[#allocation3 + $0x8] sm:$0xff]
      %v1306 = vld [vmem:[#allocation3 + $0x10] sm:$0xff]
      %v1307 = vld [vmem:[#allocation3 + $0x18] sm:$0xff]
      %v1308 = vld [vmem:[#allocation3 + $0x20] sm:$0xff]
      %v1309 = vld [vmem:[#allocation3 + $0x28] sm:$0xff]
      %1316 = vrot.lane.b32.xlu0 %v1304, 66
      %v1317 = vpop.permute.xlu0 %1316
      %1318 = vrot.lane.b32.xlu0 %v1305, 66
      %v1319 = vpop.permute.xlu0 %1318
      %1320 = vrot.lane.b32.xlu0 %v1306, 66
      %v1321 = vpop.permute.xlu0 %1320
      %1322 = vrot.lane.b32.xlu0 %v1307, 66
      %v1323 = vpop.permute.xlu0 %1322
      %1324 = vrot.lane.b32.xlu0 %v1308, 66
      %v1325 = vpop.permute.xlu0 %1324
      %1326 = vrot.lane.b32.xlu0 %v1309, 66
      %v1327 = vpop.permute.xlu0 %1326
      %vm1328 = vcmask 539648
      %v1329 = vsel %vm1328, %v1317, %v1319
      %v1330 = vsel %vm1328, %v1319, %v1321
      %v1331 = vsel %vm1328, %v1321, %v1323
      %v1332 = vsel %vm1328, %v1323, %v1325
      %v1333 = vsel %vm1328, %v1325, %v1327
      %1339 = vst [vmem:[#allocation2] sm:$0xff] %v1329
      %1340 = vst [vmem:[#allocation2 + $0x8] sm:$0xff] %v1330
      %1341 = vst [vmem:[#allocation2 + $0x10] sm:$0xff] %v1331
      %1342 = vst [vmem:[#allocation2 + $0x18] sm:$0xff] %v1332
      %1343 = vst [vmem:[#allocation2 + $0x20] sm:$0xff] %v1333
      %v1344 = vld [vmem:[#allocation3] sm:$0xff]
      %v1345 = vld [vmem:[#allocation3 + $0x8] sm:$0xff]
      %v1346 = vld [vmem:[#allocation3 + $0x10] sm:$0xff]
      %v1347 = vld [vmem:[#allocation3 + $0x18] sm:$0xff]
      %v1348 = vld [vmem:[#allocation3 + $0x20] sm:$0xff]
      %v1349 = vld [vmem:[#allocation3 + $0x28] sm:$0xff]
      %1356 = vrot.lane.b32.xlu0 %v1344, 65
      %v1357 = vpop.permute.xlu0 %1356
      %1358 = vrot.lane.b32.xlu0 %v1345, 65
      %v1359 = vpop.permute.xlu0 %1358
      %1360 = vrot.lane.b32.xlu0 %v1346, 65
      %v1361 = vpop.permute.xlu0 %1360
      %1362 = vrot.lane.b32.xlu0 %v1347, 65
      %v1363 = vpop.permute.xlu0 %1362
      %1364 = vrot.lane.b32.xlu0 %v1348, 65
      %v1365 = vpop.permute.xlu0 %1364
      %1366 = vrot.lane.b32.xlu0 %v1349, 65
      %v1367 = vpop.permute.xlu0 %1366
      %vm1368 = vcmask 531456
      %v1369 = vsel %vm1368, %v1357, %v1359
      %v1370 = vsel %vm1368, %v1359, %v1361
      %v1371 = vsel %vm1368, %v1361, %v1363
      %v1372 = vsel %vm1368, %v1363, %v1365
      %v1373 = vsel %vm1368, %v1365, %v1367
      %1379 = vst [vmem:[#allocation2 + $0x28] sm:$0xff] %v1369
      %1380 = vst [vmem:[#allocation2 + $0x30] sm:$0xff] %v1370
      %1381 = vst [vmem:[#allocation2 + $0x38] sm:$0xff] %v1371
      %1382 = vst [vmem:[#allocation2 + $0x40] sm:$0xff] %v1372
      %1383 = vst [vmem:[#allocation2 + $0x48] sm:$0xff] %v1373
      %v1384 = vld [vmem:[#allocation3] sm:$0xff]
      %v1385 = vld [vmem:[#allocation3 + $0x8] sm:$0xff]
      %v1386 = vld [vmem:[#allocation3 + $0x10] sm:$0xff]
      %v1387 = vld [vmem:[#allocation3 + $0x18] sm:$0xff]
      %v1388 = vld [vmem:[#allocation3 + $0x20] sm:$0xff]
      %v1389 = vld [vmem:[#allocation3 + $0x28] sm:$0xff]
      %1396 = vrot.lane.b32.xlu0 %v1384, 64
      %v1397 = vpop.permute.xlu0 %1396
      %1398 = vrot.lane.b32.xlu0 %v1385, 64
      %v1399 = vpop.permute.xlu0 %1398
      %1400 = vrot.lane.b32.xlu0 %v1386, 64
      %v1401 = vpop.permute.xlu0 %1400
      %1402 = vrot.lane.b32.xlu0 %v1387, 64
      %v1403 = vpop.permute.xlu0 %1402
      %1404 = vrot.lane.b32.xlu0 %v1388, 64
      %v1405 = vpop.permute.xlu0 %1404
      %1406 = vrot.lane.b32.xlu0 %v1389, 64
      %v1407 = vpop.permute.xlu0 %1406
      %vm1408 = vcmask 523264
      %v1409 = vsel %vm1408, %v1397, %v1399
      %v1410 = vsel %vm1408, %v1399, %v1401
      %v1411 = vsel %vm1408, %v1401, %v1403
      %v1412 = vsel %vm1408, %v1403, %v1405
      %v1413 = vsel %vm1408, %v1405, %v1407
      %1419 = vst [vmem:[#allocation2 + $0x50] sm:$0xff] %v1409
      %1420 = vst [vmem:[#allocation2 + $0x58] sm:$0xff] %v1410
      %1421 = vst [vmem:[#allocation2 + $0x60] sm:$0xff] %v1411
      %1422 = vst [vmem:[#allocation2 + $0x68] sm:$0xff] %v1412
      %1423 = vst [vmem:[#allocation2 + $0x70] sm:$0xff] %v1413
      %v1424 = vld [vmem:[#allocation3] sm:$0xff]
      %v1425 = vld [vmem:[#allocation3 + $0x8] sm:$0xff]
      %v1426 = vld [vmem:[#allocation3 + $0x10] sm:$0xff]
      %v1427 = vld [vmem:[#allocation3 + $0x18] sm:$0xff]
      %v1428 = vld [vmem:[#allocation3 + $0x20] sm:$0xff]
      %v1429 = vld [vmem:[#allocation3 + $0x28] sm:$0xff]
      %1436 = vrot.lane.b32.xlu0 %v1424, 63
      %v1437 = vpop.permute.xlu0 %1436
      %1438 = vrot.lane.b32.xlu0 %v1425, 63
      %v1439 = vpop.permute.xlu0 %1438
      %1440 = vrot.lane.b32.xlu0 %v1426, 63
      %v1441 = vpop.permute.xlu0 %1440
      %1442 = vrot.lane.b32.xlu0 %v1427, 63
      %v1443 = vpop.permute.xlu0 %1442
      %1444 = vrot.lane.b32.xlu0 %v1428, 63
      %v1445 = vpop.permute.xlu0 %1444
      %1446 = vrot.lane.b32.xlu0 %v1429, 63
      %v1447 = vpop.permute.xlu0 %1446
      %vm1448 = vcmask 515072
      %v1449 = vsel %vm1448, %v1437, %v1439
      %v1450 = vsel %vm1448, %v1439, %v1441
      %v1451 = vsel %vm1448, %v1441, %v1443
      %v1452 = vsel %vm1448, %v1443, %v1445
      %v1453 = vsel %vm1448, %v1445, %v1447
      %1459 = vst [vmem:[#allocation2 + $0x78] sm:$0xff] %v1449
      %1460 = vst [vmem:[#allocation2 + $0x80] sm:$0xff] %v1450
      %1461 = vst [vmem:[#allocation2 + $0x88] sm:$0xff] %v1451
      %1462 = vst [vmem:[#allocation2 + $0x90] sm:$0xff] %v1452
      %1463 = vst [vmem:[#allocation2 + $0x98] sm:$0xff] %v1453
      %v1464 = vld [vmem:[#allocation3] sm:$0xff]
      %v1465 = vld [vmem:[#allocation3 + $0x8] sm:$0xff]
      %v1466 = vld [vmem:[#allocation3 + $0x10] sm:$0xff]
      %v1467 = vld [vmem:[#allocation3 + $0x18] sm:$0xff]
      %v1468 = vld [vmem:[#allocation3 + $0x20] sm:$0xff]
      %v1469 = vld [vmem:[#allocation3 + $0x28] sm:$0xff]
      %1476 = vrot.lane.b32.xlu0 %v1464, 62
      %v1477 = vpop.permute.xlu0 %1476
      %1478 = vrot.lane.b32.xlu0 %v1465, 62
      %v1479 = vpop.permute.xlu0 %1478
      %1480 = vrot.lane.b32.xlu0 %v1466, 62
      %v1481 = vpop.permute.xlu0 %1480
      %1482 = vrot.lane.b32.xlu0 %v1467, 62
      %v1483 = vpop.permute.xlu0 %1482
      %1484 = vrot.lane.b32.xlu0 %v1468, 62
      %v1485 = vpop.permute.xlu0 %1484
      %1486 = vrot.lane.b32.xlu0 %v1469, 62
      %v1487 = vpop.permute.xlu0 %1486
      %vm1488 = vcmask 506880
      %v1489 = vsel %vm1488, %v1477, %v1479
      %v1490 = vsel %vm1488, %v1479, %v1481
      %v1491 = vsel %vm1488, %v1481, %v1483
      %v1492 = vsel %vm1488, %v1483, %v1485
      %v1493 = vsel %vm1488, %v1485, %v1487
      %1499 = vst [vmem:[#allocation2 + $0xa0] sm:$0xff] %v1489
      %1500 = vst [vmem:[#allocation2 + $0xa8] sm:$0xff] %v1490
      %1501 = vst [vmem:[#allocation2 + $0xb0] sm:$0xff] %v1491
      %1502 = vst [vmem:[#allocation2 + $0xb8] sm:$0xff] %v1492
      %1503 = vst [vmem:[#allocation2 + $0xc0] sm:$0xff] %v1493
      %v1504 = vld [vmem:[%s3] sm:$0xf]
      %v1505 = vld [vmem:[%s3 + $0x4] sm:$0xf]
      %v1506 = vld [vmem:[%s3 + $0x8] sm:$0xf]
      %v1507 = vld [vmem:[%s3 + $0xc] sm:$0xf]
      %v1508 = vld [vmem:[#allocation2] sm:$0xff]
      %v1509 = vld [vmem:[#allocation2 + $0x8] sm:$0xff]
      %v1510 = vld [vmem:[#allocation2 + $0x10] sm:$0xff]
      %v1511 = vld [vmem:[#allocation2 + $0x18] sm:$0xff]
      %v1512 = vld [vmem:[#allocation2 + $0x20] sm:$0xff]
      %v1513 = vld [vmem:[#allocation2 + $0x28] sm:$0xff]
      %v1514 = vld [vmem:[#allocation2 + $0x30] sm:$0xff]
      %v1515 = vld [vmem:[#allocation2 + $0x38] sm:$0xff]
      %v1516 = vld [vmem:[#allocation2 + $0x40] sm:$0xff]
      %v1517 = vld [vmem:[#allocation2 + $0x48] sm:$0xff]
      %v1518 = vld [vmem:[#allocation2 + $0x50] sm:$0xff]
      %v1519 = vld [vmem:[#allocation2 + $0x58] sm:$0xff]
      %v1520 = vld [vmem:[#allocation2 + $0x60] sm:$0xff]
      %v1521 = vld [vmem:[#allocation2 + $0x68] sm:$0xff]
      %v1522 = vld [vmem:[#allocation2 + $0x70] sm:$0xff]
      %v1523 = vld [vmem:[#allocation2 + $0x78] sm:$0xff]
      %v1524 = vld [vmem:[#allocation2 + $0x80] sm:$0xff]
      %v1525 = vld [vmem:[#allocation2 + $0x88] sm:$0xff]
      %v1526 = vld [vmem:[#allocation2 + $0x90] sm:$0xff]
      %v1527 = vld [vmem:[#allocation2 + $0x98] sm:$0xff]
      %v1528 = vld [vmem:[#allocation2 + $0xa0] sm:$0xff]
      %v1529 = vld [vmem:[#allocation2 + $0xa8] sm:$0xff]
      %v1530 = vld [vmem:[#allocation2 + $0xb0] sm:$0xff]
      %v1531 = vld [vmem:[#allocation2 + $0xb8] sm:$0xff]
      %v1532 = vld [vmem:[#allocation2 + $0xc0] sm:$0xff]
      %v1533 = vld [vmem:[#allocation3] sm:$0xff]
      %v1534 = vld [vmem:[#allocation3 + $0x8] sm:$0xff]
      %v1535 = vld [vmem:[#allocation3 + $0x10] sm:$0xff]
      %v1536 = vld [vmem:[#allocation3 + $0x18] sm:$0xff]
      %v1537 = vld [vmem:[#allocation3 + $0x20] sm:$0xff]
      %v1538 = vld [vmem:[#allocation3 + $0x28] sm:$0xff]
      %1545 = vrot.lane.b32.xlu0 %v1533, 34
      %v1546 = vpop.permute.xlu0 %1545
      %1547 = vrot.lane.b32.xlu0 %v1534, 34
      %v1548 = vpop.permute.xlu0 %1547
      %1549 = vrot.lane.b32.xlu0 %v1535, 34
      %v1550 = vpop.permute.xlu0 %1549
      %1551 = vrot.lane.b32.xlu0 %v1536, 34
      %v1552 = vpop.permute.xlu0 %1551
      %1553 = vrot.lane.b32.xlu0 %v1537, 34
      %v1554 = vpop.permute.xlu0 %1553
      %1555 = vrot.lane.b32.xlu0 %v1538, 34
      %v1556 = vpop.permute.xlu0 %1555
      %vm1557 = vcmask 277504
      %v1558 = vsel %vm1557, %v1546, %v1548
      %v1559 = vsel %vm1557, %v1548, %v1550
      %v1560 = vsel %vm1557, %v1550, %v1552
      %v1561 = vsel %vm1557, %v1552, %v1554
      %v1562 = vsel %vm1557, %v1554, %v1556
      %1568 = vst [vmem:[#allocation2] sm:$0xff] %v1558
      %1569 = vst [vmem:[#allocation2 + $0x8] sm:$0xff] %v1559
      %1570 = vst [vmem:[#allocation2 + $0x10] sm:$0xff] %v1560
      %1571 = vst [vmem:[#allocation2 + $0x18] sm:$0xff] %v1561
      %1572 = vst [vmem:[#allocation2 + $0x20] sm:$0xff] %v1562
      %v1573 = vld [vmem:[#allocation3] sm:$0xff]
      %v1574 = vld [vmem:[#allocation3 + $0x8] sm:$0xff]
      %v1575 = vld [vmem:[#allocation3 + $0x10] sm:$0xff]
      %v1576 = vld [vmem:[#allocation3 + $0x18] sm:$0xff]
      %v1577 = vld [vmem:[#allocation3 + $0x20] sm:$0xff]
      %v1578 = vld [vmem:[#allocation3 + $0x28] sm:$0xff]
      %1585 = vrot.lane.b32.xlu0 %v1573, 33
      %v1586 = vpop.permute.xlu0 %1585
      %1587 = vrot.lane.b32.xlu0 %v1574, 33
      %v1588 = vpop.permute.xlu0 %1587
      %1589 = vrot.lane.b32.xlu0 %v1575, 33
      %v1590 = vpop.permute.xlu0 %1589
      %1591 = vrot.lane.b32.xlu0 %v1576, 33
      %v1592 = vpop.permute.xlu0 %1591
      %1593 = vrot.lane.b32.xlu0 %v1577, 33
      %v1594 = vpop.permute.xlu0 %1593
      %1595 = vrot.lane.b32.xlu0 %v1578, 33
      %v1596 = vpop.permute.xlu0 %1595
      %v1597 = vsel %vm295, %v1586, %v1588
      %v1598 = vsel %vm295, %v1588, %v1590
      %v1599 = vsel %vm295, %v1590, %v1592
      %v1600 = vsel %vm295, %v1592, %v1594
      %v1601 = vsel %vm295, %v1594, %v1596
      %1607 = vst [vmem:[#allocation2 + $0x28] sm:$0xff] %v1597
      %1608 = vst [vmem:[#allocation2 + $0x30] sm:$0xff] %v1598
      %1609 = vst [vmem:[#allocation2 + $0x38] sm:$0xff] %v1599
      %1610 = vst [vmem:[#allocation2 + $0x40] sm:$0xff] %v1600
      %1611 = vst [vmem:[#allocation2 + $0x48] sm:$0xff] %v1601
      %v1612 = vld [vmem:[#allocation3] sm:$0xff]
      %v1613 = vld [vmem:[#allocation3 + $0x8] sm:$0xff]
      %v1614 = vld [vmem:[#allocation3 + $0x10] sm:$0xff]
      %v1615 = vld [vmem:[#allocation3 + $0x18] sm:$0xff]
      %v1616 = vld [vmem:[#allocation3 + $0x20] sm:$0xff]
      %v1617 = vld [vmem:[#allocation3 + $0x28] sm:$0xff]
      %1624 = vrot.lane.b32.xlu0 %v1612, 32
      %v1625 = vpop.permute.xlu0 %1624
      %1626 = vrot.lane.b32.xlu0 %v1613, 32
      %v1627 = vpop.permute.xlu0 %1626
      %1628 = vrot.lane.b32.xlu0 %v1614, 32
      %v1629 = vpop.permute.xlu0 %1628
      %1630 = vrot.lane.b32.xlu0 %v1615, 32
      %v1631 = vpop.permute.xlu0 %1630
      %1632 = vrot.lane.b32.xlu0 %v1616, 32
      %v1633 = vpop.permute.xlu0 %1632
      %1634 = vrot.lane.b32.xlu0 %v1617, 32
      %v1635 = vpop.permute.xlu0 %1634
      %v1636 = vsel %vm353, %v1625, %v1627
      %v1637 = vsel %vm353, %v1627, %v1629
      %v1638 = vsel %vm353, %v1629, %v1631
      %v1639 = vsel %vm353, %v1631, %v1633
      %v1640 = vsel %vm353, %v1633, %v1635
      %1646 = vst [vmem:[#allocation2 + $0x50] sm:$0xff] %v1636
      %1647 = vst [vmem:[#allocation2 + $0x58] sm:$0xff] %v1637
      %1648 = vst [vmem:[#allocation2 + $0x60] sm:$0xff] %v1638
      %1649 = vst [vmem:[#allocation2 + $0x68] sm:$0xff] %v1639
      %1650 = vst [vmem:[#allocation2 + $0x70] sm:$0xff] %v1640
      %v1651 = vld [vmem:[#allocation3] sm:$0xff]
      %v1652 = vld [vmem:[#allocation3 + $0x8] sm:$0xff]
      %v1653 = vld [vmem:[#allocation3 + $0x10] sm:$0xff]
      %v1654 = vld [vmem:[#allocation3 + $0x18] sm:$0xff]
      %v1655 = vld [vmem:[#allocation3 + $0x20] sm:$0xff]
      %v1656 = vld [vmem:[#allocation3 + $0x28] sm:$0xff]
      %1663 = vrot.lane.b32.xlu0 %v1651, 31
      %v1664 = vpop.permute.xlu0 %1663
      %1665 = vrot.lane.b32.xlu0 %v1652, 31
      %v1666 = vpop.permute.xlu0 %1665
      %1667 = vrot.lane.b32.xlu0 %v1653, 31
      %v1668 = vpop.permute.xlu0 %1667
      %1669 = vrot.lane.b32.xlu0 %v1654, 31
      %v1670 = vpop.permute.xlu0 %1669
      %1671 = vrot.lane.b32.xlu0 %v1655, 31
      %v1672 = vpop.permute.xlu0 %1671
      %1673 = vrot.lane.b32.xlu0 %v1656, 31
      %v1674 = vpop.permute.xlu0 %1673
      %v1675 = vsel %vm411, %v1664, %v1666
      %v1676 = vsel %vm411, %v1666, %v1668
      %v1677 = vsel %vm411, %v1668, %v1670
      %v1678 = vsel %vm411, %v1670, %v1672
      %v1679 = vsel %vm411, %v1672, %v1674
      %1685 = vst [vmem:[#allocation2 + $0x78] sm:$0xff] %v1675
      %1686 = vst [vmem:[#allocation2 + $0x80] sm:$0xff] %v1676
      %1687 = vst [vmem:[#allocation2 + $0x88] sm:$0xff] %v1677
      %1688 = vst [vmem:[#allocation2 + $0x90] sm:$0xff] %v1678
      %1689 = vst [vmem:[#allocation2 + $0x98] sm:$0xff] %v1679
      %v1690 = vld [vmem:[#allocation3] sm:$0xff]
      %v1691 = vld [vmem:[#allocation3 + $0x8] sm:$0xff]
      %v1692 = vld [vmem:[#allocation3 + $0x10] sm:$0xff]
      %v1693 = vld [vmem:[#allocation3 + $0x18] sm:$0xff]
      %v1694 = vld [vmem:[#allocation3 + $0x20] sm:$0xff]
      %v1695 = vld [vmem:[#allocation3 + $0x28] sm:$0xff]
      %1702 = vrot.lane.b32.xlu0 %v1690, 30
      %v1703 = vpop.permute.xlu0 %1702
      %1704 = vrot.lane.b32.xlu0 %v1691, 30
      %v1705 = vpop.permute.xlu0 %1704
      %1706 = vrot.lane.b32.xlu0 %v1692, 30
      %v1707 = vpop.permute.xlu0 %1706
      %1708 = vrot.lane.b32.xlu0 %v1693, 30
      %v1709 = vpop.permute.xlu0 %1708
      %1710 = vrot.lane.b32.xlu0 %v1694, 30
      %v1711 = vpop.permute.xlu0 %1710
      %1712 = vrot.lane.b32.xlu0 %v1695, 30
      %v1713 = vpop.permute.xlu0 %1712
      %vm1714 = vcmask 244736
      %v1715 = vsel %vm1714, %v1703, %v1705
      %v1716 = vsel %vm1714, %v1705, %v1707
      %v1717 = vsel %vm1714, %v1707, %v1709
      %v1718 = vsel %vm1714, %v1709, %v1711
      %v1719 = vsel %vm1714, %v1711, %v1713
      %1725 = vst [vmem:[#allocation2 + $0xa0] sm:$0xff] %v1715
      %1726 = vst [vmem:[#allocation2 + $0xa8] sm:$0xff] %v1716
      %1727 = vst [vmem:[#allocation2 + $0xb0] sm:$0xff] %v1717
      %1728 = vst [vmem:[#allocation2 + $0xb8] sm:$0xff] %v1718
      %1729 = vst [vmem:[#allocation2 + $0xc0] sm:$0xff] %v1719
      %s1730 = scalar_lea.vmem %s3, 16
      %v1731 = vld [vmem:[%s1730] sm:$0xf]
      %v1732 = vld [vmem:[%s1730 + $0x4] sm:$0xf]
      %v1733 = vld [vmem:[%s1730 + $0x8] sm:$0xf]
      %v1734 = vld [vmem:[%s1730 + $0xc] sm:$0xf]
      %v1735 = vld [vmem:[#allocation2] sm:$0xff]
      %v1736 = vld [vmem:[#allocation2 + $0x8] sm:$0xff]
      %v1737 = vld [vmem:[#allocation2 + $0x10] sm:$0xff]
      %v1738 = vld [vmem:[#allocation2 + $0x18] sm:$0xff]
      %v1739 = vld [vmem:[#allocation2 + $0x20] sm:$0xff]
      %v1740 = vld [vmem:[#allocation2 + $0x28] sm:$0xff]
      %v1741 = vld [vmem:[#allocation2 + $0x30] sm:$0xff]
      %v1742 = vld [vmem:[#allocation2 + $0x38] sm:$0xff]
      %v1743 = vld [vmem:[#allocation2 + $0x40] sm:$0xff]
      %v1744 = vld [vmem:[#allocation2 + $0x48] sm:$0xff]
      %v1745 = vld [vmem:[#allocation2 + $0x50] sm:$0xff]
      %v1746 = vld [vmem:[#allocation2 + $0x58] sm:$0xff]
      %v1747 = vld [vmem:[#allocation2 + $0x60] sm:$0xff]
      %v1748 = vld [vmem:[#allocation2 + $0x68] sm:$0xff]
      %v1749 = vld [vmem:[#allocation2 + $0x70] sm:$0xff]
      %v1750 = vld [vmem:[#allocation2 + $0x78] sm:$0xff]
      %v1751 = vld [vmem:[#allocation2 + $0x80] sm:$0xff]
      %v1752 = vld [vmem:[#allocation2 + $0x88] sm:$0xff]
      %v1753 = vld [vmem:[#allocation2 + $0x90] sm:$0xff]
      %v1754 = vld [vmem:[#allocation2 + $0x98] sm:$0xff]
      %v1755 = vld [vmem:[#allocation2 + $0xa0] sm:$0xff]
      %v1756 = vld [vmem:[#allocation2 + $0xa8] sm:$0xff]
      %v1757 = vld [vmem:[#allocation2 + $0xb0] sm:$0xff]
      %v1758 = vld [vmem:[#allocation2 + $0xb8] sm:$0xff]
      %v1759 = vld [vmem:[#allocation2 + $0xc0] sm:$0xff]
      %v1764 = vunpack.c.l.b16 %v1731
      %v1765 = vunpack.c.l.b16 %v1732
      %v1766 = vunpack.c.l.b16 %v1733
      %v1767 = vunpack.c.l.b16 %v1734
      %v1768 = vpack.c.b16 %v1765, %v1764
      %v1769 = vpack.c.b16 %v1767, %v1766
      %vm1770 = vcmask 654336
      %v1772 = vsel %vm1770, %v1768, 0
      %v1775 = vsel %vm1770, %v1769, 0
      %1777 = vmatprep.subr.bf16.mxu0 %v1736
      %1778 = vmatpush1.bf16.msra.mxu0 %v1735
      %1779 = vmatprep.subr.bf16.mxu0 %v1741
      %1780 = vmatpush1.bf16.msra.mxu0 %v1740
      %1781 = vmatprep.subr.bf16.mxu0 %v1746
      %1782 = vmatpush1.bf16.msra.mxu0 %v1745
      %1783 = vmatprep.subr.bf16.mxu0 %v1751
      %1784 = vmatpush1.bf16.msra.mxu0 %v1750
      %1785 = vmatprep.subr.bf16.mxu0 %v1756
      %1786 = vmatpush1.bf16.msra.mxu0 %v1755
      %1787 = vmatprep.subr.bf16.mxu0 0
      %1788 = vmatpush1.bf16.msra.mxu0 0
      %1789 = vmatprep.subr.bf16.mxu0 0
      %1790 = vmatpush1.bf16.msra.mxu0 0
      %1791 = vmatprep.subr.bf16.mxu0 0
      %1792 = vmatpush1.bf16.msra.mxu0 0
      %1793 = vmatprep.subr.bf16.mxu0 0
      %1794 = vmatpush1.bf16.msra.mxu0 0
      %1795 = vmatprep.subr.bf16.mxu0 0
      %1796 = vmatpush1.bf16.msra.mxu0 0
      %1797 = vmatprep.subr.bf16.mxu0 0
      %1798 = vmatpush1.bf16.msra.mxu0 0
      %1799 = vmatprep.subr.bf16.mxu0 0
      %1800 = vmatpush1.bf16.msra.mxu0 0
      %1801 = vmatprep.subr.bf16.mxu0 0
      %1802 = vmatpush1.bf16.msra.mxu0 0
      %1803 = vmatprep.subr.bf16.mxu0 0
      %1804 = vmatpush1.bf16.msra.mxu0 0
      %1805 = vmatprep.subr.bf16.mxu0 0
      %1806 = vmatpush1.bf16.msra.mxu0 0
      %1807 = vmatprep.subr.bf16.mxu0 0
      %1808 = vmatpush1.bf16.msra.mxu0 0
      %1809 = vmatprep.mubr.bf16.mxu0 0
      %1810 = vmatmul.mubr.bf16.gmra.mrb[0].mxu0 %v1772
      %v1811 = vpop.f32.mrb[0].mxu0
      %v1812 = vadd.f32 0.0, %v1811
      %v1813 = vpop.f32.mrb[0].mxu0
      %v1814 = vadd.f32 0.0, %v1813
      %v1815 = vpop.f32.mrb[0].mxu0
      %v1816 = vadd.f32 0.0, %v1815
      %v1817 = vpop.f32.mrb[0].mxu0
      %v1818 = vadd.f32 0.0, %v1817
      %1819 = vmatprep.mubr.bf16.mxu0 0
      %1820 = vmatmul.mubr.bf16.gmra.mrb[0].mxu0 %v1775
      %v1821 = vpop.f32.mrb[0].mxu0
      %v1822 = vadd.f32 0.0, %v1821
      %v1823 = vpop.f32.mrb[0].mxu0
      %v1824 = vadd.f32 0.0, %v1823
      %v1825 = vpop.f32.mrb[0].mxu0
      %v1826 = vadd.f32 0.0, %v1825
      %v1827 = vpop.f32.mrb[0].mxu0
      %v1828 = vadd.f32 0.0, %v1827
      %1829 = vdwg.mxu0
      %1830 = vmatprep.subr.bf16.mxu0 %v1738
      %1831 = vmatpush1.bf16.msra.mxu0 %v1737
      %1832 = vmatprep.subr.bf16.mxu0 %v1743
      %1833 = vmatpush1.bf16.msra.mxu0 %v1742
      %1834 = vmatprep.subr.bf16.mxu0 %v1748
      %1835 = vmatpush1.bf16.msra.mxu0 %v1747
      %1836 = vmatprep.subr.bf16.mxu0 %v1753
      %1837 = vmatpush1.bf16.msra.mxu0 %v1752
      %1838 = vmatprep.subr.bf16.mxu0 %v1758
      %1839 = vmatpush1.bf16.msra.mxu0 %v1757
      %1840 = vmatprep.subr.bf16.mxu0 0
      %1841 = vmatpush1.bf16.msra.mxu0 0
      %1842 = vmatprep.subr.bf16.mxu0 0
      %1843 = vmatpush1.bf16.msra.mxu0 0
      %1844 = vmatprep.subr.bf16.mxu0 0
      %1845 = vmatpush1.bf16.msra.mxu0 0
      %1846 = vmatprep.subr.bf16.mxu0 0
      %1847 = vmatpush1.bf16.msra.mxu0 0
      %1848 = vmatprep.subr.bf16.mxu0 0
      %1849 = vmatpush1.bf16.msra.mxu0 0
      %1850 = vmatprep.subr.bf16.mxu0 0
      %1851 = vmatpush1.bf16.msra.mxu0 0
      %1852 = vmatprep.subr.bf16.mxu0 0
      %1853 = vmatpush1.bf16.msra.mxu0 0
      %1854 = vmatprep.subr.bf16.mxu0 0
      %1855 = vmatpush1.bf16.msra.mxu0 0
      %1856 = vmatprep.subr.bf16.mxu0 0
      %1857 = vmatpush1.bf16.msra.mxu0 0
      %1858 = vmatprep.subr.bf16.mxu0 0
      %1859 = vmatpush1.bf16.msra.mxu0 0
      %1860 = vmatprep.subr.bf16.mxu0 0
      %1861 = vmatpush1.bf16.msra.mxu0 0
      %1862 = vmatprep.mubr.bf16.mxu0 0
      %1863 = vmatmul.mubr.bf16.gmra.mrb[0].mxu0 %v1772
      %v1864 = vpop.f32.mrb[0].mxu0
      %v1865 = vadd.f32 0.0, %v1864
      %v1866 = vpop.f32.mrb[0].mxu0
      %v1867 = vadd.f32 0.0, %v1866
      %v1868 = vpop.f32.mrb[0].mxu0
      %v1869 = vadd.f32 0.0, %v1868
      %v1870 = vpop.f32.mrb[0].mxu0
      %v1871 = vadd.f32 0.0, %v1870
      %1872 = vmatprep.mubr.bf16.mxu0 0
      %1873 = vmatmul.mubr.bf16.gmra.mrb[0].mxu0 %v1775
      %v1874 = vpop.f32.mrb[0].mxu0
      %v1875 = vadd.f32 0.0, %v1874
      %v1876 = vpop.f32.mrb[0].mxu0
      %v1877 = vadd.f32 0.0, %v1876
      %v1878 = vpop.f32.mrb[0].mxu0
      %v1879 = vadd.f32 0.0, %v1878
      %v1880 = vpop.f32.mrb[0].mxu0
      %v1881 = vadd.f32 0.0, %v1880
      %1882 = vdwg.mxu0
      %1883 = vmatprep.subr.bf16.mxu0 0
      %1884 = vmatpush1.bf16.msra.mxu0 %v1739
      %1885 = vmatprep.subr.bf16.mxu0 0
      %1886 = vmatpush1.bf16.msra.mxu0 %v1744
      %1887 = vmatprep.subr.bf16.mxu0 0
      %1888 = vmatpush1.bf16.msra.mxu0 %v1749
      %1889 = vmatprep.subr.bf16.mxu0 0
      %1890 = vmatpush1.bf16.msra.mxu0 %v1754
      %1891 = vmatprep.subr.bf16.mxu0 0
      %1892 = vmatpush1.bf16.msra.mxu0 %v1759
      %1893 = vmatprep.subr.bf16.mxu0 0
      %1894 = vmatpush1.bf16.msra.mxu0 0
      %1895 = vmatprep.subr.bf16.mxu0 0
      %1896 = vmatpush1.bf16.msra.mxu0 0
      %1897 = vmatprep.subr.bf16.mxu0 0
      %1898 = vmatpush1.bf16.msra.mxu0 0
      %1899 = vmatprep.subr.bf16.mxu0 0
      %1900 = vmatpush1.bf16.msra.mxu0 0
      %1901 = vmatprep.subr.bf16.mxu0 0
      %1902 = vmatpush1.bf16.msra.mxu0 0
      %1903 = vmatprep.subr.bf16.mxu0 0
      %1904 = vmatpush1.bf16.msra.mxu0 0
      %1905 = vmatprep.subr.bf16.mxu0 0
      %1906 = vmatpush1.bf16.msra.mxu0 0
      %1907 = vmatprep.subr.bf16.mxu0 0
      %1908 = vmatpush1.bf16.msra.mxu0 0
      %1909 = vmatprep.subr.bf16.mxu0 0
      %1910 = vmatpush1.bf16.msra.mxu0 0
      %1911 = vmatprep.subr.bf16.mxu0 0
      %1912 = vmatpush1.bf16.msra.mxu0 0
      %1913 = vmatprep.subr.bf16.mxu0 0
      %1914 = vmatpush1.bf16.msra.mxu0 0
      %1915 = vmatprep.mubr.bf16.mxu0 0
      %1916 = vmatmul.mubr.bf16.gmra.mrb[0].mxu0 %v1772
      %v1917 = vpop.f32.mrb[0].mxu0
      %v1918 = vadd.f32 0.0, %v1917
      %v1919 = vpop.f32.mrb[0].mxu0
      %v1920 = vpop.f32.mrb[0].mxu0
      %v1921 = vadd.f32 0.0, %v1920
      %v1922 = vpop.f32.mrb[0].mxu0
      %1923 = vmatprep.mubr.bf16.mxu0 0
      %1924 = vmatmul.mubr.bf16.gmra.mrb[0].mxu0 %v1775
      %v1925 = vpop.f32.mrb[0].mxu0
      %v1926 = vadd.f32 0.0, %v1925
      %v1927 = vpop.f32.mrb[0].mxu0
      %v1928 = vpop.f32.mrb[0].mxu0
      %v1929 = vadd.f32 0.0, %v1928
      %v1930 = vpop.f32.mrb[0].mxu0
      %1931 = vdwg.mxu0
      %v1936 = vunpack.c.l.b16 %v1504
      %v1937 = vunpack.c.l.b16 %v1505
      %v1938 = vunpack.c.l.b16 %v1506
      %v1939 = vunpack.c.l.b16 %v1507
      %v1940 = vpack.c.b16 %v1937, %v1936
      %v1941 = vpack.c.b16 %v1939, %v1938
      %v1943 = vsel %vm1770, %v1940, 0
      %v1946 = vsel %vm1770, %v1941, 0
      %1948 = vmatprep.subr.bf16.mxu0 %v1509
      %1949 = vmatpush1.bf16.msra.mxu0 %v1508
      %1950 = vmatprep.subr.bf16.mxu0 %v1514
      %1951 = vmatpush1.bf16.msra.mxu0 %v1513
      %1952 = vmatprep.subr.bf16.mxu0 %v1519
      %1953 = vmatpush1.bf16.msra.mxu0 %v1518
      %1954 = vmatprep.subr.bf16.mxu0 %v1524
      %1955 = vmatpush1.bf16.msra.mxu0 %v1523
      %1956 = vmatprep.subr.bf16.mxu0 %v1529
      %1957 = vmatpush1.bf16.msra.mxu0 %v1528
      %1958 = vmatprep.subr.bf16.mxu0 0
      %1959 = vmatpush1.bf16.msra.mxu0 0
      %1960 = vmatprep.subr.bf16.mxu0 0
      %1961 = vmatpush1.bf16.msra.mxu0 0
      %1962 = vmatprep.subr.bf16.mxu0 0
      %1963 = vmatpush1.bf16.msra.mxu0 0
      %1964 = vmatprep.subr.bf16.mxu0 0
      %1965 = vmatpush1.bf16.msra.mxu0 0
      %1966 = vmatprep.subr.bf16.mxu0 0
      %1967 = vmatpush1.bf16.msra.mxu0 0
      %1968 = vmatprep.subr.bf16.mxu0 0
      %1969 = vmatpush1.bf16.msra.mxu0 0
      %1970 = vmatprep.subr.bf16.mxu0 0
      %1971 = vmatpush1.bf16.msra.mxu0 0
      %1972 = vmatprep.subr.bf16.mxu0 0
      %1973 = vmatpush1.bf16.msra.mxu0 0
      %1974 = vmatprep.subr.bf16.mxu0 0
      %1975 = vmatpush1.bf16.msra.mxu0 0
      %1976 = vmatprep.subr.bf16.mxu0 0
      %1977 = vmatpush1.bf16.msra.mxu0 0
      %1978 = vmatprep.subr.bf16.mxu0 0
      %1979 = vmatpush1.bf16.msra.mxu0 0
      %1980 = vmatprep.mubr.bf16.mxu0 0
      %1981 = vmatmul.mubr.bf16.gmra.mrb[0].mxu0 %v1943
      %v1982 = vpop.f32.mrb[0].mxu0
      %v1983 = vadd.f32 %v1812, %v1982
      %v1984 = vpop.f32.mrb[0].mxu0
      %v1985 = vadd.f32 %v1814, %v1984
      %v1986 = vpop.f32.mrb[0].mxu0
      %v1987 = vadd.f32 %v1816, %v1986
      %v1988 = vpop.f32.mrb[0].mxu0
      %v1989 = vadd.f32 %v1818, %v1988
      %1990 = vmatprep.mubr.bf16.mxu0 0
      %1991 = vmatmul.mubr.bf16.gmra.mrb[0].mxu0 %v1946
      %v1992 = vpop.f32.mrb[0].mxu0
      %v1993 = vadd.f32 %v1822, %v1992
      %v1994 = vpop.f32.mrb[0].mxu0
      %v1995 = vadd.f32 %v1824, %v1994
      %v1996 = vpop.f32.mrb[0].mxu0
      %v1997 = vadd.f32 %v1826, %v1996
      %v1998 = vpop.f32.mrb[0].mxu0
      %v1999 = vadd.f32 %v1828, %v1998
      %2000 = vdwg.mxu0
      %2001 = vmatprep.subr.bf16.mxu0 %v1511
      %2002 = vmatpush1.bf16.msra.mxu0 %v1510
      %2003 = vmatprep.subr.bf16.mxu0 %v1516
      %2004 = vmatpush1.bf16.msra.mxu0 %v1515
      %2005 = vmatprep.subr.bf16.mxu0 %v1521
      %2006 = vmatpush1.bf16.msra.mxu0 %v1520
      %2007 = vmatprep.subr.bf16.mxu0 %v1526
      %2008 = vmatpush1.bf16.msra.mxu0 %v1525
      %2009 = vmatprep.subr.bf16.mxu0 %v1531
      %2010 = vmatpush1.bf16.msra.mxu0 %v1530
      %2011 = vmatprep.subr.bf16.mxu0 0
      %2012 = vmatpush1.bf16.msra.mxu0 0
      %2013 = vmatprep.subr.bf16.mxu0 0
      %2014 = vmatpush1.bf16.msra.mxu0 0
      %2015 = vmatprep.subr.bf16.mxu0 0
      %2016 = vmatpush1.bf16.msra.mxu0 0
      %2017 = vmatprep.subr.bf16.mxu0 0
      %2018 = vmatpush1.bf16.msra.mxu0 0
      %2019 = vmatprep.subr.bf16.mxu0 0
      %2020 = vmatpush1.bf16.msra.mxu0 0
      %2021 = vmatprep.subr.bf16.mxu0 0
      %2022 = vmatpush1.bf16.msra.mxu0 0
      %2023 = vmatprep.subr.bf16.mxu0 0
      %2024 = vmatpush1.bf16.msra.mxu0 0
      %2025 = vmatprep.subr.bf16.mxu0 0
      %2026 = vmatpush1.bf16.msra.mxu0 0
      %2027 = vmatprep.subr.bf16.mxu0 0
      %2028 = vmatpush1.bf16.msra.mxu0 0
      %2029 = vmatprep.subr.bf16.mxu0 0
      %2030 = vmatpush1.bf16.msra.mxu0 0
      %2031 = vmatprep.subr.bf16.mxu0 0
      %2032 = vmatpush1.bf16.msra.mxu0 0
      %2033 = vmatprep.mubr.bf16.mxu0 0
      %2034 = vmatmul.mubr.bf16.gmra.mrb[0].mxu0 %v1943
      %v2035 = vpop.f32.mrb[0].mxu0
      %v2036 = vadd.f32 %v1865, %v2035
      %v2037 = vpop.f32.mrb[0].mxu0
      %v2038 = vadd.f32 %v1867, %v2037
      %v2039 = vpop.f32.mrb[0].mxu0
      %v2040 = vadd.f32 %v1869, %v2039
      %v2041 = vpop.f32.mrb[0].mxu0
      %v2042 = vadd.f32 %v1871, %v2041
      %2043 = vmatprep.mubr.bf16.mxu0 0
      %2044 = vmatmul.mubr.bf16.gmra.mrb[0].mxu0 %v1946
      %v2045 = vpop.f32.mrb[0].mxu0
      %v2046 = vadd.f32 %v1875, %v2045
      %v2047 = vpop.f32.mrb[0].mxu0
      %v2048 = vadd.f32 %v1877, %v2047
      %v2049 = vpop.f32.mrb[0].mxu0
      %v2050 = vadd.f32 %v1879, %v2049
      %v2051 = vpop.f32.mrb[0].mxu0
      %v2052 = vadd.f32 %v1881, %v2051
      %2053 = vdwg.mxu0
      %2054 = vmatprep.subr.bf16.mxu0 0
      %2055 = vmatpush1.bf16.msra.mxu0 %v1512
      %2056 = vmatprep.subr.bf16.mxu0 0
      %2057 = vmatpush1.bf16.msra.mxu0 %v1517
      %2058 = vmatprep.subr.bf16.mxu0 0
      %2059 = vmatpush1.bf16.msra.mxu0 %v1522
      %2060 = vmatprep.subr.bf16.mxu0 0
      %2061 = vmatpush1.bf16.msra.mxu0 %v1527
      %2062 = vmatprep.subr.bf16.mxu0 0
      %2063 = vmatpush1.bf16.msra.mxu0 %v1532
      %2064 = vmatprep.subr.bf16.mxu0 0
      %2065 = vmatpush1.bf16.msra.mxu0 0
      %2066 = vmatprep.subr.bf16.mxu0 0
      %2067 = vmatpush1.bf16.msra.mxu0 0
      %2068 = vmatprep.subr.bf16.mxu0 0
      %2069 = vmatpush1.bf16.msra.mxu0 0
      %2070 = vmatprep.subr.bf16.mxu0 0
      %2071 = vmatpush1.bf16.msra.mxu0 0
      %2072 = vmatprep.subr.bf16.mxu0 0
      %2073 = vmatpush1.bf16.msra.mxu0 0
      %2074 = vmatprep.subr.bf16.mxu0 0
      %2075 = vmatpush1.bf16.msra.mxu0 0
      %2076 = vmatprep.subr.bf16.mxu0 0
      %2077 = vmatpush1.bf16.msra.mxu0 0
      %2078 = vmatprep.subr.bf16.mxu0 0
      %2079 = vmatpush1.bf16.msra.mxu0 0
      %2080 = vmatprep.subr.bf16.mxu0 0
      %2081 = vmatpush1.bf16.msra.mxu0 0
      %2082 = vmatprep.subr.bf16.mxu0 0
      %2083 = vmatpush1.bf16.msra.mxu0 0
      %2084 = vmatprep.subr.bf16.mxu0 0
      %2085 = vmatpush1.bf16.msra.mxu0 0
      %2086 = vmatprep.mubr.bf16.mxu0 0
      %2087 = vmatmul.mubr.bf16.gmra.mrb[0].mxu0 %v1943
      %v2088 = vpop.f32.mrb[0].mxu0
      %v2089 = vadd.f32 %v1918, %v2088
      %v2090 = vpop.f32.mrb[0].mxu0
      %v2091 = vpop.f32.mrb[0].mxu0
      %v2092 = vadd.f32 %v1921, %v2091
      %v2093 = vpop.f32.mrb[0].mxu0
      %2094 = vmatprep.mubr.bf16.mxu0 0
      %2095 = vmatmul.mubr.bf16.gmra.mrb[0].mxu0 %v1946
      %v2096 = vpop.f32.mrb[0].mxu0
      %v2097 = vadd.f32 %v1926, %v2096
      %v2098 = vpop.f32.mrb[0].mxu0
      %v2099 = vpop.f32.mrb[0].mxu0
      %v2100 = vadd.f32 %v1929, %v2099
      %v2101 = vpop.f32.mrb[0].mxu0
      %2102 = vdwg.mxu0
      %v2103 = vld [vmem:[#allocation3] sm:$0xff]
      %v2104 = vld [vmem:[#allocation3 + $0x8] sm:$0xff]
      %v2105 = vld [vmem:[#allocation3 + $0x10] sm:$0xff]
      %v2106 = vld [vmem:[#allocation3 + $0x18] sm:$0xff]
      %v2107 = vld [vmem:[#allocation3 + $0x20] sm:$0xff]
      %v2108 = vld [vmem:[#allocation3 + $0x28] sm:$0xff]
      %2115 = vrot.lane.b32.xlu0 %v2103, 2
      %v2116 = vpop.permute.xlu0 %2115
      %2117 = vrot.lane.b32.xlu0 %v2104, 2
      %v2118 = vpop.permute.xlu0 %2117
      %2119 = vrot.lane.b32.xlu0 %v2105, 2
      %v2120 = vpop.permute.xlu0 %2119
      %2121 = vrot.lane.b32.xlu0 %v2106, 2
      %v2122 = vpop.permute.xlu0 %2121
      %2123 = vrot.lane.b32.xlu0 %v2107, 2
      %v2124 = vpop.permute.xlu0 %2123
      %2125 = vrot.lane.b32.xlu0 %v2108, 2
      %v2126 = vpop.permute.xlu0 %2125
      %vm2127 = vcmask 15360
      %v2128 = vsel %vm2127, %v2116, %v2118
      %v2129 = vsel %vm2127, %v2118, %v2120
      %v2130 = vsel %vm2127, %v2120, %v2122
      %v2131 = vsel %vm2127, %v2122, %v2124
      %v2132 = vsel %vm2127, %v2124, %v2126
      %2138 = vst [vmem:[#allocation2] sm:$0xff] %v2128
      %2139 = vst [vmem:[#allocation2 + $0x8] sm:$0xff] %v2129
      %2140 = vst [vmem:[#allocation2 + $0x10] sm:$0xff] %v2130
      %2141 = vst [vmem:[#allocation2 + $0x18] sm:$0xff] %v2131
      %2142 = vst [vmem:[#allocation2 + $0x20] sm:$0xff] %v2132
      %v2143 = vld [vmem:[#allocation3] sm:$0xff]
      %v2144 = vld [vmem:[#allocation3 + $0x8] sm:$0xff]
      %v2145 = vld [vmem:[#allocation3 + $0x10] sm:$0xff]
      %v2146 = vld [vmem:[#allocation3 + $0x18] sm:$0xff]
      %v2147 = vld [vmem:[#allocation3 + $0x20] sm:$0xff]
      %v2148 = vld [vmem:[#allocation3 + $0x28] sm:$0xff]
      %2155 = vrot.lane.b32.xlu0 %v2143, 1
      %v2156 = vpop.permute.xlu0 %2155
      %2157 = vrot.lane.b32.xlu0 %v2144, 1
      %v2158 = vpop.permute.xlu0 %2157
      %2159 = vrot.lane.b32.xlu0 %v2145, 1
      %v2160 = vpop.permute.xlu0 %2159
      %2161 = vrot.lane.b32.xlu0 %v2146, 1
      %v2162 = vpop.permute.xlu0 %2161
      %2163 = vrot.lane.b32.xlu0 %v2147, 1
      %v2164 = vpop.permute.xlu0 %2163
      %2165 = vrot.lane.b32.xlu0 %v2148, 1
      %v2166 = vpop.permute.xlu0 %2165
      %v2167 = vsel %vm486, %v2156, %v2158
      %v2168 = vsel %vm486, %v2158, %v2160
      %v2169 = vsel %vm486, %v2160, %v2162
      %v2170 = vsel %vm486, %v2162, %v2164
      %v2171 = vsel %vm486, %v2164, %v2166
      %2177 = vst [vmem:[#allocation2 + $0x28] sm:$0xff] %v2167
      %2178 = vst [vmem:[#allocation2 + $0x30] sm:$0xff] %v2168
      %2179 = vst [vmem:[#allocation2 + $0x38] sm:$0xff] %v2169
      %2180 = vst [vmem:[#allocation2 + $0x40] sm:$0xff] %v2170
      %2181 = vst [vmem:[#allocation2 + $0x48] sm:$0xff] %v2171
      %v2182 = vld [vmem:[#allocation3 + $0x8] sm:$0xff]
      %v2183 = vld [vmem:[#allocation3 + $0x10] sm:$0xff]
      %v2184 = vld [vmem:[#allocation3 + $0x18] sm:$0xff]
      %v2185 = vld [vmem:[#allocation3 + $0x20] sm:$0xff]
      %v2186 = vld [vmem:[#allocation3 + $0x28] sm:$0xff]
      %2187 = vst [vmem:[#allocation2 + $0x50] sm:$0xff] %v2182
      %2188 = vst [vmem:[#allocation2 + $0x58] sm:$0xff] %v2183
      %2189 = vst [vmem:[#allocation2 + $0x60] sm:$0xff] %v2184
      %2190 = vst [vmem:[#allocation2 + $0x68] sm:$0xff] %v2185
      %2191 = vst [vmem:[#allocation2 + $0x70] sm:$0xff] %v2186
      %v2192 = vld [vmem:[#allocation3 + $0x8] sm:$0xff]
      %v2193 = vld [vmem:[#allocation3 + $0x10] sm:$0xff]
      %v2194 = vld [vmem:[#allocation3 + $0x18] sm:$0xff]
      %v2195 = vld [vmem:[#allocation3 + $0x20] sm:$0xff]
      %v2196 = vld [vmem:[#allocation3 + $0x28] sm:$0xff]
      %v2197 = vld [vmem:[#allocation3 + $0x30] sm:$0xff]
      %2204 = vrot.lane.b32.xlu0 %v2192, 127
      %v2205 = vpop.permute.xlu0 %2204
      %2206 = vrot.lane.b32.xlu0 %v2193, 127
      %v2207 = vpop.permute.xlu0 %2206
      %2208 = vrot.lane.b32.xlu0 %v2194, 127
      %v2209 = vpop.permute.xlu0 %2208
      %2210 = vrot.lane.b32.xlu0 %v2195, 127
      %v2211 = vpop.permute.xlu0 %2210
      %2212 = vrot.lane.b32.xlu0 %v2196, 127
      %v2213 = vpop.permute.xlu0 %2212
      %2214 = vrot.lane.b32.xlu0 %v2197, 127
      %v2215 = vpop.permute.xlu0 %2214
      %v2216 = vsel %vm581, %v2205, %v2207
      %v2217 = vsel %vm581, %v2207, %v2209
      %v2218 = vsel %vm581, %v2209, %v2211
      %v2219 = vsel %vm581, %v2211, %v2213
      %v2220 = vsel %vm581, %v2213, %v2215
      %2226 = vst [vmem:[#allocation2 + $0x78] sm:$0xff] %v2216
      %2227 = vst [vmem:[#allocation2 + $0x80] sm:$0xff] %v2217
      %2228 = vst [vmem:[#allocation2 + $0x88] sm:$0xff] %v2218
      %2229 = vst [vmem:[#allocation2 + $0x90] sm:$0xff] %v2219
      %2230 = vst [vmem:[#allocation2 + $0x98] sm:$0xff] %v2220
      %v2231 = vld [vmem:[#allocation3 + $0x8] sm:$0xff]
      %v2232 = vld [vmem:[#allocation3 + $0x10] sm:$0xff]
      %v2233 = vld [vmem:[#allocation3 + $0x18] sm:$0xff]
      %v2234 = vld [vmem:[#allocation3 + $0x20] sm:$0xff]
      %v2235 = vld [vmem:[#allocation3 + $0x28] sm:$0xff]
      %v2236 = vld [vmem:[#allocation3 + $0x30] sm:$0xff]
      %2243 = vrot.lane.b32.xlu0 %v2231, 126
      %v2244 = vpop.permute.xlu0 %2243
      %2245 = vrot.lane.b32.xlu0 %v2232, 126
      %v2246 = vpop.permute.xlu0 %2245
      %2247 = vrot.lane.b32.xlu0 %v2233, 126
      %v2248 = vpop.permute.xlu0 %2247
      %2249 = vrot.lane.b32.xlu0 %v2234, 126
      %v2250 = vpop.permute.xlu0 %2249
      %2251 = vrot.lane.b32.xlu0 %v2235, 126
      %v2252 = vpop.permute.xlu0 %2251
      %2253 = vrot.lane.b32.xlu0 %v2236, 126
      %v2254 = vpop.permute.xlu0 %2253
      %vm2255 = vcmask 1031168
      %v2256 = vsel %vm2255, %v2244, %v2246
      %v2257 = vsel %vm2255, %v2246, %v2248
      %v2258 = vsel %vm2255, %v2248, %v2250
      %v2259 = vsel %vm2255, %v2250, %v2252
      %v2260 = vsel %vm2255, %v2252, %v2254
      %2266 = vst [vmem:[#allocation2 + $0xa0] sm:$0xff] %v2256
      %2267 = vst [vmem:[#allocation2 + $0xa8] sm:$0xff] %v2257
      %2268 = vst [vmem:[#allocation2 + $0xb0] sm:$0xff] %v2258
      %2269 = vst [vmem:[#allocation2 + $0xb8] sm:$0xff] %v2259
      %2270 = vst [vmem:[#allocation2 + $0xc0] sm:$0xff] %v2260
      %s2271 = scalar_lea.vmem %s3, 32
      %v2272 = vld [vmem:[%s2271] sm:$0xf]
      %v2273 = vld [vmem:[%s2271 + $0x4] sm:$0xf]
      %v2274 = vld [vmem:[%s2271 + $0x8] sm:$0xf]
      %v2275 = vld [vmem:[%s2271 + $0xc] sm:$0xf]
      %v2276 = vld [vmem:[#allocation2] sm:$0xff]
      %v2277 = vld [vmem:[#allocation2 + $0x8] sm:$0xff]
      %v2278 = vld [vmem:[#allocation2 + $0x10] sm:$0xff]
      %v2279 = vld [vmem:[#allocation2 + $0x18] sm:$0xff]
      %v2280 = vld [vmem:[#allocation2 + $0x20] sm:$0xff]
      %v2281 = vld [vmem:[#allocation2 + $0x28] sm:$0xff]
      %v2282 = vld [vmem:[#allocation2 + $0x30] sm:$0xff]
      %v2283 = vld [vmem:[#allocation2 + $0x38] sm:$0xff]
      %v2284 = vld [vmem:[#allocation2 + $0x40] sm:$0xff]
      %v2285 = vld [vmem:[#allocation2 + $0x48] sm:$0xff]
      %v2286 = vld [vmem:[#allocation2 + $0x50] sm:$0xff]
      %v2287 = vld [vmem:[#allocation2 + $0x58] sm:$0xff]
      %v2288 = vld [vmem:[#allocation2 + $0x60] sm:$0xff]
      %v2289 = vld [vmem:[#allocation2 + $0x68] sm:$0xff]
      %v2290 = vld [vmem:[#allocation2 + $0x70] sm:$0xff]
      %v2291 = vld [vmem:[#allocation2 + $0x78] sm:$0xff]
      %v2292 = vld [vmem:[#allocation2 + $0x80] sm:$0xff]
      %v2293 = vld [vmem:[#allocation2 + $0x88] sm:$0xff]
      %v2294 = vld [vmem:[#allocation2 + $0x90] sm:$0xff]
      %v2295 = vld [vmem:[#allocation2 + $0x98] sm:$0xff]
      %v2296 = vld [vmem:[#allocation2 + $0xa0] sm:$0xff]
      %v2297 = vld [vmem:[#allocation2 + $0xa8] sm:$0xff]
      %v2298 = vld [vmem:[#allocation2 + $0xb0] sm:$0xff]
      %v2299 = vld [vmem:[#allocation2 + $0xb8] sm:$0xff]
      %v2300 = vld [vmem:[#allocation2 + $0xc0] sm:$0xff]
      %v2305 = vunpack.c.l.b16 %v2272
      %v2306 = vunpack.c.l.b16 %v2273
      %v2307 = vunpack.c.l.b16 %v2274
      %v2308 = vunpack.c.l.b16 %v2275
      %v2309 = vpack.c.b16 %v2306, %v2305
      %v2310 = vpack.c.b16 %v2308, %v2307
      %v2312 = vsel %vm1770, %v2309, 0
      %v2315 = vsel %vm1770, %v2310, 0
      %2317 = vmatprep.subr.bf16.mxu0 %v2277
      %2318 = vmatpush1.bf16.msra.mxu0 %v2276
      %2319 = vmatprep.subr.bf16.mxu0 %v2282
      %2320 = vmatpush1.bf16.msra.mxu0 %v2281
      %2321 = vmatprep.subr.bf16.mxu0 %v2287
      %2322 = vmatpush1.bf16.msra.mxu0 %v2286
      %2323 = vmatprep.subr.bf16.mxu0 %v2292
      %2324 = vmatpush1.bf16.msra.mxu0 %v2291
      %2325 = vmatprep.subr.bf16.mxu0 %v2297
      %2326 = vmatpush1.bf16.msra.mxu0 %v2296
      %2327 = vmatprep.subr.bf16.mxu0 0
      %2328 = vmatpush1.bf16.msra.mxu0 0
      %2329 = vmatprep.subr.bf16.mxu0 0
      %2330 = vmatpush1.bf16.msra.mxu0 0
      %2331 = vmatprep.subr.bf16.mxu0 0
      %2332 = vmatpush1.bf16.msra.mxu0 0
      %2333 = vmatprep.subr.bf16.mxu0 0
      %2334 = vmatpush1.bf16.msra.mxu0 0
      %2335 = vmatprep.subr.bf16.mxu0 0
      %2336 = vmatpush1.bf16.msra.mxu0 0
      %2337 = vmatprep.subr.bf16.mxu0 0
      %2338 = vmatpush1.bf16.msra.mxu0 0
      %2339 = vmatprep.subr.bf16.mxu0 0
      %2340 = vmatpush1.bf16.msra.mxu0 0
      %2341 = vmatprep.subr.bf16.mxu0 0
      %2342 = vmatpush1.bf16.msra.mxu0 0
      %2343 = vmatprep.subr.bf16.mxu0 0
      %2344 = vmatpush1.bf16.msra.mxu0 0
      %2345 = vmatprep.subr.bf16.mxu0 0
      %2346 = vmatpush1.bf16.msra.mxu0 0
      %2347 = vmatprep.subr.bf16.mxu0 0
      %2348 = vmatpush1.bf16.msra.mxu0 0
      %2349 = vmatprep.mubr.bf16.mxu0 0
      %2350 = vmatmul.mubr.bf16.gmra.mrb[0].mxu0 %v2312
      %v2351 = vpop.f32.mrb[0].mxu0
      %v2352 = vadd.f32 0.0, %v2351
      %v2353 = vpop.f32.mrb[0].mxu0
      %v2354 = vadd.f32 0.0, %v2353
      %v2355 = vpop.f32.mrb[0].mxu0
      %v2356 = vadd.f32 0.0, %v2355
      %v2357 = vpop.f32.mrb[0].mxu0
      %v2358 = vadd.f32 0.0, %v2357
      %2359 = vmatprep.mubr.bf16.mxu0 0
      %2360 = vmatmul.mubr.bf16.gmra.mrb[0].mxu0 %v2315
      %v2361 = vpop.f32.mrb[0].mxu0
      %v2362 = vadd.f32 0.0, %v2361
      %v2363 = vpop.f32.mrb[0].mxu0
      %v2364 = vadd.f32 0.0, %v2363
      %v2365 = vpop.f32.mrb[0].mxu0
      %v2366 = vadd.f32 0.0, %v2365
      %v2367 = vpop.f32.mrb[0].mxu0
      %v2368 = vadd.f32 0.0, %v2367
      %2369 = vdwg.mxu0
      %2370 = vmatprep.subr.bf16.mxu0 %v2279
      %2371 = vmatpush1.bf16.msra.mxu0 %v2278
      %2372 = vmatprep.subr.bf16.mxu0 %v2284
      %2373 = vmatpush1.bf16.msra.mxu0 %v2283
      %2374 = vmatprep.subr.bf16.mxu0 %v2289
      %2375 = vmatpush1.bf16.msra.mxu0 %v2288
      %2376 = vmatprep.subr.bf16.mxu0 %v2294
      %2377 = vmatpush1.bf16.msra.mxu0 %v2293
      %2378 = vmatprep.subr.bf16.mxu0 %v2299
      %2379 = vmatpush1.bf16.msra.mxu0 %v2298
      %2380 = vmatprep.subr.bf16.mxu0 0
      %2381 = vmatpush1.bf16.msra.mxu0 0
      %2382 = vmatprep.subr.bf16.mxu0 0
      %2383 = vmatpush1.bf16.msra.mxu0 0
      %2384 = vmatprep.subr.bf16.mxu0 0
      %2385 = vmatpush1.bf16.msra.mxu0 0
      %2386 = vmatprep.subr.bf16.mxu0 0
      %2387 = vmatpush1.bf16.msra.mxu0 0
      %2388 = vmatprep.subr.bf16.mxu0 0
      %2389 = vmatpush1.bf16.msra.mxu0 0
      %2390 = vmatprep.subr.bf16.mxu0 0
      %2391 = vmatpush1.bf16.msra.mxu0 0
      %2392 = vmatprep.subr.bf16.mxu0 0
      %2393 = vmatpush1.bf16.msra.mxu0 0
      %2394 = vmatprep.subr.bf16.mxu0 0
      %2395 = vmatpush1.bf16.msra.mxu0 0
      %2396 = vmatprep.subr.bf16.mxu0 0
      %2397 = vmatpush1.bf16.msra.mxu0 0
      %2398 = vmatprep.subr.bf16.mxu0 0
      %2399 = vmatpush1.bf16.msra.mxu0 0
      %2400 = vmatprep.subr.bf16.mxu0 0
      %2401 = vmatpush1.bf16.msra.mxu0 0
      %2402 = vmatprep.mubr.bf16.mxu0 0
      %2403 = vmatmul.mubr.bf16.gmra.mrb[0].mxu0 %v2312
      %v2404 = vpop.f32.mrb[0].mxu0
      %v2405 = vadd.f32 0.0, %v2404
      %v2406 = vpop.f32.mrb[0].mxu0
      %v2407 = vadd.f32 0.0, %v2406
      %v2408 = vpop.f32.mrb[0].mxu0
      %v2409 = vadd.f32 0.0, %v2408
      %v2410 = vpop.f32.mrb[0].mxu0
      %v2411 = vadd.f32 0.0, %v2410
      %2412 = vmatprep.mubr.bf16.mxu0 0
      %2413 = vmatmul.mubr.bf16.gmra.mrb[0].mxu0 %v2315
      %v2414 = vpop.f32.mrb[0].mxu0
      %v2415 = vadd.f32 0.0, %v2414
      %v2416 = vpop.f32.mrb[0].mxu0
      %v2417 = vadd.f32 0.0, %v2416
      %v2418 = vpop.f32.mrb[0].mxu0
      %v2419 = vadd.f32 0.0, %v2418
      %v2420 = vpop.f32.mrb[0].mxu0
      %v2421 = vadd.f32 0.0, %v2420
      %2422 = vdwg.mxu0
      %2423 = vmatprep.subr.bf16.mxu0 0
      %2424 = vmatpush1.bf16.msra.mxu0 %v2280
      %2425 = vmatprep.subr.bf16.mxu0 0
      %2426 = vmatpush1.bf16.msra.mxu0 %v2285
      %2427 = vmatprep.subr.bf16.mxu0 0
      %2428 = vmatpush1.bf16.msra.mxu0 %v2290
      %2429 = vmatprep.subr.bf16.mxu0 0
      %2430 = vmatpush1.bf16.msra.mxu0 %v2295
      %2431 = vmatprep.subr.bf16.mxu0 0
      %2432 = vmatpush1.bf16.msra.mxu0 %v2300
      %2433 = vmatprep.subr.bf16.mxu0 0
      %2434 = vmatpush1.bf16.msra.mxu0 0
      %2435 = vmatprep.subr.bf16.mxu0 0
      %2436 = vmatpush1.bf16.msra.mxu0 0
      %2437 = vmatprep.subr.bf16.mxu0 0
      %2438 = vmatpush1.bf16.msra.mxu0 0
      %2439 = vmatprep.subr.bf16.mxu0 0
      %2440 = vmatpush1.bf16.msra.mxu0 0
      %2441 = vmatprep.subr.bf16.mxu0 0
      %2442 = vmatpush1.bf16.msra.mxu0 0
      %2443 = vmatprep.subr.bf16.mxu0 0
      %2444 = vmatpush1.bf16.msra.mxu0 0
      %2445 = vmatprep.subr.bf16.mxu0 0
      %2446 = vmatpush1.bf16.msra.mxu0 0
      %2447 = vmatprep.subr.bf16.mxu0 0
      %2448 = vmatpush1.bf16.msra.mxu0 0
      %2449 = vmatprep.subr.bf16.mxu0 0
      %2450 = vmatpush1.bf16.msra.mxu0 0
      %2451 = vmatprep.subr.bf16.mxu0 0
      %2452 = vmatpush1.bf16.msra.mxu0 0
      %2453 = vmatprep.subr.bf16.mxu0 0
      %2454 = vmatpush1.bf16.msra.mxu0 0
      %2455 = vmatprep.mubr.bf16.mxu0 0
      %2456 = vmatmul.mubr.bf16.gmra.mrb[0].mxu0 %v2312
      %v2457 = vpop.f32.mrb[0].mxu0
      %v2458 = vadd.f32 0.0, %v2457
      %v2459 = vpop.f32.mrb[0].mxu0
      %v2460 = vpop.f32.mrb[0].mxu0
      %v2461 = vadd.f32 0.0, %v2460
      %v2462 = vpop.f32.mrb[0].mxu0
      %2463 = vmatprep.mubr.bf16.mxu0 0
      %2464 = vmatmul.mubr.bf16.gmra.mrb[0].mxu0 %v2315
      %v2465 = vpop.f32.mrb[0].mxu0
      %v2466 = vadd.f32 0.0, %v2465
      %v2467 = vpop.f32.mrb[0].mxu0
      %v2468 = vpop.f32.mrb[0].mxu0
      %v2469 = vadd.f32 0.0, %v2468
      %v2470 = vpop.f32.mrb[0].mxu0
      %2471 = vdwg.mxu0
      %v2472 = vadd.f32 %v1983, %v2352
      %v2473 = vadd.f32 %v1985, %v2354
      %v2474 = vadd.f32 %v2036, %v2405
      %v2475 = vadd.f32 %v2038, %v2407
      %v2476 = vadd.f32 %v2089, %v2458
      %v2477 = vadd.f32 %v1987, %v2356
      %v2478 = vadd.f32 %v1989, %v2358
      %v2479 = vadd.f32 %v2040, %v2409
      %v2480 = vadd.f32 %v2042, %v2411
      %v2481 = vadd.f32 %v2092, %v2461
      %v2482 = vadd.f32 %v1993, %v2362
      %v2483 = vadd.f32 %v1995, %v2364
      %v2484 = vadd.f32 %v2046, %v2415
      %v2485 = vadd.f32 %v2048, %v2417
      %v2486 = vadd.f32 %v2097, %v2466
      %v2487 = vadd.f32 %v1997, %v2366
      %v2488 = vadd.f32 %v1999, %v2368
      %v2489 = vadd.f32 %v2050, %v2419
      %v2490 = vadd.f32 %v2052, %v2421
      %v2491 = vadd.f32 %v2100, %v2469
      %v2492 = vld [vmem:[#allocation3 + $0x8] sm:$0xff]
      %v2493 = vld [vmem:[#allocation3 + $0x10] sm:$0xff]
      %v2494 = vld [vmem:[#allocation3 + $0x18] sm:$0xff]
      %v2495 = vld [vmem:[#allocation3 + $0x20] sm:$0xff]
      %v2496 = vld [vmem:[#allocation3 + $0x28] sm:$0xff]
      %v2497 = vld [vmem:[#allocation3 + $0x30] sm:$0xff]
      %2504 = vrot.lane.b32.xlu0 %v2492, 98
      %v2505 = vpop.permute.xlu0 %2504
      %2506 = vrot.lane.b32.xlu0 %v2493, 98
      %v2507 = vpop.permute.xlu0 %2506
      %2508 = vrot.lane.b32.xlu0 %v2494, 98
      %v2509 = vpop.permute.xlu0 %2508
      %2510 = vrot.lane.b32.xlu0 %v2495, 98
      %v2511 = vpop.permute.xlu0 %2510
      %2512 = vrot.lane.b32.xlu0 %v2496, 98
      %v2513 = vpop.permute.xlu0 %2512
      %2514 = vrot.lane.b32.xlu0 %v2497, 98
      %v2515 = vpop.permute.xlu0 %2514
      %vm2516 = vcmask 801792
      %v2517 = vsel %vm2516, %v2505, %v2507
      %v2518 = vsel %vm2516, %v2507, %v2509
      %v2519 = vsel %vm2516, %v2509, %v2511
      %v2520 = vsel %vm2516, %v2511, %v2513
      %v2521 = vsel %vm2516, %v2513, %v2515
      %2527 = vst [vmem:[#allocation2] sm:$0xff] %v2517
      %2528 = vst [vmem:[#allocation2 + $0x8] sm:$0xff] %v2518
      %2529 = vst [vmem:[#allocation2 + $0x10] sm:$0xff] %v2519
      %2530 = vst [vmem:[#allocation2 + $0x18] sm:$0xff] %v2520
      %2531 = vst [vmem:[#allocation2 + $0x20] sm:$0xff] %v2521
      %v2532 = vld [vmem:[#allocation3 + $0x8] sm:$0xff]
      %v2533 = vld [vmem:[#allocation3 + $0x10] sm:$0xff]
      %v2534 = vld [vmem:[#allocation3 + $0x18] sm:$0xff]
      %v2535 = vld [vmem:[#allocation3 + $0x20] sm:$0xff]
      %v2536 = vld [vmem:[#allocation3 + $0x28] sm:$0xff]
      %v2537 = vld [vmem:[#allocation3 + $0x30] sm:$0xff]
      %2544 = vrot.lane.b32.xlu0 %v2532, 97
      %v2545 = vpop.permute.xlu0 %2544
      %2546 = vrot.lane.b32.xlu0 %v2533, 97
      %v2547 = vpop.permute.xlu0 %2546
      %2548 = vrot.lane.b32.xlu0 %v2534, 97
      %v2549 = vpop.permute.xlu0 %2548
      %2550 = vrot.lane.b32.xlu0 %v2535, 97
      %v2551 = vpop.permute.xlu0 %2550
      %2552 = vrot.lane.b32.xlu0 %v2536, 97
      %v2553 = vpop.permute.xlu0 %2552
      %2554 = vrot.lane.b32.xlu0 %v2537, 97
      %v2555 = vpop.permute.xlu0 %2554
      %v2556 = vsel %vm928, %v2545, %v2547
      %v2557 = vsel %vm928, %v2547, %v2549
      %v2558 = vsel %vm928, %v2549, %v2551
      %v2559 = vsel %vm928, %v2551, %v2553
      %v2560 = vsel %vm928, %v2553, %v2555
      %2566 = vst [vmem:[#allocation2 + $0x28] sm:$0xff] %v2556
      %2567 = vst [vmem:[#allocation2 + $0x30] sm:$0xff] %v2557
      %2568 = vst [vmem:[#allocation2 + $0x38] sm:$0xff] %v2558
      %2569 = vst [vmem:[#allocation2 + $0x40] sm:$0xff] %v2559
      %2570 = vst [vmem:[#allocation2 + $0x48] sm:$0xff] %v2560
      %v2571 = vld [vmem:[#allocation3 + $0x8] sm:$0xff]
      %v2572 = vld [vmem:[#allocation3 + $0x10] sm:$0xff]
      %v2573 = vld [vmem:[#allocation3 + $0x18] sm:$0xff]
      %v2574 = vld [vmem:[#allocation3 + $0x20] sm:$0xff]
      %v2575 = vld [vmem:[#allocation3 + $0x28] sm:$0xff]
      %v2576 = vld [vmem:[#allocation3 + $0x30] sm:$0xff]
      %2583 = vrot.lane.b32.xlu0 %v2571, 96
      %v2584 = vpop.permute.xlu0 %2583
      %2585 = vrot.lane.b32.xlu0 %v2572, 96
      %v2586 = vpop.permute.xlu0 %2585
      %2587 = vrot.lane.b32.xlu0 %v2573, 96
      %v2588 = vpop.permute.xlu0 %2587
      %2589 = vrot.lane.b32.xlu0 %v2574, 96
      %v2590 = vpop.permute.xlu0 %2589
      %2591 = vrot.lane.b32.xlu0 %v2575, 96
      %v2592 = vpop.permute.xlu0 %2591
      %2593 = vrot.lane.b32.xlu0 %v2576, 96
      %v2594 = vpop.permute.xlu0 %2593
      %v2595 = vsel %vm986, %v2584, %v2586
      %v2596 = vsel %vm986, %v2586, %v2588
      %v2597 = vsel %vm986, %v2588, %v2590
      %v2598 = vsel %vm986, %v2590, %v2592
      %v2599 = vsel %vm986, %v2592, %v2594
      %2605 = vst [vmem:[#allocation2 + $0x50] sm:$0xff] %v2595
      %2606 = vst [vmem:[#allocation2 + $0x58] sm:$0xff] %v2596
      %2607 = vst [vmem:[#allocation2 + $0x60] sm:$0xff] %v2597
      %2608 = vst [vmem:[#allocation2 + $0x68] sm:$0xff] %v2598
      %2609 = vst [vmem:[#allocation2 + $0x70] sm:$0xff] %v2599
      %v2610 = vld [vmem:[#allocation3 + $0x8] sm:$0xff]
      %v2611 = vld [vmem:[#allocation3 + $0x10] sm:$0xff]
      %v2612 = vld [vmem:[#allocation3 + $0x18] sm:$0xff]
      %v2613 = vld [vmem:[#allocation3 + $0x20] sm:$0xff]
      %v2614 = vld [vmem:[#allocation3 + $0x28] sm:$0xff]
      %v2615 = vld [vmem:[#allocation3 + $0x30] sm:$0xff]
      %2622 = vrot.lane.b32.xlu0 %v2610, 95
      %v2623 = vpop.permute.xlu0 %2622
      %2624 = vrot.lane.b32.xlu0 %v2611, 95
      %v2625 = vpop.permute.xlu0 %2624
      %2626 = vrot.lane.b32.xlu0 %v2612, 95
      %v2627 = vpop.permute.xlu0 %2626
      %2628 = vrot.lane.b32.xlu0 %v2613, 95
      %v2629 = vpop.permute.xlu0 %2628
      %2630 = vrot.lane.b32.xlu0 %v2614, 95
      %v2631 = vpop.permute.xlu0 %2630
      %2632 = vrot.lane.b32.xlu0 %v2615, 95
      %v2633 = vpop.permute.xlu0 %2632
      %v2634 = vsel %vm1044, %v2623, %v2625
      %v2635 = vsel %vm1044, %v2625, %v2627
      %v2636 = vsel %vm1044, %v2627, %v2629
      %v2637 = vsel %vm1044, %v2629, %v2631
      %v2638 = vsel %vm1044, %v2631, %v2633
      %2644 = vst [vmem:[#allocation2 + $0x78] sm:$0xff] %v2634
      %2645 = vst [vmem:[#allocation2 + $0x80] sm:$0xff] %v2635
      %2646 = vst [vmem:[#allocation2 + $0x88] sm:$0xff] %v2636
      %2647 = vst [vmem:[#allocation2 + $0x90] sm:$0xff] %v2637
      %2648 = vst [vmem:[#allocation2 + $0x98] sm:$0xff] %v2638
      %v2649 = vld [vmem:[#allocation3 + $0x8] sm:$0xff]
      %v2650 = vld [vmem:[#allocation3 + $0x10] sm:$0xff]
      %v2651 = vld [vmem:[#allocation3 + $0x18] sm:$0xff]
      %v2652 = vld [vmem:[#allocation3 + $0x20] sm:$0xff]
      %v2653 = vld [vmem:[#allocation3 + $0x28] sm:$0xff]
      %v2654 = vld [vmem:[#allocation3 + $0x30] sm:$0xff]
      %2661 = vrot.lane.b32.xlu0 %v2649, 94
      %v2662 = vpop.permute.xlu0 %2661
      %2663 = vrot.lane.b32.xlu0 %v2650, 94
      %v2664 = vpop.permute.xlu0 %2663
      %2665 = vrot.lane.b32.xlu0 %v2651, 94
      %v2666 = vpop.permute.xlu0 %2665
      %2667 = vrot.lane.b32.xlu0 %v2652, 94
      %v2668 = vpop.permute.xlu0 %2667
      %2669 = vrot.lane.b32.xlu0 %v2653, 94
      %v2670 = vpop.permute.xlu0 %2669
      %2671 = vrot.lane.b32.xlu0 %v2654, 94
      %v2672 = vpop.permute.xlu0 %2671
      %vm2673 = vcmask 769024
      %v2674 = vsel %vm2673, %v2662, %v2664
      %v2675 = vsel %vm2673, %v2664, %v2666
      %v2676 = vsel %vm2673, %v2666, %v2668
      %v2677 = vsel %vm2673, %v2668, %v2670
      %v2678 = vsel %vm2673, %v2670, %v2672
      %2684 = vst [vmem:[#allocation2 + $0xa0] sm:$0xff] %v2674
      %2685 = vst [vmem:[#allocation2 + $0xa8] sm:$0xff] %v2675
      %2686 = vst [vmem:[#allocation2 + $0xb0] sm:$0xff] %v2676
      %2687 = vst [vmem:[#allocation2 + $0xb8] sm:$0xff] %v2677
      %2688 = vst [vmem:[#allocation2 + $0xc0] sm:$0xff] %v2678
      %s2689 = scalar_lea.vmem %s3, 48
      %v2690 = vld [vmem:[%s2689] sm:$0xf]
      %v2691 = vld [vmem:[%s2689 + $0x4] sm:$0xf]
      %v2692 = vld [vmem:[%s2689 + $0x8] sm:$0xf]
      %v2693 = vld [vmem:[%s2689 + $0xc] sm:$0xf]
      %v2694 = vld [vmem:[#allocation2] sm:$0xff]
      %v2695 = vld [vmem:[#allocation2 + $0x8] sm:$0xff]
      %v2696 = vld [vmem:[#allocation2 + $0x10] sm:$0xff]
      %v2697 = vld [vmem:[#allocation2 + $0x18] sm:$0xff]
      %v2698 = vld [vmem:[#allocation2 + $0x20] sm:$0xff]
      %v2699 = vld [vmem:[#allocation2 + $0x28] sm:$0xff]
      %v2700 = vld [vmem:[#allocation2 + $0x30] sm:$0xff]
      %v2701 = vld [vmem:[#allocation2 + $0x38] sm:$0xff]
      %v2702 = vld [vmem:[#allocation2 + $0x40] sm:$0xff]
      %v2703 = vld [vmem:[#allocation2 + $0x48] sm:$0xff]
      %v2704 = vld [vmem:[#allocation2 + $0x50] sm:$0xff]
      %v2705 = vld [vmem:[#allocation2 + $0x58] sm:$0xff]
      %v2706 = vld [vmem:[#allocation2 + $0x60] sm:$0xff]
      %v2707 = vld [vmem:[#allocation2 + $0x68] sm:$0xff]
      %v2708 = vld [vmem:[#allocation2 + $0x70] sm:$0xff]
      %v2709 = vld [vmem:[#allocation2 + $0x78] sm:$0xff]
      %v2710 = vld [vmem:[#allocation2 + $0x80] sm:$0xff]
      %v2711 = vld [vmem:[#allocation2 + $0x88] sm:$0xff]
      %v2712 = vld [vmem:[#allocation2 + $0x90] sm:$0xff]
      %v2713 = vld [vmem:[#allocation2 + $0x98] sm:$0xff]
      %v2714 = vld [vmem:[#allocation2 + $0xa0] sm:$0xff]
      %v2715 = vld [vmem:[#allocation2 + $0xa8] sm:$0xff]
      %v2716 = vld [vmem:[#allocation2 + $0xb0] sm:$0xff]
      %v2717 = vld [vmem:[#allocation2 + $0xb8] sm:$0xff]
      %v2718 = vld [vmem:[#allocation2 + $0xc0] sm:$0xff]
      %v2723 = vunpack.c.l.b16 %v2690
      %v2724 = vunpack.c.l.b16 %v2691
      %v2725 = vunpack.c.l.b16 %v2692
      %v2726 = vunpack.c.l.b16 %v2693
      %v2727 = vpack.c.b16 %v2724, %v2723
      %v2728 = vpack.c.b16 %v2726, %v2725
      %v2730 = vsel %vm1770, %v2727, 0
      %v2733 = vsel %vm1770, %v2728, 0
      %2735 = vmatprep.subr.bf16.mxu0 %v2695
      %2736 = vmatpush1.bf16.msra.mxu0 %v2694
      %2737 = vmatprep.subr.bf16.mxu0 %v2700
      %2738 = vmatpush1.bf16.msra.mxu0 %v2699
      %2739 = vmatprep.subr.bf16.mxu0 %v2705
      %2740 = vmatpush1.bf16.msra.mxu0 %v2704
      %2741 = vmatprep.subr.bf16.mxu0 %v2710
      %2742 = vmatpush1.bf16.msra.mxu0 %v2709
      %2743 = vmatprep.subr.bf16.mxu0 %v2715
      %2744 = vmatpush1.bf16.msra.mxu0 %v2714
      %2745 = vmatprep.subr.bf16.mxu0 0
      %2746 = vmatpush1.bf16.msra.mxu0 0
      %2747 = vmatprep.subr.bf16.mxu0 0
      %2748 = vmatpush1.bf16.msra.mxu0 0
      %2749 = vmatprep.subr.bf16.mxu0 0
      %2750 = vmatpush1.bf16.msra.mxu0 0
      %2751 = vmatprep.subr.bf16.mxu0 0
      %2752 = vmatpush1.bf16.msra.mxu0 0
      %2753 = vmatprep.subr.bf16.mxu0 0
      %2754 = vmatpush1.bf16.msra.mxu0 0
      %2755 = vmatprep.subr.bf16.mxu0 0
      %2756 = vmatpush1.bf16.msra.mxu0 0
      %2757 = vmatprep.subr.bf16.mxu0 0
      %2758 = vmatpush1.bf16.msra.mxu0 0
      %2759 = vmatprep.subr.bf16.mxu0 0
      %2760 = vmatpush1.bf16.msra.mxu0 0
      %2761 = vmatprep.subr.bf16.mxu0 0
      %2762 = vmatpush1.bf16.msra.mxu0 0
      %2763 = vmatprep.subr.bf16.mxu0 0
      %2764 = vmatpush1.bf16.msra.mxu0 0
      %2765 = vmatprep.subr.bf16.mxu0 0
      %2766 = vmatpush1.bf16.msra.mxu0 0
      %2767 = vmatprep.mubr.bf16.mxu0 0
      %2768 = vmatmul.mubr.bf16.gmra.mrb[0].mxu0 %v2730
      %v2769 = vpop.f32.mrb[0].mxu0
      %v2770 = vadd.f32 0.0, %v2769
      %v2771 = vpop.f32.mrb[0].mxu0
      %v2772 = vadd.f32 0.0, %v2771
      %v2773 = vpop.f32.mrb[0].mxu0
      %v2774 = vadd.f32 0.0, %v2773
      %v2775 = vpop.f32.mrb[0].mxu0
      %v2776 = vadd.f32 0.0, %v2775
      %2777 = vmatprep.mubr.bf16.mxu0 0
      %2778 = vmatmul.mubr.bf16.gmra.mrb[0].mxu0 %v2733
      %v2779 = vpop.f32.mrb[0].mxu0
      %v2780 = vadd.f32 0.0, %v2779
      %v2781 = vpop.f32.mrb[0].mxu0
      %v2782 = vadd.f32 0.0, %v2781
      %v2783 = vpop.f32.mrb[0].mxu0
      %v2784 = vadd.f32 0.0, %v2783
      %v2785 = vpop.f32.mrb[0].mxu0
      %v2786 = vadd.f32 0.0, %v2785
      %2787 = vdwg.mxu0
      %2788 = vmatprep.subr.bf16.mxu0 %v2697
      %2789 = vmatpush1.bf16.msra.mxu0 %v2696
      %2790 = vmatprep.subr.bf16.mxu0 %v2702
      %2791 = vmatpush1.bf16.msra.mxu0 %v2701
      %2792 = vmatprep.subr.bf16.mxu0 %v2707
      %2793 = vmatpush1.bf16.msra.mxu0 %v2706
      %2794 = vmatprep.subr.bf16.mxu0 %v2712
      %2795 = vmatpush1.bf16.msra.mxu0 %v2711
      %2796 = vmatprep.subr.bf16.mxu0 %v2717
      %2797 = vmatpush1.bf16.msra.mxu0 %v2716
      %2798 = vmatprep.subr.bf16.mxu0 0
      %2799 = vmatpush1.bf16.msra.mxu0 0
      %2800 = vmatprep.subr.bf16.mxu0 0
      %2801 = vmatpush1.bf16.msra.mxu0 0
      %2802 = vmatprep.subr.bf16.mxu0 0
      %2803 = vmatpush1.bf16.msra.mxu0 0
      %2804 = vmatprep.subr.bf16.mxu0 0
      %2805 = vmatpush1.bf16.msra.mxu0 0
      %2806 = vmatprep.subr.bf16.mxu0 0
      %2807 = vmatpush1.bf16.msra.mxu0 0
      %2808 = vmatprep.subr.bf16.mxu0 0
      %2809 = vmatpush1.bf16.msra.mxu0 0
      %2810 = vmatprep.subr.bf16.mxu0 0
      %2811 = vmatpush1.bf16.msra.mxu0 0
      %2812 = vmatprep.subr.bf16.mxu0 0
      %2813 = vmatpush1.bf16.msra.mxu0 0
      %2814 = vmatprep.subr.bf16.mxu0 0
      %2815 = vmatpush1.bf16.msra.mxu0 0
      %2816 = vmatprep.subr.bf16.mxu0 0
      %2817 = vmatpush1.bf16.msra.mxu0 0
      %2818 = vmatprep.subr.bf16.mxu0 0
      %2819 = vmatpush1.bf16.msra.mxu0 0
      %2820 = vmatprep.mubr.bf16.mxu0 0
      %2821 = vmatmul.mubr.bf16.gmra.mrb[0].mxu0 %v2730
      %v2822 = vpop.f32.mrb[0].mxu0
      %v2823 = vadd.f32 0.0, %v2822
      %v2824 = vpop.f32.mrb[0].mxu0
      %v2825 = vadd.f32 0.0, %v2824
      %v2826 = vpop.f32.mrb[0].mxu0
      %v2827 = vadd.f32 0.0, %v2826
      %v2828 = vpop.f32.mrb[0].mxu0
      %v2829 = vadd.f32 0.0, %v2828
      %2830 = vmatprep.mubr.bf16.mxu0 0
      %2831 = vmatmul.mubr.bf16.gmra.mrb[0].mxu0 %v2733
      %v2832 = vpop.f32.mrb[0].mxu0
      %v2833 = vadd.f32 0.0, %v2832
      %v2834 = vpop.f32.mrb[0].mxu0
      %v2835 = vadd.f32 0.0, %v2834
      %v2836 = vpop.f32.mrb[0].mxu0
      %v2837 = vadd.f32 0.0, %v2836
      %v2838 = vpop.f32.mrb[0].mxu0
      %v2839 = vadd.f32 0.0, %v2838
      %2840 = vdwg.mxu0
      %2841 = vmatprep.subr.bf16.mxu0 0
      %2842 = vmatpush1.bf16.msra.mxu0 %v2698
      %2843 = vmatprep.subr.bf16.mxu0 0
      %2844 = vmatpush1.bf16.msra.mxu0 %v2703
      %2845 = vmatprep.subr.bf16.mxu0 0
      %2846 = vmatpush1.bf16.msra.mxu0 %v2708
      %2847 = vmatprep.subr.bf16.mxu0 0
      %2848 = vmatpush1.bf16.msra.mxu0 %v2713
      %2849 = vmatprep.subr.bf16.mxu0 0
      %2850 = vmatpush1.bf16.msra.mxu0 %v2718
      %2851 = vmatprep.subr.bf16.mxu0 0
      %2852 = vmatpush1.bf16.msra.mxu0 0
      %2853 = vmatprep.subr.bf16.mxu0 0
      %2854 = vmatpush1.bf16.msra.mxu0 0
      %2855 = vmatprep.subr.bf16.mxu0 0
      %2856 = vmatpush1.bf16.msra.mxu0 0
      %2857 = vmatprep.subr.bf16.mxu0 0
      %2858 = vmatpush1.bf16.msra.mxu0 0
      %2859 = vmatprep.subr.bf16.mxu0 0
      %2860 = vmatpush1.bf16.msra.mxu0 0
      %2861 = vmatprep.subr.bf16.mxu0 0
      %2862 = vmatpush1.bf16.msra.mxu0 0
      %2863 = vmatprep.subr.bf16.mxu0 0
      %2864 = vmatpush1.bf16.msra.mxu0 0
      %2865 = vmatprep.subr.bf16.mxu0 0
      %2866 = vmatpush1.bf16.msra.mxu0 0
      %2867 = vmatprep.subr.bf16.mxu0 0
      %2868 = vmatpush1.bf16.msra.mxu0 0
      %2869 = vmatprep.subr.bf16.mxu0 0
      %2870 = vmatpush1.bf16.msra.mxu0 0
      %2871 = vmatprep.subr.bf16.mxu0 0
      %2872 = vmatpush1.bf16.msra.mxu0 0
      %2873 = vmatprep.mubr.bf16.mxu0 0
      %2874 = vmatmul.mubr.bf16.gmra.mrb[0].mxu0 %v2730
      %v2875 = vpop.f32.mrb[0].mxu0
      %v2876 = vadd.f32 0.0, %v2875
      %v2877 = vpop.f32.mrb[0].mxu0
      %v2878 = vpop.f32.mrb[0].mxu0
      %v2879 = vadd.f32 0.0, %v2878
      %v2880 = vpop.f32.mrb[0].mxu0
      %2881 = vmatprep.mubr.bf16.mxu0 0
      %2882 = vmatmul.mubr.bf16.gmra.mrb[0].mxu0 %v2733
      %v2883 = vpop.f32.mrb[0].mxu0
      %v2884 = vadd.f32 0.0, %v2883
      %v2885 = vpop.f32.mrb[0].mxu0
      %v2886 = vpop.f32.mrb[0].mxu0
      %v2887 = vadd.f32 0.0, %v2886
      %v2888 = vpop.f32.mrb[0].mxu0
      %2889 = vdwg.mxu0
      %v2890 = vadd.f32 %v2472, %v2770
      %v2891 = vadd.f32 %v2473, %v2772
      %v2892 = vadd.f32 %v2474, %v2823
      %v2893 = vadd.f32 %v2475, %v2825
      %v2894 = vadd.f32 %v2476, %v2876
      %v2895 = vadd.f32 %v2477, %v2774
      %v2896 = vadd.f32 %v2478, %v2776
      %v2897 = vadd.f32 %v2479, %v2827
      %v2898 = vadd.f32 %v2480, %v2829
      %v2899 = vadd.f32 %v2481, %v2879
      %v2900 = vadd.f32 %v2482, %v2780
      %v2901 = vadd.f32 %v2483, %v2782
      %v2902 = vadd.f32 %v2484, %v2833
      %v2903 = vadd.f32 %v2485, %v2835
      %v2904 = vadd.f32 %v2486, %v2884
      %v2905 = vadd.f32 %v2487, %v2784
      %v2906 = vadd.f32 %v2488, %v2786
      %v2907 = vadd.f32 %v2489, %v2837
      %v2908 = vadd.f32 %v2490, %v2839
      %v2909 = vadd.f32 %v2491, %v2887
      %v2910 = vld [vmem:[#allocation3 + $0x8] sm:$0xff]
      %v2911 = vld [vmem:[#allocation3 + $0x10] sm:$0xff]
      %v2912 = vld [vmem:[#allocation3 + $0x18] sm:$0xff]
      %v2913 = vld [vmem:[#allocation3 + $0x20] sm:$0xff]
      %v2914 = vld [vmem:[#allocation3 + $0x28] sm:$0xff]
      %v2915 = vld [vmem:[#allocation3 + $0x30] sm:$0xff]
      %2922 = vrot.lane.b32.xlu0 %v2910, 66
      %v2923 = vpop.permute.xlu0 %2922
      %2924 = vrot.lane.b32.xlu0 %v2911, 66
      %v2925 = vpop.permute.xlu0 %2924
      %2926 = vrot.lane.b32.xlu0 %v2912, 66
      %v2927 = vpop.permute.xlu0 %2926
      %2928 = vrot.lane.b32.xlu0 %v2913, 66
      %v2929 = vpop.permute.xlu0 %2928
      %2930 = vrot.lane.b32.xlu0 %v2914, 66
      %v2931 = vpop.permute.xlu0 %2930
      %2932 = vrot.lane.b32.xlu0 %v2915, 66
      %v2933 = vpop.permute.xlu0 %2932
      %v2934 = vsel %vm1328, %v2923, %v2925
      %v2935 = vsel %vm1328, %v2925, %v2927
      %v2936 = vsel %vm1328, %v2927, %v2929
      %v2937 = vsel %vm1328, %v2929, %v2931
      %v2938 = vsel %vm1328, %v2931, %v2933
      %2944 = vst [vmem:[#allocation2] sm:$0xff] %v2934
      %2945 = vst [vmem:[#allocation2 + $0x8] sm:$0xff] %v2935
      %2946 = vst [vmem:[#allocation2 + $0x10] sm:$0xff] %v2936
      %2947 = vst [vmem:[#allocation2 + $0x18] sm:$0xff] %v2937
      %2948 = vst [vmem:[#allocation2 + $0x20] sm:$0xff] %v2938
      %v2949 = vld [vmem:[#allocation3 + $0x8] sm:$0xff]
      %v2950 = vld [vmem:[#allocation3 + $0x10] sm:$0xff]
      %v2951 = vld [vmem:[#allocation3 + $0x18] sm:$0xff]
      %v2952 = vld [vmem:[#allocation3 + $0x20] sm:$0xff]
      %v2953 = vld [vmem:[#allocation3 + $0x28] sm:$0xff]
      %v2954 = vld [vmem:[#allocation3 + $0x30] sm:$0xff]
      %2961 = vrot.lane.b32.xlu0 %v2949, 65
      %v2962 = vpop.permute.xlu0 %2961
      %2963 = vrot.lane.b32.xlu0 %v2950, 65
      %v2964 = vpop.permute.xlu0 %2963
      %2965 = vrot.lane.b32.xlu0 %v2951, 65
      %v2966 = vpop.permute.xlu0 %2965
      %2967 = vrot.lane.b32.xlu0 %v2952, 65
      %v2968 = vpop.permute.xlu0 %2967
      %2969 = vrot.lane.b32.xlu0 %v2953, 65
      %v2970 = vpop.permute.xlu0 %2969
      %2971 = vrot.lane.b32.xlu0 %v2954, 65
      %v2972 = vpop.permute.xlu0 %2971
      %v2973 = vsel %vm1368, %v2962, %v2964
      %v2974 = vsel %vm1368, %v2964, %v2966
      %v2975 = vsel %vm1368, %v2966, %v2968
      %v2976 = vsel %vm1368, %v2968, %v2970
      %v2977 = vsel %vm1368, %v2970, %v2972
      %2983 = vst [vmem:[#allocation2 + $0x28] sm:$0xff] %v2973
      %2984 = vst [vmem:[#allocation2 + $0x30] sm:$0xff] %v2974
      %2985 = vst [vmem:[#allocation2 + $0x38] sm:$0xff] %v2975
      %2986 = vst [vmem:[#allocation2 + $0x40] sm:$0xff] %v2976
      %2987 = vst [vmem:[#allocation2 + $0x48] sm:$0xff] %v2977
      %v2988 = vld [vmem:[#allocation3 + $0x8] sm:$0xff]
      %v2989 = vld [vmem:[#allocation3 + $0x10] sm:$0xff]
      %v2990 = vld [vmem:[#allocation3 + $0x18] sm:$0xff]
      %v2991 = vld [vmem:[#allocation3 + $0x20] sm:$0xff]
      %v2992 = vld [vmem:[#allocation3 + $0x28] sm:$0xff]
      %v2993 = vld [vmem:[#allocation3 + $0x30] sm:$0xff]
      %3000 = vrot.lane.b32.xlu0 %v2988, 64
      %v3001 = vpop.permute.xlu0 %3000
      %3002 = vrot.lane.b32.xlu0 %v2989, 64
      %v3003 = vpop.permute.xlu0 %3002
      %3004 = vrot.lane.b32.xlu0 %v2990, 64
      %v3005 = vpop.permute.xlu0 %3004
      %3006 = vrot.lane.b32.xlu0 %v2991, 64
      %v3007 = vpop.permute.xlu0 %3006
      %3008 = vrot.lane.b32.xlu0 %v2992, 64
      %v3009 = vpop.permute.xlu0 %3008
      %3010 = vrot.lane.b32.xlu0 %v2993, 64
      %v3011 = vpop.permute.xlu0 %3010
      %v3012 = vsel %vm1408, %v3001, %v3003
      %v3013 = vsel %vm1408, %v3003, %v3005
      %v3014 = vsel %vm1408, %v3005, %v3007
      %v3015 = vsel %vm1408, %v3007, %v3009
      %v3016 = vsel %vm1408, %v3009, %v3011
      %3022 = vst [vmem:[#allocation2 + $0x50] sm:$0xff] %v3012
      %3023 = vst [vmem:[#allocation2 + $0x58] sm:$0xff] %v3013
      %3024 = vst [vmem:[#allocation2 + $0x60] sm:$0xff] %v3014
      %3025 = vst [vmem:[#allocation2 + $0x68] sm:$0xff] %v3015
      %3026 = vst [vmem:[#allocation2 + $0x70] sm:$0xff] %v3016
      %v3027 = vld [vmem:[#allocation3 + $0x8] sm:$0xff]
      %v3028 = vld [vmem:[#allocation3 + $0x10] sm:$0xff]
      %v3029 = vld [vmem:[#allocation3 + $0x18] sm:$0xff]
      %v3030 = vld [vmem:[#allocation3 + $0x20] sm:$0xff]
      %v3031 = vld [vmem:[#allocation3 + $0x28] sm:$0xff]
      %v3032 = vld [vmem:[#allocation3 + $0x30] sm:$0xff]
      %3039 = vrot.lane.b32.xlu0 %v3027, 63
      %v3040 = vpop.permute.xlu0 %3039
      %3041 = vrot.lane.b32.xlu0 %v3028, 63
      %v3042 = vpop.permute.xlu0 %3041
      %3043 = vrot.lane.b32.xlu0 %v3029, 63
      %v3044 = vpop.permute.xlu0 %3043
      %3045 = vrot.lane.b32.xlu0 %v3030, 63
      %v3046 = vpop.permute.xlu0 %3045
      %3047 = vrot.lane.b32.xlu0 %v3031, 63
      %v3048 = vpop.permute.xlu0 %3047
      %3049 = vrot.lane.b32.xlu0 %v3032, 63
      %v3050 = vpop.permute.xlu0 %3049
      %v3051 = vsel %vm1448, %v3040, %v3042
      %v3052 = vsel %vm1448, %v3042, %v3044
      %v3053 = vsel %vm1448, %v3044, %v3046
      %v3054 = vsel %vm1448, %v3046, %v3048
      %v3055 = vsel %vm1448, %v3048, %v3050
      %3061 = vst [vmem:[#allocation2 + $0x78] sm:$0xff] %v3051
      %3062 = vst [vmem:[#allocation2 + $0x80] sm:$0xff] %v3052
      %3063 = vst [vmem:[#allocation2 + $0x88] sm:$0xff] %v3053
      %3064 = vst [vmem:[#allocation2 + $0x90] sm:$0xff] %v3054
      %3065 = vst [vmem:[#allocation2 + $0x98] sm:$0xff] %v3055
      %v3066 = vld [vmem:[#allocation3 + $0x8] sm:$0xff]
      %v3067 = vld [vmem:[#allocation3 + $0x10] sm:$0xff]
      %v3068 = vld [vmem:[#allocation3 + $0x18] sm:$0xff]
      %v3069 = vld [vmem:[#allocation3 + $0x20] sm:$0xff]
      %v3070 = vld [vmem:[#allocation3 + $0x28] sm:$0xff]
      %v3071 = vld [vmem:[#allocation3 + $0x30] sm:$0xff]
      %3078 = vrot.lane.b32.xlu0 %v3066, 62
      %v3079 = vpop.permute.xlu0 %3078
      %3080 = vrot.lane.b32.xlu0 %v3067, 62
      %v3081 = vpop.permute.xlu0 %3080
      %3082 = vrot.lane.b32.xlu0 %v3068, 62
      %v3083 = vpop.permute.xlu0 %3082
      %3084 = vrot.lane.b32.xlu0 %v3069, 62
      %v3085 = vpop.permute.xlu0 %3084
      %3086 = vrot.lane.b32.xlu0 %v3070, 62
      %v3087 = vpop.permute.xlu0 %3086
      %3088 = vrot.lane.b32.xlu0 %v3071, 62
      %v3089 = vpop.permute.xlu0 %3088
      %v3090 = vsel %vm1488, %v3079, %v3081
      %v3091 = vsel %vm1488, %v3081, %v3083
      %v3092 = vsel %vm1488, %v3083, %v3085
      %v3093 = vsel %vm1488, %v3085, %v3087
      %v3094 = vsel %vm1488, %v3087, %v3089
      %3100 = vst [vmem:[#allocation2 + $0xa0] sm:$0xff] %v3090
      %3101 = vst [vmem:[#allocation2 + $0xa8] sm:$0xff] %v3091
      %3102 = vst [vmem:[#allocation2 + $0xb0] sm:$0xff] %v3092
      %3103 = vst [vmem:[#allocation2 + $0xb8] sm:$0xff] %v3093
      %3104 = vst [vmem:[#allocation2 + $0xc0] sm:$0xff] %v3094
      %s3105 = scalar_lea.vmem %s3, 64
      %v3106 = vld [vmem:[%s3105] sm:$0xf]
      %v3107 = vld [vmem:[%s3105 + $0x4] sm:$0xf]
      %v3108 = vld [vmem:[%s3105 + $0x8] sm:$0xf]
      %v3109 = vld [vmem:[%s3105 + $0xc] sm:$0xf]
      %v3110 = vld [vmem:[#allocation2] sm:$0xff]
      %v3111 = vld [vmem:[#allocation2 + $0x8] sm:$0xff]
      %v3112 = vld [vmem:[#allocation2 + $0x10] sm:$0xff]
      %v3113 = vld [vmem:[#allocation2 + $0x18] sm:$0xff]
      %v3114 = vld [vmem:[#allocation2 + $0x20] sm:$0xff]
      %v3115 = vld [vmem:[#allocation2 + $0x28] sm:$0xff]
      %v3116 = vld [vmem:[#allocation2 + $0x30] sm:$0xff]
      %v3117 = vld [vmem:[#allocation2 + $0x38] sm:$0xff]
      %v3118 = vld [vmem:[#allocation2 + $0x40] sm:$0xff]
      %v3119 = vld [vmem:[#allocation2 + $0x48] sm:$0xff]
      %v3120 = vld [vmem:[#allocation2 + $0x50] sm:$0xff]
      %v3121 = vld [vmem:[#allocation2 + $0x58] sm:$0xff]
      %v3122 = vld [vmem:[#allocation2 + $0x60] sm:$0xff]
      %v3123 = vld [vmem:[#allocation2 + $0x68] sm:$0xff]
      %v3124 = vld [vmem:[#allocation2 + $0x70] sm:$0xff]
      %v3125 = vld [vmem:[#allocation2 + $0x78] sm:$0xff]
      %v3126 = vld [vmem:[#allocation2 + $0x80] sm:$0xff]
      %v3127 = vld [vmem:[#allocation2 + $0x88] sm:$0xff]
      %v3128 = vld [vmem:[#allocation2 + $0x90] sm:$0xff]
      %v3129 = vld [vmem:[#allocation2 + $0x98] sm:$0xff]
      %v3130 = vld [vmem:[#allocation2 + $0xa0] sm:$0xff]
      %v3131 = vld [vmem:[#allocation2 + $0xa8] sm:$0xff]
      %v3132 = vld [vmem:[#allocation2 + $0xb0] sm:$0xff]
      %v3133 = vld [vmem:[#allocation2 + $0xb8] sm:$0xff]
      %v3134 = vld [vmem:[#allocation2 + $0xc0] sm:$0xff]
      %v3139 = vunpack.c.l.b16 %v3106
      %v3140 = vunpack.c.l.b16 %v3107
      %v3141 = vunpack.c.l.b16 %v3108
      %v3142 = vunpack.c.l.b16 %v3109
      %v3143 = vpack.c.b16 %v3140, %v3139
      %v3144 = vpack.c.b16 %v3142, %v3141
      %v3146 = vsel %vm1770, %v3143, 0
      %v3149 = vsel %vm1770, %v3144, 0
      %3151 = vmatprep.subr.bf16.mxu0 %v3111
      %3152 = vmatpush1.bf16.msra.mxu0 %v3110
      %3153 = vmatprep.subr.bf16.mxu0 %v3116
      %3154 = vmatpush1.bf16.msra.mxu0 %v3115
      %3155 = vmatprep.subr.bf16.mxu0 %v3121
      %3156 = vmatpush1.bf16.msra.mxu0 %v3120
      %3157 = vmatprep.subr.bf16.mxu0 %v3126
      %3158 = vmatpush1.bf16.msra.mxu0 %v3125
      %3159 = vmatprep.subr.bf16.mxu0 %v3131
      %3160 = vmatpush1.bf16.msra.mxu0 %v3130
      %3161 = vmatprep.subr.bf16.mxu0 0
      %3162 = vmatpush1.bf16.msra.mxu0 0
      %3163 = vmatprep.subr.bf16.mxu0 0
      %3164 = vmatpush1.bf16.msra.mxu0 0
      %3165 = vmatprep.subr.bf16.mxu0 0
      %3166 = vmatpush1.bf16.msra.mxu0 0
      %3167 = vmatprep.subr.bf16.mxu0 0
      %3168 = vmatpush1.bf16.msra.mxu0 0
      %3169 = vmatprep.subr.bf16.mxu0 0
      %3170 = vmatpush1.bf16.msra.mxu0 0
      %3171 = vmatprep.subr.bf16.mxu0 0
      %3172 = vmatpush1.bf16.msra.mxu0 0
      %3173 = vmatprep.subr.bf16.mxu0 0
      %3174 = vmatpush1.bf16.msra.mxu0 0
      %3175 = vmatprep.subr.bf16.mxu0 0
      %3176 = vmatpush1.bf16.msra.mxu0 0
      %3177 = vmatprep.subr.bf16.mxu0 0
      %3178 = vmatpush1.bf16.msra.mxu0 0
      %3179 = vmatprep.subr.bf16.mxu0 0
      %3180 = vmatpush1.bf16.msra.mxu0 0
      %3181 = vmatprep.subr.bf16.mxu0 0
      %3182 = vmatpush1.bf16.msra.mxu0 0
      %3183 = vmatprep.mubr.bf16.mxu0 0
      %3184 = vmatmul.mubr.bf16.gmra.mrb[0].mxu0 %v3146
      %v3185 = vpop.f32.mrb[0].mxu0
      %v3186 = vadd.f32 0.0, %v3185
      %v3187 = vpop.f32.mrb[0].mxu0
      %v3188 = vadd.f32 0.0, %v3187
      %v3189 = vpop.f32.mrb[0].mxu0
      %v3190 = vadd.f32 0.0, %v3189
      %v3191 = vpop.f32.mrb[0].mxu0
      %v3192 = vadd.f32 0.0, %v3191
      %3193 = vmatprep.mubr.bf16.mxu0 0
      %3194 = vmatmul.mubr.bf16.gmra.mrb[0].mxu0 %v3149
      %v3195 = vpop.f32.mrb[0].mxu0
      %v3196 = vadd.f32 0.0, %v3195
      %v3197 = vpop.f32.mrb[0].mxu0
      %v3198 = vadd.f32 0.0, %v3197
      %v3199 = vpop.f32.mrb[0].mxu0
      %v3200 = vadd.f32 0.0, %v3199
      %v3201 = vpop.f32.mrb[0].mxu0
      %v3202 = vadd.f32 0.0, %v3201
      %3203 = vdwg.mxu0
      %3204 = vmatprep.subr.bf16.mxu0 %v3113
      %3205 = vmatpush1.bf16.msra.mxu0 %v3112
      %3206 = vmatprep.subr.bf16.mxu0 %v3118
      %3207 = vmatpush1.bf16.msra.mxu0 %v3117
      %3208 = vmatprep.subr.bf16.mxu0 %v3123
      %3209 = vmatpush1.bf16.msra.mxu0 %v3122
      %3210 = vmatprep.subr.bf16.mxu0 %v3128
      %3211 = vmatpush1.bf16.msra.mxu0 %v3127
      %3212 = vmatprep.subr.bf16.mxu0 %v3133
      %3213 = vmatpush1.bf16.msra.mxu0 %v3132
      %3214 = vmatprep.subr.bf16.mxu0 0
      %3215 = vmatpush1.bf16.msra.mxu0 0
      %3216 = vmatprep.subr.bf16.mxu0 0
      %3217 = vmatpush1.bf16.msra.mxu0 0
      %3218 = vmatprep.subr.bf16.mxu0 0
      %3219 = vmatpush1.bf16.msra.mxu0 0
      %3220 = vmatprep.subr.bf16.mxu0 0
      %3221 = vmatpush1.bf16.msra.mxu0 0
      %3222 = vmatprep.subr.bf16.mxu0 0
      %3223 = vmatpush1.bf16.msra.mxu0 0
      %3224 = vmatprep.subr.bf16.mxu0 0
      %3225 = vmatpush1.bf16.msra.mxu0 0
      %3226 = vmatprep.subr.bf16.mxu0 0
      %3227 = vmatpush1.bf16.msra.mxu0 0
      %3228 = vmatprep.subr.bf16.mxu0 0
      %3229 = vmatpush1.bf16.msra.mxu0 0
      %3230 = vmatprep.subr.bf16.mxu0 0
      %3231 = vmatpush1.bf16.msra.mxu0 0
      %3232 = vmatprep.subr.bf16.mxu0 0
      %3233 = vmatpush1.bf16.msra.mxu0 0
      %3234 = vmatprep.subr.bf16.mxu0 0
      %3235 = vmatpush1.bf16.msra.mxu0 0
      %3236 = vmatprep.mubr.bf16.mxu0 0
      %3237 = vmatmul.mubr.bf16.gmra.mrb[0].mxu0 %v3146
      %v3238 = vpop.f32.mrb[0].mxu0
      %v3239 = vadd.f32 0.0, %v3238
      %v3240 = vpop.f32.mrb[0].mxu0
      %v3241 = vadd.f32 0.0, %v3240
      %v3242 = vpop.f32.mrb[0].mxu0
      %v3243 = vadd.f32 0.0, %v3242
      %v3244 = vpop.f32.mrb[0].mxu0
      %v3245 = vadd.f32 0.0, %v3244
      %3246 = vmatprep.mubr.bf16.mxu0 0
      %3247 = vmatmul.mubr.bf16.gmra.mrb[0].mxu0 %v3149
      %v3248 = vpop.f32.mrb[0].mxu0
      %v3249 = vadd.f32 0.0, %v3248
      %v3250 = vpop.f32.mrb[0].mxu0
      %v3251 = vadd.f32 0.0, %v3250
      %v3252 = vpop.f32.mrb[0].mxu0
      %v3253 = vadd.f32 0.0, %v3252
      %v3254 = vpop.f32.mrb[0].mxu0
      %v3255 = vadd.f32 0.0, %v3254
      %3256 = vdwg.mxu0
      %3257 = vmatprep.subr.bf16.mxu0 0
      %3258 = vmatpush1.bf16.msra.mxu0 %v3114
      %3259 = vmatprep.subr.bf16.mxu0 0
      %3260 = vmatpush1.bf16.msra.mxu0 %v3119
      %3261 = vmatprep.subr.bf16.mxu0 0
      %3262 = vmatpush1.bf16.msra.mxu0 %v3124
      %3263 = vmatprep.subr.bf16.mxu0 0
      %3264 = vmatpush1.bf16.msra.mxu0 %v3129
      %3265 = vmatprep.subr.bf16.mxu0 0
      %3266 = vmatpush1.bf16.msra.mxu0 %v3134
      %3267 = vmatprep.subr.bf16.mxu0 0
      %3268 = vmatpush1.bf16.msra.mxu0 0
      %3269 = vmatprep.subr.bf16.mxu0 0
      %3270 = vmatpush1.bf16.msra.mxu0 0
      %3271 = vmatprep.subr.bf16.mxu0 0
      %3272 = vmatpush1.bf16.msra.mxu0 0
      %3273 = vmatprep.subr.bf16.mxu0 0
      %3274 = vmatpush1.bf16.msra.mxu0 0
      %3275 = vmatprep.subr.bf16.mxu0 0
      %3276 = vmatpush1.bf16.msra.mxu0 0
      %3277 = vmatprep.subr.bf16.mxu0 0
      %3278 = vmatpush1.bf16.msra.mxu0 0
      %3279 = vmatprep.subr.bf16.mxu0 0
      %3280 = vmatpush1.bf16.msra.mxu0 0
      %3281 = vmatprep.subr.bf16.mxu0 0
      %3282 = vmatpush1.bf16.msra.mxu0 0
      %3283 = vmatprep.subr.bf16.mxu0 0
      %3284 = vmatpush1.bf16.msra.mxu0 0
      %3285 = vmatprep.subr.bf16.mxu0 0
      %3286 = vmatpush1.bf16.msra.mxu0 0
      %3287 = vmatprep.subr.bf16.mxu0 0
      %3288 = vmatpush1.bf16.msra.mxu0 0
      %3289 = vmatprep.mubr.bf16.mxu0 0
      %3290 = vmatmul.mubr.bf16.gmra.mrb[0].mxu0 %v3146
      %v3291 = vpop.f32.mrb[0].mxu0
      %v3292 = vadd.f32 0.0, %v3291
      %v3293 = vpop.f32.mrb[0].mxu0
      %v3294 = vpop.f32.mrb[0].mxu0
      %v3295 = vadd.f32 0.0, %v3294
      %v3296 = vpop.f32.mrb[0].mxu0
      %3297 = vmatprep.mubr.bf16.mxu0 0
      %3298 = vmatmul.mubr.bf16.gmra.mrb[0].mxu0 %v3149
      %v3299 = vpop.f32.mrb[0].mxu0
      %v3300 = vadd.f32 0.0, %v3299
      %v3301 = vpop.f32.mrb[0].mxu0
      %v3302 = vpop.f32.mrb[0].mxu0
      %v3303 = vadd.f32 0.0, %v3302
      %v3304 = vpop.f32.mrb[0].mxu0
      %3305 = vdwg.mxu0
      %v3306 = vadd.f32 %v2890, %v3186
      %v3307 = vadd.f32 %v2891, %v3188
      %v3308 = vadd.f32 %v2892, %v3239
      %v3309 = vadd.f32 %v2893, %v3241
      %v3310 = vadd.f32 %v2894, %v3292
      %v3311 = vadd.f32 %v2895, %v3190
      %v3312 = vadd.f32 %v2896, %v3192
      %v3313 = vadd.f32 %v2897, %v3243
      %v3314 = vadd.f32 %v2898, %v3245
      %v3315 = vadd.f32 %v2899, %v3295
      %v3316 = vadd.f32 %v2900, %v3196
      %v3317 = vadd.f32 %v2901, %v3198
      %v3318 = vadd.f32 %v2902, %v3249
      %v3319 = vadd.f32 %v2903, %v3251
      %v3320 = vadd.f32 %v2904, %v3300
      %v3321 = vadd.f32 %v2905, %v3200
      %v3322 = vadd.f32 %v2906, %v3202
      %v3323 = vadd.f32 %v2907, %v3253
      %v3324 = vadd.f32 %v2908, %v3255
      %v3325 = vadd.f32 %v2909, %v3303
      %v3326 = vld [vmem:[%s4] sm:$0xff]
      %v3327 = vld [vmem:[%s4 + $0x8] sm:$0xff]
      %v3328 = vld [vmem:[%s4 + $0x10] sm:$0xff]
      %v3329 = vld [vmem:[%s4 + $0x18] sm:$0xff]
      %3331 = vset.pattern.permute.xlu0 0
      %3332 = vperm.xlu0 %3331, %v3326
      %v3333 = vpop.permute.xlu0 %3332
      %3336 = vset.pattern.permute.xlu0 0
      %3337 = vperm.xlu0 %3336, %v3327
      %v3338 = vpop.permute.xlu0 %3337
      %3341 = vset.pattern.permute.xlu0 0
      %3342 = vperm.xlu0 %3341, %v3328
      %v3343 = vpop.permute.xlu0 %3342
      %3346 = vset.pattern.permute.xlu0 0
      %3347 = vperm.xlu0 %3346, %v3329
      %v3348 = vpop.permute.xlu0 %3347
      %v3350 = vadd.f32 %v3306, %v3333
      %v3351 = vadd.f32 %v3307, %v3333
      %v3352 = vadd.f32 %v3308, %v3333
      %v3353 = vadd.f32 %v3309, %v3333
      %v3354 = vadd.f32 %v3310, %v3333
      %v3355 = vadd.f32 %v3311, %v3338
      %v3356 = vadd.f32 %v3312, %v3338
      %v3357 = vadd.f32 %v3313, %v3338
      %v3358 = vadd.f32 %v3314, %v3338
      %v3359 = vadd.f32 %v3315, %v3338
      %v3360 = vadd.f32 %v3316, %v3343
      %v3361 = vadd.f32 %v3317, %v3343
      %v3362 = vadd.f32 %v3318, %v3343
      %v3363 = vadd.f32 %v3319, %v3343
      %v3364 = vadd.f32 %v3320, %v3343
      %v3365 = vadd.f32 %v3321, %v3348
      %v3366 = vadd.f32 %v3322, %v3348
      %v3367 = vadd.f32 %v3323, %v3348
      %v3368 = vadd.f32 %v3324, %v3348
      %v3369 = vadd.f32 %v3325, %v3348
      %v3370 = vtanh.pop %v3350
      %v3371 = vtanh.pop %v3351
      %v3372 = vtanh.pop %v3352
      %v3373 = vtanh.pop %v3353
      %v3374 = vtanh.pop %v3354
      %v3375 = vtanh.pop %v3355
      %v3376 = vtanh.pop %v3356
      %v3377 = vtanh.pop %v3357
      %v3378 = vtanh.pop %v3358
      %v3379 = vtanh.pop %v3359
      %v3380 = vtanh.pop %v3360
      %v3381 = vtanh.pop %v3361
      %v3382 = vtanh.pop %v3362
      %v3383 = vtanh.pop %v3363
      %v3384 = vtanh.pop %v3364
      %v3385 = vtanh.pop %v3365
      %v3386 = vtanh.pop %v3366
      %v3387 = vtanh.pop %v3367
      %v3388 = vtanh.pop %v3368
      %v3389 = vtanh.pop %v3369
      %3390 = vst [vmem:[%s251] sm:$0xff] %v3370
      %3391 = vst [vmem:[%s251 + $0x8] sm:$0xff] %v3371
      %3392 = vst [vmem:[%s251 + $0x10] sm:$0xff] %v3372
      %3393 = vst [vmem:[%s251 + $0x18] sm:$0xff] %v3373
      %3394 = vst [vmem:[%s251 + $0x20] sm:$0xff] %v3374
      %3395 = vst [vmem:[%s251 + $0x28] sm:$0xff] %v3375
      %3396 = vst [vmem:[%s251 + $0x30] sm:$0xff] %v3376
      %3397 = vst [vmem:[%s251 + $0x38] sm:$0xff] %v3377
      %3398 = vst [vmem:[%s251 + $0x40] sm:$0xff] %v3378
      %3399 = vst [vmem:[%s251 + $0x48] sm:$0xff] %v3379
      %3400 = vst [vmem:[%s251 + $0x50] sm:$0xff] %v3380
      %3401 = vst [vmem:[%s251 + $0x58] sm:$0xff] %v3381
      %3402 = vst [vmem:[%s251 + $0x60] sm:$0xff] %v3382
      %3403 = vst [vmem:[%s251 + $0x68] sm:$0xff] %v3383
      %3404 = vst [vmem:[%s251 + $0x70] sm:$0xff] %v3384
      %3405 = vst [vmem:[%s251 + $0x78] sm:$0xff] %v3385
      %3406 = vst [vmem:[%s251 + $0x80] sm:$0xff] %v3386
      %3407 = vst [vmem:[%s251 + $0x88] sm:$0xff] %v3387
      %3408 = vst [vmem:[%s251 + $0x90] sm:$0xff] %v3388
      %3409 = vst [vmem:[%s251 + $0x98] sm:$0xff] %v3389
      %p3410 = scmp.lt.s32.totalorder %s17, 1
      %s3411 = scalar_select %p3410, %s17, 1
      %s3412 = smul.addr %s3411, 20
      %s3413 = smul.addr %s3412, 8
      %s3414 = scalar_lea.vmem %s6, %s3413
      // Predicated region
      $region45: #{fused_conv_forward.1} parent=43 // pred_check
        %p3415 = pneg %p166
      $region46: #{fused_conv_forward.1} parent=43 // pred_check_branch
        %3417 = sbr.rel (%p3415) target = $region48
      $region47: #{fused_conv_forward.1} parent=43 // pred_region
        _
      $region48: #{fused_conv_forward.1} parent=43 // pred_fallthru
        _
    $region44: #{fused_conv_forward.1} parent=5 // pred_fallthru
      _
    %p3418 = scmp.le.s32.totalorder 2, %s12
    // Predicated region
    $region49: #{fused_conv_forward.1} parent=5 // pred_check
      %p3419 = pneg %p3418
    $region50: #{fused_conv_forward.1} parent=5 // pred_check_branch
      %3421 = sbr.rel (%p3419) target = $region52
    $region51: #{fused_conv_forward.1} parent=5 // pred_region
      %s3422 = ssub.s32 %s12, 2
      // Predicated region
      $region53: #{fused_conv_forward.1} parent=51 // pred_check
        %p3423 = pneg %p172
      $region54: #{fused_conv_forward.1} parent=51 // pred_check_branch
        %3425 = sbr.rel (%p3423) target = $region56
      $region55: #{fused_conv_forward.1} parent=51 // pred_region
        %p3426 = scmp.lt.s32.totalorder %s18, 1
        %s3427 = scalar_select %p3426, %s18, 1
        %s3428 = smul.addr %s3427, 20
        %s3429 = smul.addr %s3428, 8
        %s3430 = scalar_lea.vmem %s6, %s3429
      $region56: #{fused_conv_forward.1} parent=51 // pred_fallthru
        _
    $region52: #{fused_conv_forward.1} parent=5 // pred_fallthru
      _
  $region6: #{fused_conv_forward.1} parent=0 // loop_footer
    %s16 = sadd.s32 1, %s12
  $region7: #{fused_conv_forward.1} parent=0 // loop_footer_branch
    %11 = sbr.rel target = $region3
  $region8: #{fused_conv_forward.1} parent=0 // loop_exit
    _

</llo_original>
